<compile_context>
chip_gen: v7x
topology: tpu7x:2x2x1
jax: 0.10.0
libtpu: 0.0.40
codegen_flags: <defaults>
</compile_context>

<pallas_src>
import functools

import jax
import jax.numpy as jnp
from jax import lax
from jax.experimental import pallas as pl
from jax.experimental.pallas import tpu as pltpu


# ----------------------------------------------------------------------------
# Fused kernel: all four Inception branches for one image per grid step.
# Data layout inside the kernel: (channels, H*W) with spatial on lanes.
# ----------------------------------------------------------------------------
def _inception_kernel(x_ref,
                      w123_ref, b123_ref,
                      w3t_ref, b3_ref,
                      w5t_ref, b5_ref,
                      w4_ref, b4_ref,
                      o_ref,
                      pad3_ref, pad5_ref, padx_ref,
                      *, H, W, C1, C13, C3, C15, C5, Cm):
    S = H * W
    x = x_ref[0]                                     # (Cin, S) f32

    # x-coordinate of every flattened spatial position (lane axis).
    col = lax.broadcasted_iota(jnp.int32, (1, S), 1) % W

    def relu(v):
        return jnp.maximum(v, 0.0)

    def fill_padded(pad_ref, t, p):
        # Flattened zero-padded activation: [p*(W+1) zeros | t | p*(W+1) zeros].
        # Only the tiny halo strips get zeroed (per step -> safe under
        # megacore grid splits); the interior is overwritten every step.
        base = p * (W + 1)
        c = t.shape[0]
        pad_ref[:, 0:base] = jnp.zeros((c, base), jnp.float32)
        pad_ref[:, base + S:] = jnp.zeros((c, base), jnp.float32)
        pad_ref[:, base:base + S] = t
        return base

    def shifted_tap(pad_ref, base, oy, ox):
        # Input pixel (y+oy, x+ox) for every output pixel (y, x): one static
        # lane-slice of the flattened padded buffer.  Vertical out-of-range
        # reads land in the zero halo; horizontal wrap-around columns are
        # masked to zero (== zero padding).
        start = base + oy * W + ox
        tap = pad_ref[:, start:start + S]
        if ox < 0:
            tap = jnp.where(col >= -ox, tap, 0.0)
        elif ox > 0:
            tap = jnp.where(col < W - ox, tap, 0.0)
        return tap

    # ---- branches 1 / 2a / 3a: ONE fused 1x1-conv matmul from x ------------
    y123 = relu(jnp.dot(w123_ref[...], x, preferred_element_type=jnp.float32)
                + b123_ref[...])
    y1 = y123[0:C1, :]
    t2 = y123[C1:C1 + C13, :]
    t3 = y123[C1 + C13:C1 + C13 + C15, :]

    # ---- KxK "same" conv: K*K shifted-tap matmuls into one f32 accumulator -
    def conv_kxk_relu(t, K, pad_ref, wt_ref, b_ref, Cout):
        p = (K - 1) // 2
        base = fill_padded(pad_ref, t, p)
        acc = jnp.zeros((Cout, S), jnp.float32)
        for dy in range(K):
            for dx in range(K):
                k = dy * K + dx
                tap = shifted_tap(pad_ref, base, dy - p, dx - p)   # (Cmid, S)
                wk = wt_ref[k * Cout:(k + 1) * Cout, :]            # (Cout, Cmid)
                acc = acc + jnp.dot(wk, tap,
                                    preferred_element_type=jnp.float32)
        return relu(acc + b_ref[...])

    y2 = conv_kxk_relu(t2, 3, pad3_ref, w3t_ref, b3_ref, C3)   # 3x3, pad 1
    y3 = conv_kxk_relu(t3, 5, pad5_ref, w5t_ref, b5_ref, C5)   # 5x5, pad 2

    # ---- branch 4: 3x3 maxpool (stride 1, pad 1) -> ReLU -> 1x1 conv -> ReLU
    # Zero (instead of -inf) pool padding is exact because the PyTorch module
    # applies ReLU immediately after the pool.
    base = fill_padded(padx_ref, x, 1)
    m = shifted_tap(padx_ref, base, -1, -1)
    for dy in range(3):
        for dx in range(3):
            if dy == 0 and dx == 0:
                continue
            m = jnp.maximum(m, shifted_tap(padx_ref, base, dy - 1, dx - 1))
    m = relu(m)                                      # ReLU right after pool
    y4 = relu(jnp.dot(w4_ref[...], m, preferred_element_type=jnp.float32)
              + b4_ref[...])

    # ---- lane-dense (S-lane) writes into the concatenated NC(HW) output ----
    o_ref[0, 0:C1, :] = y1
    o_ref[0, C1:C1 + C3, :] = y2
    o_ref[0, C1 + C3:C1 + C3 + C5, :] = y3
    o_ref[0, C1 + C3 + C5:C1 + C3 + C5 + Cm, :] = y4


# ----------------------------------------------------------------------------
# Params (PyTorch-like layouts: 1x1 weights (Cout, Cin), KxK weights OIHW)
# ----------------------------------------------------------------------------
def init_inception_params(key, in_c, c_1x1, c_1x1_3, c_3x3, c_1x1_5, c_5x5, c_m_1x1):
    ks = jax.random.split(key, 12)
    s = 0.1
    return {
        "w1":  s * jax.random.normal(ks[0], (c_1x1, in_c), jnp.float32),
        "b1":  s * jax.random.normal(ks[1], (c_1x1,), jnp.float32),
        "w2a": s * jax.random.normal(ks[2], (c_1x1_3, in_c), jnp.float32),
        "b2a": s * jax.random.normal(ks[3], (c_1x1_3,), jnp.float32),
        "w2b": s * jax.random.normal(ks[4], (c_3x3, c_1x1_3, 3, 3), jnp.float32),
        "b2b": s * jax.random.normal(ks[5], (c_3x3,), jnp.float32),
        "w3a": s * jax.random.normal(ks[6], (c_1x1_5, in_c), jnp.float32),
        "b3a": s * jax.random.normal(ks[7], (c_1x1_5,), jnp.float32),
        "w3b": s * jax.random.normal(ks[8], (c_5x5, c_1x1_5, 5, 5), jnp.float32),
        "b3b": s * jax.random.normal(ks[9], (c_5x5,), jnp.float32),
        "w4":  s * jax.random.normal(ks[10], (c_m_1x1, in_c), jnp.float32),
        "b4":  s * jax.random.normal(ks[11], (c_m_1x1,), jnp.float32),
    }


# ----------------------------------------------------------------------------
# Wrapper: weight packing + one pallas_call for the whole module (no transposes)
# ----------------------------------------------------------------------------
@jax.jit
def inception_forward(x_nchw, params):
    N, Cin, H, W = x_nchw.shape
    S = H * W
    x = x_nchw.reshape(N, Cin, S)                    # NCHW kept; spatial flattened

    w1, b1 = params["w1"], params["b1"]
    w2a, b2a = params["w2a"], params["b2a"]
    w2b, b2b = params["w2b"], params["b2b"]
    w3a, b3a = params["w3a"], params["b3a"]
    w3b, b3b = params["w3b"], params["b3b"]
    w4, b4 = params["w4"], params["b4"]

    C1, C13, C3 = w1.shape[0], w2a.shape[0], w2b.shape[0]
    C15, C5, Cm = w3a.shape[0], w3b.shape[0], w4.shape[0]
    C123 = C1 + C13 + C15
    Ctot = C1 + C3 + C5 + Cm

    # Fuse the three 1x1-from-x convs into one (C123, Cin) MXU operand.
    w123 = jnp.concatenate([w1, w2a, w3a], axis=0)
    b123 = jnp.concatenate([b1, b2a, b3a])[:, None]

    # Per-tap KxK weights: row block k = dy*K + dx holds w[:, :, dy, dx].
    w3t = jnp.transpose(w2b, (2, 3, 0, 1)).reshape(9 * C3, C13)
    w5t = jnp.transpose(w3b, (2, 3, 0, 1)).reshape(25 * C5, C15)

    kernel = functools.partial(_inception_kernel, H=H, W=W, C1=C1, C13=C13,
                               C3=C3, C15=C15, C5=C5, Cm=Cm)

    def rep(shape):
        nd = len(shape)
        return pl.BlockSpec(shape, lambda n, _nd=nd: (0,) * _nd)

    flops = 2 * N * S * (Cin * C123 + 9 * C13 * C3 + 25 * C15 * C5 + Cin * Cm)
    param_elems = (w123.size + b123.size + w3t.size + C3 + w5t.size + C5
                   + w4.size + Cm)
    bytes_accessed = 4 * (N * Cin * S + N * Ctot * S + param_elems)

    out = pl.pallas_call(
        kernel,
        out_shape=jax.ShapeDtypeStruct((N, Ctot, S), jnp.float32),
        grid=(N,),
        in_specs=[
            pl.BlockSpec((1, Cin, S), lambda n: (n, 0, 0)),
            rep((C123, Cin)), rep((C123, 1)),
            rep((9 * C3, C13)), rep((C3, 1)),
            rep((25 * C5, C15)), rep((C5, 1)),
            rep((Cm, Cin)), rep((Cm, 1)),
        ],
        out_specs=pl.BlockSpec((1, Ctot, S), lambda n: (n, 0, 0)),
        scratch_shapes=[
            pltpu.VMEM((C13, S + 2 * (W + 1)), jnp.float32),   # 3x3 conv halo
            pltpu.VMEM((C15, S + 4 * (W + 1)), jnp.float32),   # 5x5 conv halo
            pltpu.VMEM((Cin, S + 2 * (W + 1)), jnp.float32),   # maxpool halo
        ],
        compiler_params=pltpu.CompilerParams(
            dimension_semantics=("parallel",),
            vmem_limit_bytes=32 * 1024 * 1024),
        cost_estimate=pl.CostEstimate(flops=flops, transcendentals=0,
                                      bytes_accessed=bytes_accessed),
    )(x, w123, b123, w3t, b2b[:, None], w5t, b3b[:, None], w4, b4[:, None])

    return out.reshape(N, Ctot, H, W)


# ----------------------------------------------------------------------------
# Plain-JAX reference (sanity check against the Pallas path)
# ----------------------------------------------------------------------------
def _ref_conv(x, w, b, pad):
    if w.ndim == 2:
        w = w[:, :, None, None]
    y = lax.conv_general_dilated(
        x, w, window_strides=(1, 1), padding=[(pad, pad), (pad, pad)],
        dimension_numbers=("NCHW", "OIHW", "NCHW"))
    return jnp.maximum(y + b[None, :, None, None], 0.0)


def _ref_forward(x, p):
    b1 = _ref_conv(x, p["w1"], p["b1"], 0)
    b2 = _ref_conv(_ref_conv(x, p["w2a"], p["b2a"], 0), p["w2b"], p["b2b"], 1)
    b3 = _ref_conv(_ref_conv(x, p["w3a"], p["b3a"], 0), p["w3b"], p["b3b"], 2)
    mp = lax.reduce_window(x, -jnp.inf, lax.max, (1, 1, 3, 3), (1, 1, 1, 1),
                           [(0, 0), (0, 0), (1, 1), (1, 1)])
    b4 = _ref_conv(jnp.maximum(mp, 0.0), p["w4"], p["b4"], 0)
    return jnp.concatenate([b1, b2, b3, b4], axis=1)


if __name__ == "__main__":
    key = jax.random.PRNGKey(0)
    k_x, k_p = jax.random.split(key)

    # Config: in_c=4, c_1x1=8, c_1x1_3=6, c_3x3=8, c_1x1_5=4, c_5x5=8, c_m_1x1=8
    in_c, c_1x1, c_1x1_3, c_3x3, c_1x1_5, c_5x5, c_m_1x1 = 4, 8, 6, 8, 4, 8, 8
    N, H, W = 2, 16, 16

    x = jax.random.normal(k_x, (N, in_c, H, W), jnp.float32)   # NCHW like PyTorch
    params = init_inception_params(k_p, in_c, c_1x1, c_1x1_3, c_3x3,
                                   c_1x1_5, c_5x5, c_m_1x1)

    out = jax.block_until_ready(inception_forward(x, params))

    expected_channels = c_1x1 + c_3x3 + c_5x5 + c_m_1x1
    assert out.shape == (N, expected_channels, H, W), out.shape

    ref = jax.block_until_ready(_ref_forward(x, params))
    max_err = float(jnp.max(jnp.abs(out - ref)))
    assert max_err < 1e-3, f"max abs error too large: {max_err}"

    print("KERNEL_OK")
</pallas_src>

<mosaic_0001>
module attributes {stable_mosaic.version = 11 : i64} {
  func.func @_inception_kernel(%arg0: i32, %arg1: memref<1x4x256xf32, #tpu.memory_space<vmem>>, %arg2: memref<18x4xf32, #tpu.memory_space<vmem>>, %arg3: memref<18x1xf32, #tpu.memory_space<vmem>>, %arg4: memref<72x6xf32, #tpu.memory_space<vmem>>, %arg5: memref<8x1xf32, #tpu.memory_space<vmem>>, %arg6: memref<200x4xf32, #tpu.memory_space<vmem>>, %arg7: memref<8x1xf32, #tpu.memory_space<vmem>>, %arg8: memref<8x4xf32, #tpu.memory_space<vmem>>, %arg9: memref<8x1xf32, #tpu.memory_space<vmem>>, %arg10: memref<1x32x256xf32, #tpu.memory_space<vmem>>, %arg11: memref<6x290xf32, #tpu.memory_space<vmem>>, %arg12: memref<4x324xf32, #tpu.memory_space<vmem>>, %arg13: memref<4x290xf32, #tpu.memory_space<vmem>>) attributes {dimension_semantics = [#tpu.dimension_semantics<parallel>], iteration_bounds = array<i64: 2>, scalar_prefetch = 0 : i64, scratch_operands = 3 : i64, tpu.core_type = #tpu.core_type<tc>, window_params = [{transform_indices = @transform_0, window_bounds = array<i64: 1, 4, 256>}, {pipeline_mode = #tpu.pipeline_mode<synchronous>, transform_indices = @transform_1, window_bounds = array<i64: 18, 4>}, {pipeline_mode = #tpu.pipeline_mode<synchronous>, transform_indices = @transform_2, window_bounds = array<i64: 18, 1>}, {pipeline_mode = #tpu.pipeline_mode<synchronous>, transform_indices = @transform_3, window_bounds = array<i64: 72, 6>}, {pipeline_mode = #tpu.pipeline_mode<synchronous>, transform_indices = @transform_4, window_bounds = array<i64: 8, 1>}, {pipeline_mode = #tpu.pipeline_mode<synchronous>, transform_indices = @transform_5, window_bounds = array<i64: 200, 4>}, {pipeline_mode = #tpu.pipeline_mode<synchronous>, transform_indices = @transform_6, window_bounds = array<i64: 8, 1>}, {pipeline_mode = #tpu.pipeline_mode<synchronous>, transform_indices = @transform_7, window_bounds = array<i64: 8, 4>}, {pipeline_mode = #tpu.pipeline_mode<synchronous>, transform_indices = @transform_8, window_bounds = array<i64: 8, 1>}, {transform_indices = @transform_9, window_bounds = array<i64: 1, 32, 256>}]} {
    %c0 = arith.constant 0 : index
    %c0_0 = arith.constant 0 : index
    %c0_1 = arith.constant 0 : index
    %0 = vector.load %arg1[%c0, %c0_0, %c0_1] : memref<1x4x256xf32, #tpu.memory_space<vmem>>, vector<1x4x256xf32>
    %1 = vector.shape_cast %0 : vector<1x4x256xf32> to vector<4x256xf32>
    %2 = tpu.iota {dimensions = array<i32: 1>} : vector<1x256xi32>
    %c16_i32 = arith.constant 16 : i32
    %c0_i32 = arith.constant 0 : i32
    %3 = arith.cmpi eq, %c16_i32, %c0_i32 : i32
    %c1_i32 = arith.constant 1 : i32
    %4 = arith.select %3, %c1_i32, %c16_i32 : i32
    %5 = vector.broadcast %4 : i32 to vector<1x256xi32>
    %6 = arith.remsi %2, %5 : vector<1x256xi32>
    %c0_i32_2 = arith.constant 0 : i32
    %7 = vector.broadcast %c0_i32_2 : i32 to vector<1x256xi32>
    %8 = arith.cmpi ne, %6, %7 : vector<1x256xi32>
    %c0_i32_3 = arith.constant 0 : i32
    %9 = vector.broadcast %c0_i32_3 : i32 to vector<1x256xi32>
    %10 = arith.cmpi slt, %6, %9 : vector<1x256xi32>
    %c0_i32_4 = arith.constant 0 : i32
    %11 = arith.cmpi slt, %4, %c0_i32_4 : i32
    %12 = vector.broadcast %11 : i1 to vector<1x256xi1>
    %13 = vector.broadcast %12 : vector<1x256xi1> to vector<1x256xi1>
    %14 = arith.xori %10, %13 : vector<1x256xi1>
    %15 = arith.andi %14, %8 : vector<1x256xi1>
    %16 = vector.broadcast %4 : i32 to vector<1x256xi32>
    %17 = arith.addi %6, %16 : vector<1x256xi32>
    %18 = arith.select %15, %17, %6 : vector<1x256xi1>, vector<1x256xi32>
    %c0_5 = arith.constant 0 : index
    %c0_6 = arith.constant 0 : index
    %19 = vector.load %arg2[%c0_5, %c0_6] : memref<18x4xf32, #tpu.memory_space<vmem>>, vector<18x4xf32>
    %cst = arith.constant dense<0.000000e+00> : vector<18x256xf32>
    %20 = tpu.matmul %19, %1, %cst {dimension_numbers = #tpu.dot_dimension_numbers<[1], [0], [0], [1], [0, 0, 1, 1], [], []>} : vector<18x4xf32>, vector<4x256xf32>, vector<18x256xf32> -> vector<18x256xf32>
    %c0_7 = arith.constant 0 : index
    %c0_8 = arith.constant 0 : index
    %21 = vector.load %arg3[%c0_7, %c0_8] : memref<18x1xf32, #tpu.memory_space<vmem>>, vector<18x1xf32>
    %22 = vector.broadcast %21 : vector<18x1xf32> to vector<18x256xf32>
    %23 = arith.addf %20, %22 : vector<18x256xf32>
    %cst_9 = arith.constant 0.000000e+00 : f32
    %24 = vector.broadcast %cst_9 : f32 to vector<18x256xf32>
    %25 = arith.maximumf %23, %24 : vector<18x256xf32>
    %26 = vector.extract_strided_slice %25 {offsets = [0, 0], sizes = [8, 256], strides = [1, 1]} : vector<18x256xf32> to vector<8x256xf32>
    %27 = vector.extract_strided_slice %25 {offsets = [8, 0], sizes = [6, 256], strides = [1, 1]} : vector<18x256xf32> to vector<6x256xf32>
    %28 = vector.extract_strided_slice %25 {offsets = [14, 0], sizes = [4, 256], strides = [1, 1]} : vector<18x256xf32> to vector<4x256xf32>
    %cst_10 = arith.constant 0.000000e+00 : f32
    %29 = vector.broadcast %cst_10 : f32 to vector<6x17xf32>
    %c0_11 = arith.constant 0 : index
    %c0_12 = arith.constant 0 : index
    %30 = vector.load %arg11[%c0_11, %c0_12] : memref<6x290xf32, #tpu.memory_space<vmem>>, vector<6x17xf32>
    tpu.vector_store %arg11[%c0_11, %c0_12], %29 {strides = array<i32>} : memref<6x290xf32, #tpu.memory_space<vmem>>, vector<6x17xf32>,
    %cst_13 = arith.constant 0.000000e+00 : f32
    %31 = vector.broadcast %cst_13 : f32 to vector<6x17xf32>
    %c0_14 = arith.constant 0 : index
    %c273 = arith.constant 273 : index
    %32 = vector.load %arg11[%c0_14, %c273] : memref<6x290xf32, #tpu.memory_space<vmem>>, vector<6x17xf32>
    tpu.vector_store %arg11[%c0_14, %c273], %31 {strides = array<i32>} : memref<6x290xf32, #tpu.memory_space<vmem>>, vector<6x17xf32>,
    %c0_15 = arith.constant 0 : index
    %c17 = arith.constant 17 : index
    %33 = vector.load %arg11[%c0_15, %c17] : memref<6x290xf32, #tpu.memory_space<vmem>>, vector<6x256xf32>
    tpu.vector_store %arg11[%c0_15, %c17], %27 {strides = array<i32>} : memref<6x290xf32, #tpu.memory_space<vmem>>, vector<6x256xf32>,
    %cst_16 = arith.constant 0.000000e+00 : f32
    %34 = vector.broadcast %cst_16 : f32 to vector<8x256xf32>
    %c0_17 = arith.constant 0 : index
    %c0_18 = arith.constant 0 : index
    %35 = vector.load %arg11[%c0_17, %c0_18] : memref<6x290xf32, #tpu.memory_space<vmem>>, vector<6x256xf32>
    %c1_i32_19 = arith.constant 1 : i32
    %36 = vector.broadcast %c1_i32_19 : i32 to vector<1x256xi32>
    %37 = arith.cmpi sge, %18, %36 : vector<1x256xi32>
    %cst_20 = arith.constant 0.000000e+00 : f32
    %38 = vector.shape_cast %37 : vector<1x256xi1> to vector<1x256xi1>
    %39 = vector.broadcast %38 : vector<1x256xi1> to vector<6x256xi1>
    %40 = vector.broadcast %cst_20 : f32 to vector<6x256xf32>
    %41 = arith.select %39, %35, %40 : vector<6x256xi1>, vector<6x256xf32>
    %c0_21 = arith.constant 0 : index
    %c0_22 = arith.constant 0 : index
    %42 = vector.load %arg4[%c0_21, %c0_22] : memref<72x6xf32, #tpu.memory_space<vmem>>, vector<8x6xf32>
    %cst_23 = arith.constant dense<0.000000e+00> : vector<8x256xf32>
    %43 = tpu.matmul %42, %41, %cst_23 {dimension_numbers = #tpu.dot_dimension_numbers<[1], [0], [0], [1], [0, 0, 1, 1], [], []>} : vector<8x6xf32>, vector<6x256xf32>, vector<8x256xf32> -> vector<8x256xf32>
    %44 = arith.addf %34, %43 : vector<8x256xf32>
    %c0_24 = arith.constant 0 : index
    %c1 = arith.constant 1 : index
    %45 = vector.load %arg11[%c0_24, %c1] : memref<6x290xf32, #tpu.memory_space<vmem>>, vector<6x256xf32>
    %c8 = arith.constant 8 : index
    %c0_25 = arith.constant 0 : index
    %46 = vector.load %arg4[%c8, %c0_25] : memref<72x6xf32, #tpu.memory_space<vmem>>, vector<8x6xf32>
    %cst_26 = arith.constant dense<0.000000e+00> : vector<8x256xf32>
    %47 = tpu.matmul %46, %45, %cst_26 {dimension_numbers = #tpu.dot_dimension_numbers<[1], [0], [0], [1], [0, 0, 1, 1], [], []>} : vector<8x6xf32>, vector<6x256xf32>, vector<8x256xf32> -> vector<8x256xf32>
    %48 = arith.addf %44, %47 : vector<8x256xf32>
    %c0_27 = arith.constant 0 : index
    %c2 = arith.constant 2 : index
    %49 = vector.load %arg11[%c0_27, %c2] : memref<6x290xf32, #tpu.memory_space<vmem>>, vector<6x256xf32>
    %c15_i32 = arith.constant 15 : i32
    %50 = vector.broadcast %c15_i32 : i32 to vector<1x256xi32>
    %51 = arith.cmpi slt, %18, %50 : vector<1x256xi32>
    %cst_28 = arith.constant 0.000000e+00 : f32
    %52 = vector.shape_cast %51 : vector<1x256xi1> to vector<1x256xi1>
    %53 = vector.broadcast %52 : vector<1x256xi1> to vector<6x256xi1>
    %54 = vector.broadcast %cst_28 : f32 to vector<6x256xf32>
    %55 = arith.select %53, %49, %54 : vector<6x256xi1>, vector<6x256xf32>
    %c16 = arith.constant 16 : index
    %c0_29 = arith.constant 0 : index
    %56 = vector.load %arg4[%c16, %c0_29] : memref<72x6xf32, #tpu.memory_space<vmem>>, vector<8x6xf32>
    %cst_30 = arith.constant dense<0.000000e+00> : vector<8x256xf32>
    %57 = tpu.matmul %56, %55, %cst_30 {dimension_numbers = #tpu.dot_dimension_numbers<[1], [0], [0], [1], [0, 0, 1, 1], [], []>} : vector<8x6xf32>, vector<6x256xf32>, vector<8x256xf32> -> vector<8x256xf32>
    %58 = arith.addf %48, %57 : vector<8x256xf32>
    %c0_31 = arith.constant 0 : index
    %c16_32 = arith.constant 16 : index
    %59 = vector.load %arg11[%c0_31, %c16_32] : memref<6x290xf32, #tpu.memory_space<vmem>>, vector<6x256xf32>
    %c1_i32_33 = arith.constant 1 : i32
    %60 = vector.broadcast %c1_i32_33 : i32 to vector<1x256xi32>
    %61 = arith.cmpi sge, %18, %60 : vector<1x256xi32>
    %cst_34 = arith.constant 0.000000e+00 : f32
    %62 = vector.shape_cast %61 : vector<1x256xi1> to vector<1x256xi1>
    %63 = vector.broadcast %62 : vector<1x256xi1> to vector<6x256xi1>
    %64 = vector.broadcast %cst_34 : f32 to vector<6x256xf32>
    %65 = arith.select %63, %59, %64 : vector<6x256xi1>, vector<6x256xf32>
    %c24 = arith.constant 24 : index
    %c0_35 = arith.constant 0 : index
    %66 = vector.load %arg4[%c24, %c0_35] : memref<72x6xf32, #tpu.memory_space<vmem>>, vector<8x6xf32>
    %cst_36 = arith.constant dense<0.000000e+00> : vector<8x256xf32>
    %67 = tpu.matmul %66, %65, %cst_36 {dimension_numbers = #tpu.dot_dimension_numbers<[1], [0], [0], [1], [0, 0, 1, 1], [], []>} : vector<8x6xf32>, vector<6x256xf32>, vector<8x256xf32> -> vector<8x256xf32>
    %68 = arith.addf %58, %67 : vector<8x256xf32>
    %c0_37 = arith.constant 0 : index
    %c17_38 = arith.constant 17 : index
    %69 = vector.load %arg11[%c0_37, %c17_38] : memref<6x290xf32, #tpu.memory_space<vmem>>, vector<6x256xf32>
    %c32 = arith.constant 32 : index
    %c0_39 = arith.constant 0 : index
    %70 = vector.load %arg4[%c32, %c0_39] : memref<72x6xf32, #tpu.memory_space<vmem>>, vector<8x6xf32>
    %cst_40 = arith.constant dense<0.000000e+00> : vector<8x256xf32>
    %71 = tpu.matmul %70, %69, %cst_40 {dimension_numbers = #tpu.dot_dimension_numbers<[1], [0], [0], [1], [0, 0, 1, 1], [], []>} : vector<8x6xf32>, vector<6x256xf32>, vector<8x256xf32> -> vector<8x256xf32>
    %72 = arith.addf %68, %71 : vector<8x256xf32>
    %c0_41 = arith.constant 0 : index
    %c18 = arith.constant 18 : index
    %73 = vector.load %arg11[%c0_41, %c18] : memref<6x290xf32, #tpu.memory_space<vmem>>, vector<6x256xf32>
    %c15_i32_42 = arith.constant 15 : i32
    %74 = vector.broadcast %c15_i32_42 : i32 to vector<1x256xi32>
    %75 = arith.cmpi slt, %18, %74 : vector<1x256xi32>
    %cst_43 = arith.constant 0.000000e+00 : f32
    %76 = vector.shape_cast %75 : vector<1x256xi1> to vector<1x256xi1>
    %77 = vector.broadcast %76 : vector<1x256xi1> to vector<6x256xi1>
    %78 = vector.broadcast %cst_43 : f32 to vector<6x256xf32>
    %79 = arith.select %77, %73, %78 : vector<6x256xi1>, vector<6x256xf32>
    %c40 = arith.constant 40 : index
    %c0_44 = arith.constant 0 : index
    %80 = vector.load %arg4[%c40, %c0_44] : memref<72x6xf32, #tpu.memory_space<vmem>>, vector<8x6xf32>
    %cst_45 = arith.constant dense<0.000000e+00> : vector<8x256xf32>
    %81 = tpu.matmul %80, %79, %cst_45 {dimension_numbers = #tpu.dot_dimension_numbers<[1], [0], [0], [1], [0, 0, 1, 1], [], []>} : vector<8x6xf32>, vector<6x256xf32>, vector<8x256xf32> -> vector<8x256xf32>
    %82 = arith.addf %72, %81 : vector<8x256xf32>
    %c0_46 = arith.constant 0 : index
    %c32_47 = arith.constant 32 : index
    %83 = vector.load %arg11[%c0_46, %c32_47] : memref<6x290xf32, #tpu.memory_space<vmem>>, vector<6x256xf32>
    %c1_i32_48 = arith.constant 1 : i32
    %84 = vector.broadcast %c1_i32_48 : i32 to vector<1x256xi32>
    %85 = arith.cmpi sge, %18, %84 : vector<1x256xi32>
    %cst_49 = arith.constant 0.000000e+00 : f32
    %86 = vector.shape_cast %85 : vector<1x256xi1> to vector<1x256xi1>
    %87 = vector.broadcast %86 : vector<1x256xi1> to vector<6x256xi1>
    %88 = vector.broadcast %cst_49 : f32 to vector<6x256xf32>
    %89 = arith.select %87, %83, %88 : vector<6x256xi1>, vector<6x256xf32>
    %c48 = arith.constant 48 : index
    %c0_50 = arith.constant 0 : index
    %90 = vector.load %arg4[%c48, %c0_50] : memref<72x6xf32, #tpu.memory_space<vmem>>, vector<8x6xf32>
    %cst_51 = arith.constant dense<0.000000e+00> : vector<8x256xf32>
    %91 = tpu.matmul %90, %89, %cst_51 {dimension_numbers = #tpu.dot_dimension_numbers<[1], [0], [0], [1], [0, 0, 1, 1], [], []>} : vector<8x6xf32>, vector<6x256xf32>, vector<8x256xf32> -> vector<8x256xf32>
    %92 = arith.addf %82, %91 : vector<8x256xf32>
    %c0_52 = arith.constant 0 : index
    %c33 = arith.constant 33 : index
    %93 = vector.load %arg11[%c0_52, %c33] : memref<6x290xf32, #tpu.memory_space<vmem>>, vector<6x256xf32>
    %c56 = arith.constant 56 : index
    %c0_53 = arith.constant 0 : index
    %94 = vector.load %arg4[%c56, %c0_53] : memref<72x6xf32, #tpu.memory_space<vmem>>, vector<8x6xf32>
    %cst_54 = arith.constant dense<0.000000e+00> : vector<8x256xf32>
    %95 = tpu.matmul %94, %93, %cst_54 {dimension_numbers = #tpu.dot_dimension_numbers<[1], [0], [0], [1], [0, 0, 1, 1], [], []>} : vector<8x6xf32>, vector<6x256xf32>, vector<8x256xf32> -> vector<8x256xf32>
    %96 = arith.addf %92, %95 : vector<8x256xf32>
    %c0_55 = arith.constant 0 : index
    %c34 = arith.constant 34 : index
    %97 = vector.load %arg11[%c0_55, %c34] : memref<6x290xf32, #tpu.memory_space<vmem>>, vector<6x256xf32>
    %c15_i32_56 = arith.constant 15 : i32
    %98 = vector.broadcast %c15_i32_56 : i32 to vector<1x256xi32>
    %99 = arith.cmpi slt, %18, %98 : vector<1x256xi32>
    %cst_57 = arith.constant 0.000000e+00 : f32
    %100 = vector.shape_cast %99 : vector<1x256xi1> to vector<1x256xi1>
    %101 = vector.broadcast %100 : vector<1x256xi1> to vector<6x256xi1>
    %102 = vector.broadcast %cst_57 : f32 to vector<6x256xf32>
    %103 = arith.select %101, %97, %102 : vector<6x256xi1>, vector<6x256xf32>
    %c64 = arith.constant 64 : index
    %c0_58 = arith.constant 0 : index
    %104 = vector.load %arg4[%c64, %c0_58] : memref<72x6xf32, #tpu.memory_space<vmem>>, vector<8x6xf32>
    %cst_59 = arith.constant dense<0.000000e+00> : vector<8x256xf32>
    %105 = tpu.matmul %104, %103, %cst_59 {dimension_numbers = #tpu.dot_dimension_numbers<[1], [0], [0], [1], [0, 0, 1, 1], [], []>} : vector<8x6xf32>, vector<6x256xf32>, vector<8x256xf32> -> vector<8x256xf32>
    %106 = arith.addf %96, %105 : vector<8x256xf32>
    %c0_60 = arith.constant 0 : index
    %c0_61 = arith.constant 0 : index
    %107 = vector.load %arg5[%c0_60, %c0_61] : memref<8x1xf32, #tpu.memory_space<vmem>>, vector<8x1xf32>
    %108 = vector.broadcast %107 : vector<8x1xf32> to vector<8x256xf32>
    %109 = arith.addf %106, %108 : vector<8x256xf32>
    %cst_62 = arith.constant 0.000000e+00 : f32
    %110 = vector.broadcast %cst_62 : f32 to vector<8x256xf32>
    %111 = arith.maximumf %109, %110 : vector<8x256xf32>
    %cst_63 = arith.constant 0.000000e+00 : f32
    %112 = vector.broadcast %cst_63 : f32 to vector<4x34xf32>
    %c0_64 = arith.constant 0 : index
    %c0_65 = arith.constant 0 : index
    %113 = vector.load %arg12[%c0_64, %c0_65] : memref<4x324xf32, #tpu.memory_space<vmem>>, vector<4x34xf32>
    tpu.vector_store %arg12[%c0_64, %c0_65], %112 {strides = array<i32>} : memref<4x324xf32, #tpu.memory_space<vmem>>, vector<4x34xf32>,
    %cst_66 = arith.constant 0.000000e+00 : f32
    %114 = vector.broadcast %cst_66 : f32 to vector<4x34xf32>
    %c0_67 = arith.constant 0 : index
    %c290 = arith.constant 290 : index
    %115 = vector.load %arg12[%c0_67, %c290] : memref<4x324xf32, #tpu.memory_space<vmem>>, vector<4x34xf32>
    tpu.vector_store %arg12[%c0_67, %c290], %114 {strides = array<i32>} : memref<4x324xf32, #tpu.memory_space<vmem>>, vector<4x34xf32>,
    %c0_68 = arith.constant 0 : index
    %c34_69 = arith.constant 34 : index
    %116 = vector.load %arg12[%c0_68, %c34_69] : memref<4x324xf32, #tpu.memory_space<vmem>>, vector<4x256xf32>
    tpu.vector_store %arg12[%c0_68, %c34_69], %28 {strides = array<i32>} : memref<4x324xf32, #tpu.memory_space<vmem>>, vector<4x256xf32>,
    %cst_70 = arith.constant 0.000000e+00 : f32
    %117 = vector.broadcast %cst_70 : f32 to vector<8x256xf32>
    %c0_71 = arith.constant 0 : index
    %c0_72 = arith.constant 0 : index
    %118 = vector.load %arg12[%c0_71, %c0_72] : memref<4x324xf32, #tpu.memory_space<vmem>>, vector<4x256xf32>
    %c2_i32 = arith.constant 2 : i32
    %119 = vector.broadcast %c2_i32 : i32 to vector<1x256xi32>
    %120 = arith.cmpi sge, %18, %119 : vector<1x256xi32>
    %cst_73 = arith.constant 0.000000e+00 : f32
    %121 = vector.shape_cast %120 : vector<1x256xi1> to vector<1x256xi1>
    %122 = vector.broadcast %121 : vector<1x256xi1> to vector<4x256xi1>
    %123 = vector.broadcast %cst_73 : f32 to vector<4x256xf32>
    %124 = arith.select %122, %118, %123 : vector<4x256xi1>, vector<4x256xf32>
    %c0_74 = arith.constant 0 : index
    %c0_75 = arith.constant 0 : index
    %125 = vector.load %arg6[%c0_74, %c0_75] : memref<200x4xf32, #tpu.memory_space<vmem>>, vector<8x4xf32>
    %cst_76 = arith.constant dense<0.000000e+00> : vector<8x256xf32>
    %126 = tpu.matmul %125, %124, %cst_76 {dimension_numbers = #tpu.dot_dimension_numbers<[1], [0], [0], [1], [0, 0, 1, 1], [], []>} : vector<8x4xf32>, vector<4x256xf32>, vector<8x256xf32> -> vector<8x256xf32>
    %127 = arith.addf %117, %126 : vector<8x256xf32>
    %c0_77 = arith.constant 0 : index
    %c1_78 = arith.constant 1 : index
    %128 = vector.load %arg12[%c0_77, %c1_78] : memref<4x324xf32, #tpu.memory_space<vmem>>, vector<4x256xf32>
    %c1_i32_79 = arith.constant 1 : i32
    %129 = vector.broadcast %c1_i32_79 : i32 to vector<1x256xi32>
    %130 = arith.cmpi sge, %18, %129 : vector<1x256xi32>
    %cst_80 = arith.constant 0.000000e+00 : f32
    %131 = vector.shape_cast %130 : vector<1x256xi1> to vector<1x256xi1>
    %132 = vector.broadcast %131 : vector<1x256xi1> to vector<4x256xi1>
    %133 = vector.broadcast %cst_80 : f32 to vector<4x256xf32>
    %134 = arith.select %132, %128, %133 : vector<4x256xi1>, vector<4x256xf32>
    %c8_81 = arith.constant 8 : index
    %c0_82 = arith.constant 0 : index
    %135 = vector.load %arg6[%c8_81, %c0_82] : memref<200x4xf32, #tpu.memory_space<vmem>>, vector<8x4xf32>
    %cst_83 = arith.constant dense<0.000000e+00> : vector<8x256xf32>
    %136 = tpu.matmul %135, %134, %cst_83 {dimension_numbers = #tpu.dot_dimension_numbers<[1], [0], [0], [1], [0, 0, 1, 1], [], []>} : vector<8x4xf32>, vector<4x256xf32>, vector<8x256xf32> -> vector<8x256xf32>
    %137 = arith.addf %127, %136 : vector<8x256xf32>
    %c0_84 = arith.constant 0 : index
    %c2_85 = arith.constant 2 : index
    %138 = vector.load %arg12[%c0_84, %c2_85] : memref<4x324xf32, #tpu.memory_space<vmem>>, vector<4x256xf32>
    %c16_86 = arith.constant 16 : index
    %c0_87 = arith.constant 0 : index
    %139 = vector.load %arg6[%c16_86, %c0_87] : memref<200x4xf32, #tpu.memory_space<vmem>>, vector<8x4xf32>
    %cst_88 = arith.constant dense<0.000000e+00> : vector<8x256xf32>
    %140 = tpu.matmul %139, %138, %cst_88 {dimension_numbers = #tpu.dot_dimension_numbers<[1], [0], [0], [1], [0, 0, 1, 1], [], []>} : vector<8x4xf32>, vector<4x256xf32>, vector<8x256xf32> -> vector<8x256xf32>
    %141 = arith.addf %137, %140 : vector<8x256xf32>
    %c0_89 = arith.constant 0 : index
    %c3 = arith.constant 3 : index
    %142 = vector.load %arg12[%c0_89, %c3] : memref<4x324xf32, #tpu.memory_space<vmem>>, vector<4x256xf32>
    %c15_i32_90 = arith.constant 15 : i32
    %143 = vector.broadcast %c15_i32_90 : i32 to vector<1x256xi32>
    %144 = arith.cmpi slt, %18, %143 : vector<1x256xi32>
    %cst_91 = arith.constant 0.000000e+00 : f32
    %145 = vector.shape_cast %144 : vector<1x256xi1> to vector<1x256xi1>
    %146 = vector.broadcast %145 : vector<1x256xi1> to vector<4x256xi1>
    %147 = vector.broadcast %cst_91 : f32 to vector<4x256xf32>
    %148 = arith.select %146, %142, %147 : vector<4x256xi1>, vector<4x256xf32>
    %c24_92 = arith.constant 24 : index
    %c0_93 = arith.constant 0 : index
    %149 = vector.load %arg6[%c24_92, %c0_93] : memref<200x4xf32, #tpu.memory_space<vmem>>, vector<8x4xf32>
    %cst_94 = arith.constant dense<0.000000e+00> : vector<8x256xf32>
    %150 = tpu.matmul %149, %148, %cst_94 {dimension_numbers = #tpu.dot_dimension_numbers<[1], [0], [0], [1], [0, 0, 1, 1], [], []>} : vector<8x4xf32>, vector<4x256xf32>, vector<8x256xf32> -> vector<8x256xf32>
    %151 = arith.addf %141, %150 : vector<8x256xf32>
    %c0_95 = arith.constant 0 : index
    %c4 = arith.constant 4 : index
    %152 = vector.load %arg12[%c0_95, %c4] : memref<4x324xf32, #tpu.memory_space<vmem>>, vector<4x256xf32>
    %c14_i32 = arith.constant 14 : i32
    %153 = vector.broadcast %c14_i32 : i32 to vector<1x256xi32>
    %154 = arith.cmpi slt, %18, %153 : vector<1x256xi32>
    %cst_96 = arith.constant 0.000000e+00 : f32
    %155 = vector.shape_cast %154 : vector<1x256xi1> to vector<1x256xi1>
    %156 = vector.broadcast %155 : vector<1x256xi1> to vector<4x256xi1>
    %157 = vector.broadcast %cst_96 : f32 to vector<4x256xf32>
    %158 = arith.select %156, %152, %157 : vector<4x256xi1>, vector<4x256xf32>
    %c32_97 = arith.constant 32 : index
    %c0_98 = arith.constant 0 : index
    %159 = vector.load %arg6[%c32_97, %c0_98] : memref<200x4xf32, #tpu.memory_space<vmem>>, vector<8x4xf32>
    %cst_99 = arith.constant dense<0.000000e+00> : vector<8x256xf32>
    %160 = tpu.matmul %159, %158, %cst_99 {dimension_numbers = #tpu.dot_dimension_numbers<[1], [0], [0], [1], [0, 0, 1, 1], [], []>} : vector<8x4xf32>, vector<4x256xf32>, vector<8x256xf32> -> vector<8x256xf32>
    %161 = arith.addf %151, %160 : vector<8x256xf32>
    %c0_100 = arith.constant 0 : index
    %c16_101 = arith.constant 16 : index
    %162 = vector.load %arg12[%c0_100, %c16_101] : memref<4x324xf32, #tpu.memory_space<vmem>>, vector<4x256xf32>
    %c2_i32_102 = arith.constant 2 : i32
    %163 = vector.broadcast %c2_i32_102 : i32 to vector<1x256xi32>
    %164 = arith.cmpi sge, %18, %163 : vector<1x256xi32>
    %cst_103 = arith.constant 0.000000e+00 : f32
    %165 = vector.shape_cast %164 : vector<1x256xi1> to vector<1x256xi1>
    %166 = vector.broadcast %165 : vector<1x256xi1> to vector<4x256xi1>
    %167 = vector.broadcast %cst_103 : f32 to vector<4x256xf32>
    %168 = arith.select %166, %162, %167 : vector<4x256xi1>, vector<4x256xf32>
    %c40_104 = arith.constant 40 : index
    %c0_105 = arith.constant 0 : index
    %169 = vector.load %arg6[%c40_104, %c0_105] : memref<200x4xf32, #tpu.memory_space<vmem>>, vector<8x4xf32>
    %cst_106 = arith.constant dense<0.000000e+00> : vector<8x256xf32>
    %170 = tpu.matmul %169, %168, %cst_106 {dimension_numbers = #tpu.dot_dimension_numbers<[1], [0], [0], [1], [0, 0, 1, 1], [], []>} : vector<8x4xf32>, vector<4x256xf32>, vector<8x256xf32> -> vector<8x256xf32>
    %171 = arith.addf %161, %170 : vector<8x256xf32>
    %c0_107 = arith.constant 0 : index
    %c17_108 = arith.constant 17 : index
    %172 = vector.load %arg12[%c0_107, %c17_108] : memref<4x324xf32, #tpu.memory_space<vmem>>, vector<4x256xf32>
    %c1_i32_109 = arith.constant 1 : i32
    %173 = vector.broadcast %c1_i32_109 : i32 to vector<1x256xi32>
    %174 = arith.cmpi sge, %18, %173 : vector<1x256xi32>
    %cst_110 = arith.constant 0.000000e+00 : f32
    %175 = vector.shape_cast %174 : vector<1x256xi1> to vector<1x256xi1>
    %176 = vector.broadcast %175 : vector<1x256xi1> to vector<4x256xi1>
    %177 = vector.broadcast %cst_110 : f32 to vector<4x256xf32>
    %178 = arith.select %176, %172, %177 : vector<4x256xi1>, vector<4x256xf32>
    %c48_111 = arith.constant 48 : index
    %c0_112 = arith.constant 0 : index
    %179 = vector.load %arg6[%c48_111, %c0_112] : memref<200x4xf32, #tpu.memory_space<vmem>>, vector<8x4xf32>
    %cst_113 = arith.constant dense<0.000000e+00> : vector<8x256xf32>
    %180 = tpu.matmul %179, %178, %cst_113 {dimension_numbers = #tpu.dot_dimension_numbers<[1], [0], [0], [1], [0, 0, 1, 1], [], []>} : vector<8x4xf32>, vector<4x256xf32>, vector<8x256xf32> -> vector<8x256xf32>
    %181 = arith.addf %171, %180 : vector<8x256xf32>
    %c0_114 = arith.constant 0 : index
    %c18_115 = arith.constant 18 : index
    %182 = vector.load %arg12[%c0_114, %c18_115] : memref<4x324xf32, #tpu.memory_space<vmem>>, vector<4x256xf32>
    %c56_116 = arith.constant 56 : index
    %c0_117 = arith.constant 0 : index
    %183 = vector.load %arg6[%c56_116, %c0_117] : memref<200x4xf32, #tpu.memory_space<vmem>>, vector<8x4xf32>
    %cst_118 = arith.constant dense<0.000000e+00> : vector<8x256xf32>
    %184 = tpu.matmul %183, %182, %cst_118 {dimension_numbers = #tpu.dot_dimension_numbers<[1], [0], [0], [1], [0, 0, 1, 1], [], []>} : vector<8x4xf32>, vector<4x256xf32>, vector<8x256xf32> -> vector<8x256xf32>
    %185 = arith.addf %181, %184 : vector<8x256xf32>
    %c0_119 = arith.constant 0 : index
    %c19 = arith.constant 19 : index
    %186 = vector.load %arg12[%c0_119, %c19] : memref<4x324xf32, #tpu.memory_space<vmem>>, vector<4x256xf32>
    %c15_i32_120 = arith.constant 15 : i32
    %187 = vector.broadcast %c15_i32_120 : i32 to vector<1x256xi32>
    %188 = arith.cmpi slt, %18, %187 : vector<1x256xi32>
    %cst_121 = arith.constant 0.000000e+00 : f32
    %189 = vector.shape_cast %188 : vector<1x256xi1> to vector<1x256xi1>
    %190 = vector.broadcast %189 : vector<1x256xi1> to vector<4x256xi1>
    %191 = vector.broadcast %cst_121 : f32 to vector<4x256xf32>
    %192 = arith.select %190, %186, %191 : vector<4x256xi1>, vector<4x256xf32>
    %c64_122 = arith.constant 64 : index
    %c0_123 = arith.constant 0 : index
    %193 = vector.load %arg6[%c64_122, %c0_123] : memref<200x4xf32, #tpu.memory_space<vmem>>, vector<8x4xf32>
    %cst_124 = arith.constant dense<0.000000e+00> : vector<8x256xf32>
    %194 = tpu.matmul %193, %192, %cst_124 {dimension_numbers = #tpu.dot_dimension_numbers<[1], [0], [0], [1], [0, 0, 1, 1], [], []>} : vector<8x4xf32>, vector<4x256xf32>, vector<8x256xf32> -> vector<8x256xf32>
    %195 = arith.addf %185, %194 : vector<8x256xf32>
    %c0_125 = arith.constant 0 : index
    %c20 = arith.constant 20 : index
    %196 = vector.load %arg12[%c0_125, %c20] : memref<4x324xf32, #tpu.memory_space<vmem>>, vector<4x256xf32>
    %c14_i32_126 = arith.constant 14 : i32
    %197 = vector.broadcast %c14_i32_126 : i32 to vector<1x256xi32>
    %198 = arith.cmpi slt, %18, %197 : vector<1x256xi32>
    %cst_127 = arith.constant 0.000000e+00 : f32
    %199 = vector.shape_cast %198 : vector<1x256xi1> to vector<1x256xi1>
    %200 = vector.broadcast %199 : vector<1x256xi1> to vector<4x256xi1>
    %201 = vector.broadcast %cst_127 : f32 to vector<4x256xf32>
    %202 = arith.select %200, %196, %201 : vector<4x256xi1>, vector<4x256xf32>
    %c72 = arith.constant 72 : index
    %c0_128 = arith.constant 0 : index
    %203 = vector.load %arg6[%c72, %c0_128] : memref<200x4xf32, #tpu.memory_space<vmem>>, vector<8x4xf32>
    %cst_129 = arith.constant dense<0.000000e+00> : vector<8x256xf32>
    %204 = tpu.matmul %203, %202, %cst_129 {dimension_numbers = #tpu.dot_dimension_numbers<[1], [0], [0], [1], [0, 0, 1, 1], [], []>} : vector<8x4xf32>, vector<4x256xf32>, vector<8x256xf32> -> vector<8x256xf32>
    %205 = arith.addf %195, %204 : vector<8x256xf32>
    %c0_130 = arith.constant 0 : index
    %c32_131 = arith.constant 32 : index
    %206 = vector.load %arg12[%c0_130, %c32_131] : memref<4x324xf32, #tpu.memory_space<vmem>>, vector<4x256xf32>
    %c2_i32_132 = arith.constant 2 : i32
    %207 = vector.broadcast %c2_i32_132 : i32 to vector<1x256xi32>
    %208 = arith.cmpi sge, %18, %207 : vector<1x256xi32>
    %cst_133 = arith.constant 0.000000e+00 : f32
    %209 = vector.shape_cast %208 : vector<1x256xi1> to vector<1x256xi1>
    %210 = vector.broadcast %209 : vector<1x256xi1> to vector<4x256xi1>
    %211 = vector.broadcast %cst_133 : f32 to vector<4x256xf32>
    %212 = arith.select %210, %206, %211 : vector<4x256xi1>, vector<4x256xf32>
    %c80 = arith.constant 80 : index
    %c0_134 = arith.constant 0 : index
    %213 = vector.load %arg6[%c80, %c0_134] : memref<200x4xf32, #tpu.memory_space<vmem>>, vector<8x4xf32>
    %cst_135 = arith.constant dense<0.000000e+00> : vector<8x256xf32>
    %214 = tpu.matmul %213, %212, %cst_135 {dimension_numbers = #tpu.dot_dimension_numbers<[1], [0], [0], [1], [0, 0, 1, 1], [], []>} : vector<8x4xf32>, vector<4x256xf32>, vector<8x256xf32> -> vector<8x256xf32>
    %215 = arith.addf %205, %214 : vector<8x256xf32>
    %c0_136 = arith.constant 0 : index
    %c33_137 = arith.constant 33 : index
    %216 = vector.load %arg12[%c0_136, %c33_137] : memref<4x324xf32, #tpu.memory_space<vmem>>, vector<4x256xf32>
    %c1_i32_138 = arith.constant 1 : i32
    %217 = vector.broadcast %c1_i32_138 : i32 to vector<1x256xi32>
    %218 = arith.cmpi sge, %18, %217 : vector<1x256xi32>
    %cst_139 = arith.constant 0.000000e+00 : f32
    %219 = vector.shape_cast %218 : vector<1x256xi1> to vector<1x256xi1>
    %220 = vector.broadcast %219 : vector<1x256xi1> to vector<4x256xi1>
    %221 = vector.broadcast %cst_139 : f32 to vector<4x256xf32>
    %222 = arith.select %220, %216, %221 : vector<4x256xi1>, vector<4x256xf32>
    %c88 = arith.constant 88 : index
    %c0_140 = arith.constant 0 : index
    %223 = vector.load %arg6[%c88, %c0_140] : memref<200x4xf32, #tpu.memory_space<vmem>>, vector<8x4xf32>
    %cst_141 = arith.constant dense<0.000000e+00> : vector<8x256xf32>
    %224 = tpu.matmul %223, %222, %cst_141 {dimension_numbers = #tpu.dot_dimension_numbers<[1], [0], [0], [1], [0, 0, 1, 1], [], []>} : vector<8x4xf32>, vector<4x256xf32>, vector<8x256xf32> -> vector<8x256xf32>
    %225 = arith.addf %215, %224 : vector<8x256xf32>
    %c0_142 = arith.constant 0 : index
    %c34_143 = arith.constant 34 : index
    %226 = vector.load %arg12[%c0_142, %c34_143] : memref<4x324xf32, #tpu.memory_space<vmem>>, vector<4x256xf32>
    %c96 = arith.constant 96 : index
    %c0_144 = arith.constant 0 : index
    %227 = vector.load %arg6[%c96, %c0_144] : memref<200x4xf32, #tpu.memory_space<vmem>>, vector<8x4xf32>
    %cst_145 = arith.constant dense<0.000000e+00> : vector<8x256xf32>
    %228 = tpu.matmul %227, %226, %cst_145 {dimension_numbers = #tpu.dot_dimension_numbers<[1], [0], [0], [1], [0, 0, 1, 1], [], []>} : vector<8x4xf32>, vector<4x256xf32>, vector<8x256xf32> -> vector<8x256xf32>
    %229 = arith.addf %225, %228 : vector<8x256xf32>
    %c0_146 = arith.constant 0 : index
    %c35 = arith.constant 35 : index
    %230 = vector.load %arg12[%c0_146, %c35] : memref<4x324xf32, #tpu.memory_space<vmem>>, vector<4x256xf32>
    %c15_i32_147 = arith.constant 15 : i32
    %231 = vector.broadcast %c15_i32_147 : i32 to vector<1x256xi32>
    %232 = arith.cmpi slt, %18, %231 : vector<1x256xi32>
    %cst_148 = arith.constant 0.000000e+00 : f32
    %233 = vector.shape_cast %232 : vector<1x256xi1> to vector<1x256xi1>
    %234 = vector.broadcast %233 : vector<1x256xi1> to vector<4x256xi1>
    %235 = vector.broadcast %cst_148 : f32 to vector<4x256xf32>
    %236 = arith.select %234, %230, %235 : vector<4x256xi1>, vector<4x256xf32>
    %c104 = arith.constant 104 : index
    %c0_149 = arith.constant 0 : index
    %237 = vector.load %arg6[%c104, %c0_149] : memref<200x4xf32, #tpu.memory_space<vmem>>, vector<8x4xf32>
    %cst_150 = arith.constant dense<0.000000e+00> : vector<8x256xf32>
    %238 = tpu.matmul %237, %236, %cst_150 {dimension_numbers = #tpu.dot_dimension_numbers<[1], [0], [0], [1], [0, 0, 1, 1], [], []>} : vector<8x4xf32>, vector<4x256xf32>, vector<8x256xf32> -> vector<8x256xf32>
    %239 = arith.addf %229, %238 : vector<8x256xf32>
    %c0_151 = arith.constant 0 : index
    %c36 = arith.constant 36 : index
    %240 = vector.load %arg12[%c0_151, %c36] : memref<4x324xf32, #tpu.memory_space<vmem>>, vector<4x256xf32>
    %c14_i32_152 = arith.constant 14 : i32
    %241 = vector.broadcast %c14_i32_152 : i32 to vector<1x256xi32>
    %242 = arith.cmpi slt, %18, %241 : vector<1x256xi32>
    %cst_153 = arith.constant 0.000000e+00 : f32
    %243 = vector.shape_cast %242 : vector<1x256xi1> to vector<1x256xi1>
    %244 = vector.broadcast %243 : vector<1x256xi1> to vector<4x256xi1>
    %245 = vector.broadcast %cst_153 : f32 to vector<4x256xf32>
    %246 = arith.select %244, %240, %245 : vector<4x256xi1>, vector<4x256xf32>
    %c112 = arith.constant 112 : index
    %c0_154 = arith.constant 0 : index
    %247 = vector.load %arg6[%c112, %c0_154] : memref<200x4xf32, #tpu.memory_space<vmem>>, vector<8x4xf32>
    %cst_155 = arith.constant dense<0.000000e+00> : vector<8x256xf32>
    %248 = tpu.matmul %247, %246, %cst_155 {dimension_numbers = #tpu.dot_dimension_numbers<[1], [0], [0], [1], [0, 0, 1, 1], [], []>} : vector<8x4xf32>, vector<4x256xf32>, vector<8x256xf32> -> vector<8x256xf32>
    %249 = arith.addf %239, %248 : vector<8x256xf32>
    %c0_156 = arith.constant 0 : index
    %c48_157 = arith.constant 48 : index
    %250 = vector.load %arg12[%c0_156, %c48_157] : memref<4x324xf32, #tpu.memory_space<vmem>>, vector<4x256xf32>
    %c2_i32_158 = arith.constant 2 : i32
    %251 = vector.broadcast %c2_i32_158 : i32 to vector<1x256xi32>
    %252 = arith.cmpi sge, %18, %251 : vector<1x256xi32>
    %cst_159 = arith.constant 0.000000e+00 : f32
    %253 = vector.shape_cast %252 : vector<1x256xi1> to vector<1x256xi1>
    %254 = vector.broadcast %253 : vector<1x256xi1> to vector<4x256xi1>
    %255 = vector.broadcast %cst_159 : f32 to vector<4x256xf32>
    %256 = arith.select %254, %250, %255 : vector<4x256xi1>, vector<4x256xf32>
    %c120 = arith.constant 120 : index
    %c0_160 = arith.constant 0 : index
    %257 = vector.load %arg6[%c120, %c0_160] : memref<200x4xf32, #tpu.memory_space<vmem>>, vector<8x4xf32>
    %cst_161 = arith.constant dense<0.000000e+00> : vector<8x256xf32>
    %258 = tpu.matmul %257, %256, %cst_161 {dimension_numbers = #tpu.dot_dimension_numbers<[1], [0], [0], [1], [0, 0, 1, 1], [], []>} : vector<8x4xf32>, vector<4x256xf32>, vector<8x256xf32> -> vector<8x256xf32>
    %259 = arith.addf %249, %258 : vector<8x256xf32>
    %c0_162 = arith.constant 0 : index
    %c49 = arith.constant 49 : index
    %260 = vector.load %arg12[%c0_162, %c49] : memref<4x324xf32, #tpu.memory_space<vmem>>, vector<4x256xf32>
    %c1_i32_163 = arith.constant 1 : i32
    %261 = vector.broadcast %c1_i32_163 : i32 to vector<1x256xi32>
    %262 = arith.cmpi sge, %18, %261 : vector<1x256xi32>
    %cst_164 = arith.constant 0.000000e+00 : f32
    %263 = vector.shape_cast %262 : vector<1x256xi1> to vector<1x256xi1>
    %264 = vector.broadcast %263 : vector<1x256xi1> to vector<4x256xi1>
    %265 = vector.broadcast %cst_164 : f32 to vector<4x256xf32>
    %266 = arith.select %264, %260, %265 : vector<4x256xi1>, vector<4x256xf32>
    %c128 = arith.constant 128 : index
    %c0_165 = arith.constant 0 : index
    %267 = vector.load %arg6[%c128, %c0_165] : memref<200x4xf32, #tpu.memory_space<vmem>>, vector<8x4xf32>
    %cst_166 = arith.constant dense<0.000000e+00> : vector<8x256xf32>
    %268 = tpu.matmul %267, %266, %cst_166 {dimension_numbers = #tpu.dot_dimension_numbers<[1], [0], [0], [1], [0, 0, 1, 1], [], []>} : vector<8x4xf32>, vector<4x256xf32>, vector<8x256xf32> -> vector<8x256xf32>
    %269 = arith.addf %259, %268 : vector<8x256xf32>
    %c0_167 = arith.constant 0 : index
    %c50 = arith.constant 50 : index
    %270 = vector.load %arg12[%c0_167, %c50] : memref<4x324xf32, #tpu.memory_space<vmem>>, vector<4x256xf32>
    %c136 = arith.constant 136 : index
    %c0_168 = arith.constant 0 : index
    %271 = vector.load %arg6[%c136, %c0_168] : memref<200x4xf32, #tpu.memory_space<vmem>>, vector<8x4xf32>
    %cst_169 = arith.constant dense<0.000000e+00> : vector<8x256xf32>
    %272 = tpu.matmul %271, %270, %cst_169 {dimension_numbers = #tpu.dot_dimension_numbers<[1], [0], [0], [1], [0, 0, 1, 1], [], []>} : vector<8x4xf32>, vector<4x256xf32>, vector<8x256xf32> -> vector<8x256xf32>
    %273 = arith.addf %269, %272 : vector<8x256xf32>
    %c0_170 = arith.constant 0 : index
    %c51 = arith.constant 51 : index
    %274 = vector.load %arg12[%c0_170, %c51] : memref<4x324xf32, #tpu.memory_space<vmem>>, vector<4x256xf32>
    %c15_i32_171 = arith.constant 15 : i32
    %275 = vector.broadcast %c15_i32_171 : i32 to vector<1x256xi32>
    %276 = arith.cmpi slt, %18, %275 : vector<1x256xi32>
    %cst_172 = arith.constant 0.000000e+00 : f32
    %277 = vector.shape_cast %276 : vector<1x256xi1> to vector<1x256xi1>
    %278 = vector.broadcast %277 : vector<1x256xi1> to vector<4x256xi1>
    %279 = vector.broadcast %cst_172 : f32 to vector<4x256xf32>
    %280 = arith.select %278, %274, %279 : vector<4x256xi1>, vector<4x256xf32>
    %c144 = arith.constant 144 : index
    %c0_173 = arith.constant 0 : index
    %281 = vector.load %arg6[%c144, %c0_173] : memref<200x4xf32, #tpu.memory_space<vmem>>, vector<8x4xf32>
    %cst_174 = arith.constant dense<0.000000e+00> : vector<8x256xf32>
    %282 = tpu.matmul %281, %280, %cst_174 {dimension_numbers = #tpu.dot_dimension_numbers<[1], [0], [0], [1], [0, 0, 1, 1], [], []>} : vector<8x4xf32>, vector<4x256xf32>, vector<8x256xf32> -> vector<8x256xf32>
    %283 = arith.addf %273, %282 : vector<8x256xf32>
    %c0_175 = arith.constant 0 : index
    %c52 = arith.constant 52 : index
    %284 = vector.load %arg12[%c0_175, %c52] : memref<4x324xf32, #tpu.memory_space<vmem>>, vector<4x256xf32>
    %c14_i32_176 = arith.constant 14 : i32
    %285 = vector.broadcast %c14_i32_176 : i32 to vector<1x256xi32>
    %286 = arith.cmpi slt, %18, %285 : vector<1x256xi32>
    %cst_177 = arith.constant 0.000000e+00 : f32
    %287 = vector.shape_cast %286 : vector<1x256xi1> to vector<1x256xi1>
    %288 = vector.broadcast %287 : vector<1x256xi1> to vector<4x256xi1>
    %289 = vector.broadcast %cst_177 : f32 to vector<4x256xf32>
    %290 = arith.select %288, %284, %289 : vector<4x256xi1>, vector<4x256xf32>
    %c152 = arith.constant 152 : index
    %c0_178 = arith.constant 0 : index
    %291 = vector.load %arg6[%c152, %c0_178] : memref<200x4xf32, #tpu.memory_space<vmem>>, vector<8x4xf32>
    %cst_179 = arith.constant dense<0.000000e+00> : vector<8x256xf32>
    %292 = tpu.matmul %291, %290, %cst_179 {dimension_numbers = #tpu.dot_dimension_numbers<[1], [0], [0], [1], [0, 0, 1, 1], [], []>} : vector<8x4xf32>, vector<4x256xf32>, vector<8x256xf32> -> vector<8x256xf32>
    %293 = arith.addf %283, %292 : vector<8x256xf32>
    %c0_180 = arith.constant 0 : index
    %c64_181 = arith.constant 64 : index
    %294 = vector.load %arg12[%c0_180, %c64_181] : memref<4x324xf32, #tpu.memory_space<vmem>>, vector<4x256xf32>
    %c2_i32_182 = arith.constant 2 : i32
    %295 = vector.broadcast %c2_i32_182 : i32 to vector<1x256xi32>
    %296 = arith.cmpi sge, %18, %295 : vector<1x256xi32>
    %cst_183 = arith.constant 0.000000e+00 : f32
    %297 = vector.shape_cast %296 : vector<1x256xi1> to vector<1x256xi1>
    %298 = vector.broadcast %297 : vector<1x256xi1> to vector<4x256xi1>
    %299 = vector.broadcast %cst_183 : f32 to vector<4x256xf32>
    %300 = arith.select %298, %294, %299 : vector<4x256xi1>, vector<4x256xf32>
    %c160 = arith.constant 160 : index
    %c0_184 = arith.constant 0 : index
    %301 = vector.load %arg6[%c160, %c0_184] : memref<200x4xf32, #tpu.memory_space<vmem>>, vector<8x4xf32>
    %cst_185 = arith.constant dense<0.000000e+00> : vector<8x256xf32>
    %302 = tpu.matmul %301, %300, %cst_185 {dimension_numbers = #tpu.dot_dimension_numbers<[1], [0], [0], [1], [0, 0, 1, 1], [], []>} : vector<8x4xf32>, vector<4x256xf32>, vector<8x256xf32> -> vector<8x256xf32>
    %303 = arith.addf %293, %302 : vector<8x256xf32>
    %c0_186 = arith.constant 0 : index
    %c65 = arith.constant 65 : index
    %304 = vector.load %arg12[%c0_186, %c65] : memref<4x324xf32, #tpu.memory_space<vmem>>, vector<4x256xf32>
    %c1_i32_187 = arith.constant 1 : i32
    %305 = vector.broadcast %c1_i32_187 : i32 to vector<1x256xi32>
    %306 = arith.cmpi sge, %18, %305 : vector<1x256xi32>
    %cst_188 = arith.constant 0.000000e+00 : f32
    %307 = vector.shape_cast %306 : vector<1x256xi1> to vector<1x256xi1>
    %308 = vector.broadcast %307 : vector<1x256xi1> to vector<4x256xi1>
    %309 = vector.broadcast %cst_188 : f32 to vector<4x256xf32>
    %310 = arith.select %308, %304, %309 : vector<4x256xi1>, vector<4x256xf32>
    %c168 = arith.constant 168 : index
    %c0_189 = arith.constant 0 : index
    %311 = vector.load %arg6[%c168, %c0_189] : memref<200x4xf32, #tpu.memory_space<vmem>>, vector<8x4xf32>
    %cst_190 = arith.constant dense<0.000000e+00> : vector<8x256xf32>
    %312 = tpu.matmul %311, %310, %cst_190 {dimension_numbers = #tpu.dot_dimension_numbers<[1], [0], [0], [1], [0, 0, 1, 1], [], []>} : vector<8x4xf32>, vector<4x256xf32>, vector<8x256xf32> -> vector<8x256xf32>
    %313 = arith.addf %303, %312 : vector<8x256xf32>
    %c0_191 = arith.constant 0 : index
    %c66 = arith.constant 66 : index
    %314 = vector.load %arg12[%c0_191, %c66] : memref<4x324xf32, #tpu.memory_space<vmem>>, vector<4x256xf32>
    %c176 = arith.constant 176 : index
    %c0_192 = arith.constant 0 : index
    %315 = vector.load %arg6[%c176, %c0_192] : memref<200x4xf32, #tpu.memory_space<vmem>>, vector<8x4xf32>
    %cst_193 = arith.constant dense<0.000000e+00> : vector<8x256xf32>
    %316 = tpu.matmul %315, %314, %cst_193 {dimension_numbers = #tpu.dot_dimension_numbers<[1], [0], [0], [1], [0, 0, 1, 1], [], []>} : vector<8x4xf32>, vector<4x256xf32>, vector<8x256xf32> -> vector<8x256xf32>
    %317 = arith.addf %313, %316 : vector<8x256xf32>
    %c0_194 = arith.constant 0 : index
    %c67 = arith.constant 67 : index
    %318 = vector.load %arg12[%c0_194, %c67] : memref<4x324xf32, #tpu.memory_space<vmem>>, vector<4x256xf32>
    %c15_i32_195 = arith.constant 15 : i32
    %319 = vector.broadcast %c15_i32_195 : i32 to vector<1x256xi32>
    %320 = arith.cmpi slt, %18, %319 : vector<1x256xi32>
    %cst_196 = arith.constant 0.000000e+00 : f32
    %321 = vector.shape_cast %320 : vector<1x256xi1> to vector<1x256xi1>
    %322 = vector.broadcast %321 : vector<1x256xi1> to vector<4x256xi1>
    %323 = vector.broadcast %cst_196 : f32 to vector<4x256xf32>
    %324 = arith.select %322, %318, %323 : vector<4x256xi1>, vector<4x256xf32>
    %c184 = arith.constant 184 : index
    %c0_197 = arith.constant 0 : index
    %325 = vector.load %arg6[%c184, %c0_197] : memref<200x4xf32, #tpu.memory_space<vmem>>, vector<8x4xf32>
    %cst_198 = arith.constant dense<0.000000e+00> : vector<8x256xf32>
    %326 = tpu.matmul %325, %324, %cst_198 {dimension_numbers = #tpu.dot_dimension_numbers<[1], [0], [0], [1], [0, 0, 1, 1], [], []>} : vector<8x4xf32>, vector<4x256xf32>, vector<8x256xf32> -> vector<8x256xf32>
    %327 = arith.addf %317, %326 : vector<8x256xf32>
    %c0_199 = arith.constant 0 : index
    %c68 = arith.constant 68 : index
    %328 = vector.load %arg12[%c0_199, %c68] : memref<4x324xf32, #tpu.memory_space<vmem>>, vector<4x256xf32>
    %c14_i32_200 = arith.constant 14 : i32
    %329 = vector.broadcast %c14_i32_200 : i32 to vector<1x256xi32>
    %330 = arith.cmpi slt, %18, %329 : vector<1x256xi32>
    %cst_201 = arith.constant 0.000000e+00 : f32
    %331 = vector.shape_cast %330 : vector<1x256xi1> to vector<1x256xi1>
    %332 = vector.broadcast %331 : vector<1x256xi1> to vector<4x256xi1>
    %333 = vector.broadcast %cst_201 : f32 to vector<4x256xf32>
    %334 = arith.select %332, %328, %333 : vector<4x256xi1>, vector<4x256xf32>
    %c192 = arith.constant 192 : index
    %c0_202 = arith.constant 0 : index
    %335 = vector.load %arg6[%c192, %c0_202] : memref<200x4xf32, #tpu.memory_space<vmem>>, vector<8x4xf32>
    %cst_203 = arith.constant dense<0.000000e+00> : vector<8x256xf32>
    %336 = tpu.matmul %335, %334, %cst_203 {dimension_numbers = #tpu.dot_dimension_numbers<[1], [0], [0], [1], [0, 0, 1, 1], [], []>} : vector<8x4xf32>, vector<4x256xf32>, vector<8x256xf32> -> vector<8x256xf32>
    %337 = arith.addf %327, %336 : vector<8x256xf32>
    %c0_204 = arith.constant 0 : index
    %c0_205 = arith.constant 0 : index
    %338 = vector.load %arg7[%c0_204, %c0_205] : memref<8x1xf32, #tpu.memory_space<vmem>>, vector<8x1xf32>
    %339 = vector.broadcast %338 : vector<8x1xf32> to vector<8x256xf32>
    %340 = arith.addf %337, %339 : vector<8x256xf32>
    %cst_206 = arith.constant 0.000000e+00 : f32
    %341 = vector.broadcast %cst_206 : f32 to vector<8x256xf32>
    %342 = arith.maximumf %340, %341 : vector<8x256xf32>
    %cst_207 = arith.constant 0.000000e+00 : f32
    %343 = vector.broadcast %cst_207 : f32 to vector<4x17xf32>
    %c0_208 = arith.constant 0 : index
    %c0_209 = arith.constant 0 : index
    %344 = vector.load %arg13[%c0_208, %c0_209] : memref<4x290xf32, #tpu.memory_space<vmem>>, vector<4x17xf32>
    tpu.vector_store %arg13[%c0_208, %c0_209], %343 {strides = array<i32>} : memref<4x290xf32, #tpu.memory_space<vmem>>, vector<4x17xf32>,
    %cst_210 = arith.constant 0.000000e+00 : f32
    %345 = vector.broadcast %cst_210 : f32 to vector<4x17xf32>
    %c0_211 = arith.constant 0 : index
    %c273_212 = arith.constant 273 : index
    %346 = vector.load %arg13[%c0_211, %c273_212] : memref<4x290xf32, #tpu.memory_space<vmem>>, vector<4x17xf32>
    tpu.vector_store %arg13[%c0_211, %c273_212], %345 {strides = array<i32>} : memref<4x290xf32, #tpu.memory_space<vmem>>, vector<4x17xf32>,
    %c0_213 = arith.constant 0 : index
    %c17_214 = arith.constant 17 : index
    %347 = vector.load %arg13[%c0_213, %c17_214] : memref<4x290xf32, #tpu.memory_space<vmem>>, vector<4x256xf32>
    tpu.vector_store %arg13[%c0_213, %c17_214], %1 {strides = array<i32>} : memref<4x290xf32, #tpu.memory_space<vmem>>, vector<4x256xf32>,
    %c0_215 = arith.constant 0 : index
    %c0_216 = arith.constant 0 : index
    %348 = vector.load %arg13[%c0_215, %c0_216] : memref<4x290xf32, #tpu.memory_space<vmem>>, vector<4x256xf32>
    %c1_i32_217 = arith.constant 1 : i32
    %349 = vector.broadcast %c1_i32_217 : i32 to vector<1x256xi32>
    %350 = arith.cmpi sge, %18, %349 : vector<1x256xi32>
    %cst_218 = arith.constant 0.000000e+00 : f32
    %351 = vector.shape_cast %350 : vector<1x256xi1> to vector<1x256xi1>
    %352 = vector.broadcast %351 : vector<1x256xi1> to vector<4x256xi1>
    %353 = vector.broadcast %cst_218 : f32 to vector<4x256xf32>
    %354 = arith.select %352, %348, %353 : vector<4x256xi1>, vector<4x256xf32>
    %c0_219 = arith.constant 0 : index
    %c1_220 = arith.constant 1 : index
    %355 = vector.load %arg13[%c0_219, %c1_220] : memref<4x290xf32, #tpu.memory_space<vmem>>, vector<4x256xf32>
    %356 = arith.maximumf %354, %355 : vector<4x256xf32>
    %c0_221 = arith.constant 0 : index
    %c2_222 = arith.constant 2 : index
    %357 = vector.load %arg13[%c0_221, %c2_222] : memref<4x290xf32, #tpu.memory_space<vmem>>, vector<4x256xf32>
    %c15_i32_223 = arith.constant 15 : i32
    %358 = vector.broadcast %c15_i32_223 : i32 to vector<1x256xi32>
    %359 = arith.cmpi slt, %18, %358 : vector<1x256xi32>
    %cst_224 = arith.constant 0.000000e+00 : f32
    %360 = vector.shape_cast %359 : vector<1x256xi1> to vector<1x256xi1>
    %361 = vector.broadcast %360 : vector<1x256xi1> to vector<4x256xi1>
    %362 = vector.broadcast %cst_224 : f32 to vector<4x256xf32>
    %363 = arith.select %361, %357, %362 : vector<4x256xi1>, vector<4x256xf32>
    %364 = arith.maximumf %356, %363 : vector<4x256xf32>
    %c0_225 = arith.constant 0 : index
    %c16_226 = arith.constant 16 : index
    %365 = vector.load %arg13[%c0_225, %c16_226] : memref<4x290xf32, #tpu.memory_space<vmem>>, vector<4x256xf32>
    %c1_i32_227 = arith.constant 1 : i32
    %366 = vector.broadcast %c1_i32_227 : i32 to vector<1x256xi32>
    %367 = arith.cmpi sge, %18, %366 : vector<1x256xi32>
    %cst_228 = arith.constant 0.000000e+00 : f32
    %368 = vector.shape_cast %367 : vector<1x256xi1> to vector<1x256xi1>
    %369 = vector.broadcast %368 : vector<1x256xi1> to vector<4x256xi1>
    %370 = vector.broadcast %cst_228 : f32 to vector<4x256xf32>
    %371 = arith.select %369, %365, %370 : vector<4x256xi1>, vector<4x256xf32>
    %372 = arith.maximumf %364, %371 : vector<4x256xf32>
    %c0_229 = arith.constant 0 : index
    %c17_230 = arith.constant 17 : index
    %373 = vector.load %arg13[%c0_229, %c17_230] : memref<4x290xf32, #tpu.memory_space<vmem>>, vector<4x256xf32>
    %374 = arith.maximumf %372, %373 : vector<4x256xf32>
    %c0_231 = arith.constant 0 : index
    %c18_232 = arith.constant 18 : index
    %375 = vector.load %arg13[%c0_231, %c18_232] : memref<4x290xf32, #tpu.memory_space<vmem>>, vector<4x256xf32>
    %c15_i32_233 = arith.constant 15 : i32
    %376 = vector.broadcast %c15_i32_233 : i32 to vector<1x256xi32>
    %377 = arith.cmpi slt, %18, %376 : vector<1x256xi32>
    %cst_234 = arith.constant 0.000000e+00 : f32
    %378 = vector.shape_cast %377 : vector<1x256xi1> to vector<1x256xi1>
    %379 = vector.broadcast %378 : vector<1x256xi1> to vector<4x256xi1>
    %380 = vector.broadcast %cst_234 : f32 to vector<4x256xf32>
    %381 = arith.select %379, %375, %380 : vector<4x256xi1>, vector<4x256xf32>
    %382 = arith.maximumf %374, %381 : vector<4x256xf32>
    %c0_235 = arith.constant 0 : index
    %c32_236 = arith.constant 32 : index
    %383 = vector.load %arg13[%c0_235, %c32_236] : memref<4x290xf32, #tpu.memory_space<vmem>>, vector<4x256xf32>
    %c1_i32_237 = arith.constant 1 : i32
    %384 = vector.broadcast %c1_i32_237 : i32 to vector<1x256xi32>
    %385 = arith.cmpi sge, %18, %384 : vector<1x256xi32>
    %cst_238 = arith.constant 0.000000e+00 : f32
    %386 = vector.shape_cast %385 : vector<1x256xi1> to vector<1x256xi1>
    %387 = vector.broadcast %386 : vector<1x256xi1> to vector<4x256xi1>
    %388 = vector.broadcast %cst_238 : f32 to vector<4x256xf32>
    %389 = arith.select %387, %383, %388 : vector<4x256xi1>, vector<4x256xf32>
    %390 = arith.maximumf %382, %389 : vector<4x256xf32>
    %c0_239 = arith.constant 0 : index
    %c33_240 = arith.constant 33 : index
    %391 = vector.load %arg13[%c0_239, %c33_240] : memref<4x290xf32, #tpu.memory_space<vmem>>, vector<4x256xf32>
    %392 = arith.maximumf %390, %391 : vector<4x256xf32>
    %c0_241 = arith.constant 0 : index
    %c34_242 = arith.constant 34 : index
    %393 = vector.load %arg13[%c0_241, %c34_242] : memref<4x290xf32, #tpu.memory_space<vmem>>, vector<4x256xf32>
    %c15_i32_243 = arith.constant 15 : i32
    %394 = vector.broadcast %c15_i32_243 : i32 to vector<1x256xi32>
    %395 = arith.cmpi slt, %18, %394 : vector<1x256xi32>
    %cst_244 = arith.constant 0.000000e+00 : f32
    %396 = vector.shape_cast %395 : vector<1x256xi1> to vector<1x256xi1>
    %397 = vector.broadcast %396 : vector<1x256xi1> to vector<4x256xi1>
    %398 = vector.broadcast %cst_244 : f32 to vector<4x256xf32>
    %399 = arith.select %397, %393, %398 : vector<4x256xi1>, vector<4x256xf32>
    %400 = arith.maximumf %392, %399 : vector<4x256xf32>
    %cst_245 = arith.constant 0.000000e+00 : f32
    %401 = vector.broadcast %cst_245 : f32 to vector<4x256xf32>
    %402 = arith.maximumf %400, %401 : vector<4x256xf32>
    %c0_246 = arith.constant 0 : index
    %c0_247 = arith.constant 0 : index
    %403 = vector.load %arg8[%c0_246, %c0_247] : memref<8x4xf32, #tpu.memory_space<vmem>>, vector<8x4xf32>
    %cst_248 = arith.constant dense<0.000000e+00> : vector<8x256xf32>
    %404 = tpu.matmul %403, %402, %cst_248 {dimension_numbers = #tpu.dot_dimension_numbers<[1], [0], [0], [1], [0, 0, 1, 1], [], []>} : vector<8x4xf32>, vector<4x256xf32>, vector<8x256xf32> -> vector<8x256xf32>
    %c0_249 = arith.constant 0 : index
    %c0_250 = arith.constant 0 : index
    %405 = vector.load %arg9[%c0_249, %c0_250] : memref<8x1xf32, #tpu.memory_space<vmem>>, vector<8x1xf32>
    %406 = vector.broadcast %405 : vector<8x1xf32> to vector<8x256xf32>
    %407 = arith.addf %404, %406 : vector<8x256xf32>
    %cst_251 = arith.constant 0.000000e+00 : f32
    %408 = vector.broadcast %cst_251 : f32 to vector<8x256xf32>
    %409 = arith.maximumf %407, %408 : vector<8x256xf32>
    %c0_252 = arith.constant 0 : index
    %c0_253 = arith.constant 0 : index
    %c0_254 = arith.constant 0 : index
    %410 = vector.load %arg10[%c0_252, %c0_253, %c0_254] : memref<1x32x256xf32, #tpu.memory_space<vmem>>, vector<1x8x256xf32>
    %411 = vector.shape_cast %410 : vector<1x8x256xf32> to vector<8x256xf32>
    %412 = vector.shape_cast %26 : vector<8x256xf32> to vector<1x8x256xf32>
    tpu.vector_store %arg10[%c0_252, %c0_253, %c0_254], %412 {strides = array<i32>} : memref<1x32x256xf32, #tpu.memory_space<vmem>>, vector<1x8x256xf32>,
    %c0_255 = arith.constant 0 : index
    %c8_256 = arith.constant 8 : index
    %c0_257 = arith.constant 0 : index
    %413 = vector.load %arg10[%c0_255, %c8_256, %c0_257] : memref<1x32x256xf32, #tpu.memory_space<vmem>>, vector<1x8x256xf32>
    %414 = vector.shape_cast %413 : vector<1x8x256xf32> to vector<8x256xf32>
    %415 = vector.shape_cast %111 : vector<8x256xf32> to vector<1x8x256xf32>
    tpu.vector_store %arg10[%c0_255, %c8_256, %c0_257], %415 {strides = array<i32>} : memref<1x32x256xf32, #tpu.memory_space<vmem>>, vector<1x8x256xf32>,
    %c0_258 = arith.constant 0 : index
    %c16_259 = arith.constant 16 : index
    %c0_260 = arith.constant 0 : index
    %416 = vector.load %arg10[%c0_258, %c16_259, %c0_260] : memref<1x32x256xf32, #tpu.memory_space<vmem>>, vector<1x8x256xf32>
    %417 = vector.shape_cast %416 : vector<1x8x256xf32> to vector<8x256xf32>
    %418 = vector.shape_cast %342 : vector<8x256xf32> to vector<1x8x256xf32>
    tpu.vector_store %arg10[%c0_258, %c16_259, %c0_260], %418 {strides = array<i32>} : memref<1x32x256xf32, #tpu.memory_space<vmem>>, vector<1x8x256xf32>,
    %c0_261 = arith.constant 0 : index
    %c24_262 = arith.constant 24 : index
    %c0_263 = arith.constant 0 : index
    %419 = vector.load %arg10[%c0_261, %c24_262, %c0_263] : memref<1x32x256xf32, #tpu.memory_space<vmem>>, vector<1x8x256xf32>
    %420 = vector.shape_cast %419 : vector<1x8x256xf32> to vector<8x256xf32>
    %421 = vector.shape_cast %409 : vector<8x256xf32> to vector<1x8x256xf32>
    tpu.vector_store %arg10[%c0_261, %c24_262, %c0_263], %421 {strides = array<i32>} : memref<1x32x256xf32, #tpu.memory_space<vmem>>, vector<1x8x256xf32>,
    return
  }
  func.func @transform_0(%arg0: i32) -> (i32, i32, i32) {
    %c0_i32 = arith.constant 0 : i32
    %c0_i32_0 = arith.constant 0 : i32
    %c0_i32_1 = arith.constant 0 : i32
    return %arg0, %c0_i32, %c0_i32_0 : i32, i32, i32
  }
  func.func @transform_1(%arg0: i32) -> (i32, i32) {
    %c0_i32 = arith.constant 0 : i32
    %c0_i32_0 = arith.constant 0 : i32
    %c0_i32_1 = arith.constant 0 : i32
    return %c0_i32, %c0_i32_0 : i32, i32
  }
  func.func @transform_2(%arg0: i32) -> (i32, i32) {
    %c0_i32 = arith.constant 0 : i32
    %c0_i32_0 = arith.constant 0 : i32
    %c0_i32_1 = arith.constant 0 : i32
    return %c0_i32, %c0_i32_0 : i32, i32
  }
  func.func @transform_3(%arg0: i32) -> (i32, i32) {
    %c0_i32 = arith.constant 0 : i32
    %c0_i32_0 = arith.constant 0 : i32
    %c0_i32_1 = arith.constant 0 : i32
    return %c0_i32, %c0_i32_0 : i32, i32
  }
  func.func @transform_4(%arg0: i32) -> (i32, i32) {
    %c0_i32 = arith.constant 0 : i32
    %c0_i32_0 = arith.constant 0 : i32
    %c0_i32_1 = arith.constant 0 : i32
    return %c0_i32, %c0_i32_0 : i32, i32
  }
  func.func @transform_5(%arg0: i32) -> (i32, i32) {
    %c0_i32 = arith.constant 0 : i32
    %c0_i32_0 = arith.constant 0 : i32
    %c0_i32_1 = arith.constant 0 : i32
    return %c0_i32, %c0_i32_0 : i32, i32
  }
  func.func @transform_6(%arg0: i32) -> (i32, i32) {
    %c0_i32 = arith.constant 0 : i32
    %c0_i32_0 = arith.constant 0 : i32
    %c0_i32_1 = arith.constant 0 : i32
    return %c0_i32, %c0_i32_0 : i32, i32
  }
  func.func @transform_7(%arg0: i32) -> (i32, i32) {
    %c0_i32 = arith.constant 0 : i32
    %c0_i32_0 = arith.constant 0 : i32
    %c0_i32_1 = arith.constant 0 : i32
    return %c0_i32, %c0_i32_0 : i32, i32
  }
  func.func @transform_8(%arg0: i32) -> (i32, i32) {
    %c0_i32 = arith.constant 0 : i32
    %c0_i32_0 = arith.constant 0 : i32
    %c0_i32_1 = arith.constant 0 : i32
    return %c0_i32, %c0_i32_0 : i32, i32
  }
  func.func @transform_9(%arg0: i32) -> (i32, i32, i32) {
    %c0_i32 = arith.constant 0 : i32
    %c0_i32_0 = arith.constant 0 : i32
    %c0_i32_1 = arith.constant 0 : i32
    return %arg0, %c0_i32, %c0_i32_0 : i32, i32, i32
  }
}

</mosaic_0001>

<llo_original>
// kernel: inception_forward.1
$region0: #{inception_forward.1}
  #allocation0 [shape = 'u32[]', space=smem, size = 0x4, offset = 0x4, fixed_abs, tag = 'smem constant byte address 0x4 - core index']
  #allocation1 [shape = 'u32[144,128]{1,0:T(1,128)}', space=vmem, size = 0x12000, scoped, tag = 'internal scratch']
  #allocation2 [shape = 'f32[6,290]{1,0:T(8,128)}', space=vmem, size = 0x3000, scoped, tag = 'scratch operand']
  #allocation3 [shape = 'f32[4,324]{1,0:T(4,128)}', space=vmem, size = 0x1800, scoped, tag = 'scratch operand']
  #allocation4 [shape = 'f32[4,290]{1,0:T(4,128)}', space=vmem, size = 0x1800, scoped, tag = 'scratch operand']
  %s0 = inlined_call_operand.vmem [shape: f32[2,4,256], index: 0, kind: input, shape index: {}]
  %s1 = inlined_call_operand.vmem [shape: f32[18,4], index: 1, kind: input, shape index: {}]
  %s2 = inlined_call_operand.vmem [shape: f32[18,1], index: 2, kind: input, shape index: {}]
  %s3 = inlined_call_operand.vmem [shape: f32[72,6], index: 3, kind: input, shape index: {}]
  %s4 = inlined_call_operand.vmem [shape: f32[8,1], index: 4, kind: input, shape index: {}]
  %s5 = inlined_call_operand.vmem [shape: f32[200,4], index: 5, kind: input, shape index: {}]
  %s6 = inlined_call_operand.vmem [shape: f32[8,1], index: 6, kind: input, shape index: {}]
  %s7 = inlined_call_operand.vmem [shape: f32[8,4], index: 7, kind: input, shape index: {}]
  %s8 = inlined_call_operand.vmem [shape: f32[8,1], index: 8, kind: input, shape index: {}]
  %s9 = inlined_call_operand.vmem [shape: f32[2,32,256], index: 9, kind: output, shape index: {}]
  %s10 = sld [smem:[#allocation0]]
  $region69: #{inception_forward.1} parent=0
    _
  %s12 = ssub.s32 1, %s10
  %s13 = scalar_select 0, %s12, %s10
  loop: start=0, step=1, limit=4
  $region2: #{inception_forward.1} parent=0 // loop_pre_header
    _
  $region3: #{inception_forward.1} parent=0 // loop_header
    %s15 = sphi 0, %s19
    %p16 = scmp.ge.s32.totalorder %s15, 4
    %s25 = sphi 0, %s27
    %s28 = sphi 0, %s25
    %s29 = sphi 0, %s28
    %s45 = sphi 0, %s29
    %s49 = sphi 0, %s49
    %s51 = sphi 0, %s49
    %s52 = sphi 0, %s51
    %s66 = sphi 0, %s52
    %s70 = sphi 0, %s70
    %s72 = sphi 0, %s70
    %s73 = sphi 0, %s72
    %s87 = sphi 0, %s73
    %s91 = sphi 0, %s91
    %s93 = sphi 0, %s91
    %s94 = sphi 0, %s93
    %s108 = sphi 0, %s94
    %s112 = sphi 0, %s112
    %s114 = sphi 0, %s112
    %s115 = sphi 0, %s114
    %s129 = sphi 0, %s115
    %s133 = sphi 0, %s133
    %s135 = sphi 0, %s133
    %s136 = sphi 0, %s135
    %s150 = sphi 0, %s136
    %s154 = sphi 0, %s154
    %s156 = sphi 0, %s154
    %s157 = sphi 0, %s156
    %s171 = sphi 0, %s157
    %s175 = sphi 0, %s175
    %s177 = sphi 0, %s175
    %s178 = sphi 0, %s177
    %s192 = sphi 0, %s178
    %s196 = sphi 0, %s196
    %s198 = sphi 0, %s196
    %s199 = sphi 0, %s198
    %s213 = sphi 0, %s199
    %s219 = sphi 0, %s221
    %s222 = sphi 0, %s219
    %s223 = sphi 0, %s222
    %s239 = sphi 0, %s223
  $region4: #{inception_forward.1} parent=0 // loop_header_branch
    %18 = sbr.rel (%p16) target = $region8
  $region5: #{inception_forward.1} parent=0 // loop_body
    %s20 = ssub.s32 %s15, 1
    %s21 = ssub.s32 %s15, 2
    %s22 = sadd.s32 %s15, 1
    %s23 = ssub.s32 %s15, %s22
    %p24 = scmp.eq.s32.totalorder %s23, 0
    %s26 = sadd.s32 %s25, 1
    %s27 = scalar_select %p24, %s25, %s26
    %p30 = pneg %p24
    %p31 = scmp.eq.s32.totalorder %s15, 1
    %p32 = por %p30, %p31
    %p33 = scmp.ne.s32.totalorder %s25, %s28
    %p34 = scmp.eq.s32.totalorder %s15, 0
    %p35 = por %p33, %p34
    %p36 = scmp.ne.s32.totalorder %s25, %s28
    %p37 = scmp.eq.s32.totalorder %s20, 1
    %p38 = por %p36, %p37
    %p39 = scmp.ne.s32.totalorder %s28, %s29
    %p40 = scmp.eq.s32.totalorder %s20, 0
    %p41 = por %p39, %p40
    %p42 = scmp.ne.s32.totalorder %s28, %s29
    %p43 = scmp.eq.s32.totalorder %s21, 1
    %p44 = por %p42, %p43
    %p46 = scmp.ne.s32.totalorder %s29, %s45
    %p47 = scmp.eq.s32.totalorder %s21, 0
    %p48 = por %p46, %p47
    %s50 = sadd.s32 %s49, 1
    %p53 = scmp.eq.s32.totalorder %s15, 1
    %p54 = scmp.ne.s32.totalorder %s49, %s51
    %p55 = scmp.eq.s32.totalorder %s15, 0
    %p56 = por %p54, %p55
    %p57 = scmp.ne.s32.totalorder %s49, %s51
    %p58 = scmp.eq.s32.totalorder %s20, 1
    %p59 = por %p57, %p58
    %p60 = scmp.ne.s32.totalorder %s51, %s52
    %p61 = scmp.eq.s32.totalorder %s20, 0
    %p62 = por %p60, %p61
    %p63 = scmp.ne.s32.totalorder %s51, %s52
    %p64 = scmp.eq.s32.totalorder %s21, 1
    %p65 = por %p63, %p64
    %p67 = scmp.ne.s32.totalorder %s52, %s66
    %p68 = scmp.eq.s32.totalorder %s21, 0
    %p69 = por %p67, %p68
    %s71 = sadd.s32 %s70, 1
    %p74 = scmp.eq.s32.totalorder %s15, 1
    %p75 = scmp.ne.s32.totalorder %s70, %s72
    %p76 = scmp.eq.s32.totalorder %s15, 0
    %p77 = por %p75, %p76
    %p78 = scmp.ne.s32.totalorder %s70, %s72
    %p79 = scmp.eq.s32.totalorder %s20, 1
    %p80 = por %p78, %p79
    %p81 = scmp.ne.s32.totalorder %s72, %s73
    %p82 = scmp.eq.s32.totalorder %s20, 0
    %p83 = por %p81, %p82
    %p84 = scmp.ne.s32.totalorder %s72, %s73
    %p85 = scmp.eq.s32.totalorder %s21, 1
    %p86 = por %p84, %p85
    %p88 = scmp.ne.s32.totalorder %s73, %s87
    %p89 = scmp.eq.s32.totalorder %s21, 0
    %p90 = por %p88, %p89
    %s92 = sadd.s32 %s91, 1
    %p95 = scmp.eq.s32.totalorder %s15, 1
    %p96 = scmp.ne.s32.totalorder %s91, %s93
    %p97 = scmp.eq.s32.totalorder %s15, 0
    %p98 = por %p96, %p97
    %p99 = scmp.ne.s32.totalorder %s91, %s93
    %p100 = scmp.eq.s32.totalorder %s20, 1
    %p101 = por %p99, %p100
    %p102 = scmp.ne.s32.totalorder %s93, %s94
    %p103 = scmp.eq.s32.totalorder %s20, 0
    %p104 = por %p102, %p103
    %p105 = scmp.ne.s32.totalorder %s93, %s94
    %p106 = scmp.eq.s32.totalorder %s21, 1
    %p107 = por %p105, %p106
    %p109 = scmp.ne.s32.totalorder %s94, %s108
    %p110 = scmp.eq.s32.totalorder %s21, 0
    %p111 = por %p109, %p110
    %s113 = sadd.s32 %s112, 1
    %p116 = scmp.eq.s32.totalorder %s15, 1
    %p117 = scmp.ne.s32.totalorder %s112, %s114
    %p118 = scmp.eq.s32.totalorder %s15, 0
    %p119 = por %p117, %p118
    %p120 = scmp.ne.s32.totalorder %s112, %s114
    %p121 = scmp.eq.s32.totalorder %s20, 1
    %p122 = por %p120, %p121
    %p123 = scmp.ne.s32.totalorder %s114, %s115
    %p124 = scmp.eq.s32.totalorder %s20, 0
    %p125 = por %p123, %p124
    %p126 = scmp.ne.s32.totalorder %s114, %s115
    %p127 = scmp.eq.s32.totalorder %s21, 1
    %p128 = por %p126, %p127
    %p130 = scmp.ne.s32.totalorder %s115, %s129
    %p131 = scmp.eq.s32.totalorder %s21, 0
    %p132 = por %p130, %p131
    %s134 = sadd.s32 %s133, 1
    %p137 = scmp.eq.s32.totalorder %s15, 1
    %p138 = scmp.ne.s32.totalorder %s133, %s135
    %p139 = scmp.eq.s32.totalorder %s15, 0
    %p140 = por %p138, %p139
    %p141 = scmp.ne.s32.totalorder %s133, %s135
    %p142 = scmp.eq.s32.totalorder %s20, 1
    %p143 = por %p141, %p142
    %p144 = scmp.ne.s32.totalorder %s135, %s136
    %p145 = scmp.eq.s32.totalorder %s20, 0
    %p146 = por %p144, %p145
    %p147 = scmp.ne.s32.totalorder %s135, %s136
    %p148 = scmp.eq.s32.totalorder %s21, 1
    %p149 = por %p147, %p148
    %p151 = scmp.ne.s32.totalorder %s136, %s150
    %p152 = scmp.eq.s32.totalorder %s21, 0
    %p153 = por %p151, %p152
    %s155 = sadd.s32 %s154, 1
    %p158 = scmp.eq.s32.totalorder %s15, 1
    %p159 = scmp.ne.s32.totalorder %s154, %s156
    %p160 = scmp.eq.s32.totalorder %s15, 0
    %p161 = por %p159, %p160
    %p162 = scmp.ne.s32.totalorder %s154, %s156
    %p163 = scmp.eq.s32.totalorder %s20, 1
    %p164 = por %p162, %p163
    %p165 = scmp.ne.s32.totalorder %s156, %s157
    %p166 = scmp.eq.s32.totalorder %s20, 0
    %p167 = por %p165, %p166
    %p168 = scmp.ne.s32.totalorder %s156, %s157
    %p169 = scmp.eq.s32.totalorder %s21, 1
    %p170 = por %p168, %p169
    %p172 = scmp.ne.s32.totalorder %s157, %s171
    %p173 = scmp.eq.s32.totalorder %s21, 0
    %p174 = por %p172, %p173
    %s176 = sadd.s32 %s175, 1
    %p179 = scmp.eq.s32.totalorder %s15, 1
    %p180 = scmp.ne.s32.totalorder %s175, %s177
    %p181 = scmp.eq.s32.totalorder %s15, 0
    %p182 = por %p180, %p181
    %p183 = scmp.ne.s32.totalorder %s175, %s177
    %p184 = scmp.eq.s32.totalorder %s20, 1
    %p185 = por %p183, %p184
    %p186 = scmp.ne.s32.totalorder %s177, %s178
    %p187 = scmp.eq.s32.totalorder %s20, 0
    %p188 = por %p186, %p187
    %p189 = scmp.ne.s32.totalorder %s177, %s178
    %p190 = scmp.eq.s32.totalorder %s21, 1
    %p191 = por %p189, %p190
    %p193 = scmp.ne.s32.totalorder %s178, %s192
    %p194 = scmp.eq.s32.totalorder %s21, 0
    %p195 = por %p193, %p194
    %s197 = sadd.s32 %s196, 1
    %p200 = scmp.eq.s32.totalorder %s15, 1
    %p201 = scmp.ne.s32.totalorder %s196, %s198
    %p202 = scmp.eq.s32.totalorder %s15, 0
    %p203 = por %p201, %p202
    %p204 = scmp.ne.s32.totalorder %s196, %s198
    %p205 = scmp.eq.s32.totalorder %s20, 1
    %p206 = por %p204, %p205
    %p207 = scmp.ne.s32.totalorder %s198, %s199
    %p208 = scmp.eq.s32.totalorder %s20, 0
    %p209 = por %p207, %p208
    %p210 = scmp.ne.s32.totalorder %s198, %s199
    %p211 = scmp.eq.s32.totalorder %s21, 1
    %p212 = por %p210, %p211
    %p214 = scmp.ne.s32.totalorder %s199, %s213
    %p215 = scmp.eq.s32.totalorder %s21, 0
    %p216 = por %p214, %p215
    %s217 = ssub.s32 %s15, %s22
    %p218 = scmp.eq.s32.totalorder %s217, 0
    %s220 = sadd.s32 %s219, 1
    %s221 = scalar_select %p218, %s219, %s220
    %p224 = pneg %p218
    %p225 = scmp.eq.s32.totalorder %s15, 1
    %p226 = por %p224, %p225
    %p227 = scmp.ne.s32.totalorder %s219, %s222
    %p228 = scmp.eq.s32.totalorder %s15, 0
    %p229 = por %p227, %p228
    %p230 = scmp.ne.s32.totalorder %s219, %s222
    %p231 = scmp.eq.s32.totalorder %s20, 1
    %p232 = por %p230, %p231
    %p233 = scmp.ne.s32.totalorder %s222, %s223
    %p234 = scmp.eq.s32.totalorder %s20, 0
    %p235 = por %p233, %p234
    %p236 = scmp.ne.s32.totalorder %s222, %s223
    %p237 = scmp.eq.s32.totalorder %s21, 1
    %p238 = por %p236, %p237
    %p240 = scmp.ne.s32.totalorder %s223, %s239
    %p241 = scmp.eq.s32.totalorder %s21, 0
    %p242 = por %p240, %p241
    %p243 = scmp.le.s32.totalorder 1, %s15
    %p244 = scmp.lt.s32.totalorder %s15, 3
    %p245 = pnand %p243, %p244
    %p246 = pneg %p245
    // Predicated region
    $region9: #{inception_forward.1} parent=5 // pred_check
      _
    $region10: #{inception_forward.1} parent=5 // pred_check_branch
      %248 = sbr.rel (%p245) target = $region12
    $region11: #{inception_forward.1} parent=5 // pred_region
      %s249 = ssub.s32 %s15, 1
      // Predicated region
      $region13: #{inception_forward.1} parent=11 // pred_check
        %p250 = pneg %p62
      $region14: #{inception_forward.1} parent=11 // pred_check_branch
        %252 = sbr.rel (%p250) target = $region16
      $region15: #{inception_forward.1} parent=11 // pred_region
        _
      $region16: #{inception_forward.1} parent=11 // pred_fallthru
        _
      // Predicated region
      $region17: #{inception_forward.1} parent=11 // pred_check
        %p253 = pneg %p83
      $region18: #{inception_forward.1} parent=11 // pred_check_branch
        %255 = sbr.rel (%p253) target = $region20
      $region19: #{inception_forward.1} parent=11 // pred_region
        _
      $region20: #{inception_forward.1} parent=11 // pred_fallthru
        _
      // Predicated region
      $region21: #{inception_forward.1} parent=11 // pred_check
        %p256 = pneg %p104
      $region22: #{inception_forward.1} parent=11 // pred_check_branch
        %258 = sbr.rel (%p256) target = $region24
      $region23: #{inception_forward.1} parent=11 // pred_region
        _
      $region24: #{inception_forward.1} parent=11 // pred_fallthru
        _
      // Predicated region
      $region25: #{inception_forward.1} parent=11 // pred_check
        %p259 = pneg %p125
      $region26: #{inception_forward.1} parent=11 // pred_check_branch
        %261 = sbr.rel (%p259) target = $region28
      $region27: #{inception_forward.1} parent=11 // pred_region
        _
      $region28: #{inception_forward.1} parent=11 // pred_fallthru
        _
      // Predicated region
      $region29: #{inception_forward.1} parent=11 // pred_check
        %p262 = pneg %p146
      $region30: #{inception_forward.1} parent=11 // pred_check_branch
        %264 = sbr.rel (%p262) target = $region32
      $region31: #{inception_forward.1} parent=11 // pred_region
        _
      $region32: #{inception_forward.1} parent=11 // pred_fallthru
        _
      // Predicated region
      $region33: #{inception_forward.1} parent=11 // pred_check
        %p265 = pneg %p167
      $region34: #{inception_forward.1} parent=11 // pred_check_branch
        %267 = sbr.rel (%p265) target = $region36
      $region35: #{inception_forward.1} parent=11 // pred_region
        _
      $region36: #{inception_forward.1} parent=11 // pred_fallthru
        _
      // Predicated region
      $region37: #{inception_forward.1} parent=11 // pred_check
        %p268 = pneg %p188
      $region38: #{inception_forward.1} parent=11 // pred_check_branch
        %270 = sbr.rel (%p268) target = $region40
      $region39: #{inception_forward.1} parent=11 // pred_region
        _
      $region40: #{inception_forward.1} parent=11 // pred_fallthru
        _
      // Predicated region
      $region41: #{inception_forward.1} parent=11 // pred_check
        %p271 = pneg %p209
      $region42: #{inception_forward.1} parent=11 // pred_check_branch
        %273 = sbr.rel (%p271) target = $region44
      $region43: #{inception_forward.1} parent=11 // pred_region
        _
      $region44: #{inception_forward.1} parent=11 // pred_fallthru
        _
    $region12: #{inception_forward.1} parent=5 // pred_fallthru
      _
    %p274 = scmp.lt.s32.totalorder %s15, 2
    // Predicated region
    $region45: #{inception_forward.1} parent=5 // pred_check
      %p275 = pneg %p274
    $region46: #{inception_forward.1} parent=5 // pred_check_branch
      %277 = sbr.rel (%p275) target = $region48
    $region47: #{inception_forward.1} parent=5 // pred_region
      // Predicated region
      $region49: #{inception_forward.1} parent=47 // pred_check
        %p278 = pneg %p35
      $region50: #{inception_forward.1} parent=47 // pred_check_branch
        %280 = sbr.rel (%p278) target = $region52
      $region51: #{inception_forward.1} parent=47 // pred_region
        %p281 = scmp.lt.s32.totalorder %s15, 1
        %s282 = scalar_select %p281, %s15, 1
        %s283 = smul.addr %s282, 2
        %s284 = smul.addr %s283, 4
        %s285 = scalar_lea.vmem %s0, %s284
      $region52: #{inception_forward.1} parent=47 // pred_fallthru
        _
    $region48: #{inception_forward.1} parent=5 // pred_fallthru
      _
    %p286 = scmp.le.s32.totalorder 1, %s15
    %p287 = scmp.lt.s32.totalorder %s15, 3
    %p288 = pnand %p286, %p287
    %p289 = pneg %p288
    // Predicated region
    $region53: #{inception_forward.1} parent=5 // pred_check
      _
    $region54: #{inception_forward.1} parent=5 // pred_check_branch
      %291 = sbr.rel (%p288) target = $region56
    $region55: #{inception_forward.1} parent=5 // pred_region
      %s292 = ssub.s32 %s15, 1
      %p293 = scmp.lt.s32.totalorder %s20, 1
      %s294 = scalar_select %p293, %s20, 1
      %s295 = smul.addr %s294, 2
      %s296 = smul.addr %s295, 4
      %s297 = scalar_lea.vmem %s0, %s296
      %p298 = pneg %p41
      %p299 = pneg %p38
      %p300 = pneg %p62
      %p301 = pneg %p59
      %p302 = pneg %p83
      %p303 = pneg %p80
      %p304 = pneg %p104
      %p305 = pneg %p101
      %p306 = pneg %p125
      %p307 = pneg %p122
      %p308 = pneg %p146
      %p309 = pneg %p143
      %p310 = pneg %p167
      %p311 = pneg %p164
      %p312 = pneg %p188
      %p313 = pneg %p185
      %p314 = pneg %p209
      %p315 = pneg %p206
      %p316 = pneg %p235
      %p317 = pneg %p232
      %p318 = scmp.lt.s32.totalorder %s20, 1
      %s319 = scalar_select %p318, %s20, 1
      %s320 = smul.addr %s319, 8
      %s321 = smul.addr %s320, 8
      %s322 = scalar_lea.vmem %s9, %s321
      %p323 = scmp.lt.s32.totalorder %s20, 1
      %s324 = scalar_select %p323, %s20, 1
      %s325 = smul.addr %s324, 2
      %s326 = smul.addr %s325, 4
      %s327 = scalar_lea.vmem %s0, %s326
      %p328 = scmp.lt.s32.totalorder %s20, 1
      %s329 = scalar_select %p328, %s20, 1
      %s330 = smul.addr %s329, 8
      %s331 = smul.addr %s330, 8
      %s332 = scalar_lea.vmem %s9, %s331
      %v333 = vld [vmem:[%s327] sm:$0xff]
      %v334 = vlaneseq
      %v335 = vand.u32 %v334, 127
      %v336 = vadd.s32 %v335, 128
      %vm337 = vcmp.lt.s32.totalorder %v335, 0
      %v338 = vsub.s32 0, %v335
      %v339 = vsel %vm337, %v338, %v335
      %v340 = vshrl.u32 %v339, 4
      %v341 = vand.u32 %v339, 15
      %v342 = vsub.s32 0, %v341
      %v343 = vsel %vm337, %v342, %v341
      %vm344 = vcmp.lt.s32.totalorder %v336, 0
      %v345 = vsub.s32 0, %v336
      %v346 = vsel %vm344, %v345, %v336
      %v347 = vshrl.u32 %v346, 4
      %v348 = vand.u32 %v346, 15
      %v349 = vsub.s32 0, %v348
      %v350 = vsel %vm344, %v349, %v348
      %vm351 = vcmp.ne.s32.totalorder %v343, 0
      %vm352 = vcmp.ne.s32.totalorder %v350, 0
      %vm353 = vcmp.lt.s32.totalorder %v343, 0
      %vm354 = vcmp.lt.s32.totalorder %v350, 0
      %vm355 = vmand %vm353, %vm351
      %vm356 = vmand %vm354, %vm352
      %v357 = vadd.s32 %v343, 16
      %v358 = vadd.s32 %v350, 16
      %v359 = vsel %vm355, %v357, %v343
      %v360 = vsel %vm356, %v358, %v350
      %v361 = vld [vmem:[%s1] sm:$0xff]
      %v362 = vld [vmem:[%s1 + $0x8] sm:$0xff]
      %v363 = vld [vmem:[%s1 + $0x10] sm:$0x3]
      %v364 = vld [vmem:[%s2] sm:$0xff]
      %v365 = vld [vmem:[%s2 + $0x8] sm:$0xff]
      %v366 = vld [vmem:[%s2 + $0x10] sm:$0x3]
      %368 = vset.pattern.permute.xlu0 0
      %369 = vperm.xlu0 %368, %v364
      %v370 = vpop.permute.xlu0 %369
      %373 = vset.pattern.permute.xlu0 0
      %374 = vperm.xlu0 %373, %v365
      %v375 = vpop.permute.xlu0 %374
      %378 = vset.pattern.permute.xlu0 0
      %379 = vperm.xlu0 %378, %v366
      %v380 = vpop.permute.xlu0 %379
      %v383 = vcombine.high %v333, %v333
      %vm384 = vcmask 31744
      %v386 = vsel %vm384, %v361, 0
      %v389 = vsel %vm384, %v362, 0
      %v392 = vsel %vm384, %v363, 0
      %vm394 = vcmask 1043456
      %v395 = vsel %vm394, %v333, 0
      %v397 = vsel %vm394, %v383, 0
      %399 = vmatprep.subr.mxu0 %v397
      %400 = vmatpush1.msra.mxu0 %v395
      %401 = vmatprep.subr.mxu0 0.0
      %402 = vmatpush1.msra.mxu0 0.0
      %403 = vmatprep.subr.mxu0 0.0
      %404 = vmatpush1.msra.mxu0 0.0
      %405 = vmatprep.subr.mxu0 0.0
      %406 = vmatpush1.msra.mxu0 0.0
      %407 = vmatprep.subr.mxu0 0.0
      %408 = vmatpush1.msra.mxu0 0.0
      %409 = vmatprep.subr.mxu0 0.0
      %410 = vmatpush1.msra.mxu0 0.0
      %411 = vmatprep.subr.mxu0 0.0
      %412 = vmatpush1.msra.mxu0 0.0
      %413 = vmatprep.subr.mxu0 0.0
      %414 = vmatpush1.msra.mxu0 0.0
      %415 = vmatprep.subr.mxu0 0.0
      %416 = vmatpush1.msra.mxu0 0.0
      %417 = vmatprep.subr.mxu0 0.0
      %418 = vmatpush1.msra.mxu0 0.0
      %419 = vmatprep.subr.mxu0 0.0
      %420 = vmatpush1.msra.mxu0 0.0
      %421 = vmatprep.subr.mxu0 0.0
      %422 = vmatpush1.msra.mxu0 0.0
      %423 = vmatprep.subr.mxu0 0.0
      %424 = vmatpush1.msra.mxu0 0.0
      %425 = vmatprep.subr.mxu0 0.0
      %426 = vmatpush1.msra.mxu0 0.0
      %427 = vmatprep.subr.mxu0 0.0
      %428 = vmatpush1.msra.mxu0 0.0
      %429 = vmatprep.subr.mxu0 0.0
      %430 = vmatpush1.msra.mxu0 0.0
      %431 = vmatprep.subr.mxu0 0.0
      %432 = vmatpush1.msra.mxu0 0.0
      %433 = vmatprep.subr.mxu0 0.0
      %434 = vmatpush1.msra.mxu0 0.0
      %435 = vmatprep.subr.mxu0 0.0
      %436 = vmatpush1.msra.mxu0 0.0
      %437 = vmatprep.subr.mxu0 0.0
      %438 = vmatpush1.msra.mxu0 0.0
      %439 = vmatprep.subr.mxu0 0.0
      %440 = vmatpush1.msra.mxu0 0.0
      %441 = vmatprep.subr.mxu0 0.0
      %442 = vmatpush1.msra.mxu0 0.0
      %443 = vmatprep.subr.mxu0 0.0
      %444 = vmatpush1.msra.mxu0 0.0
      %445 = vmatprep.subr.mxu0 0.0
      %446 = vmatpush1.msra.mxu0 0.0
      %447 = vmatprep.subr.mxu0 0.0
      %448 = vmatpush1.msra.mxu0 0.0
      %449 = vmatprep.subr.mxu0 0.0
      %450 = vmatpush1.msra.mxu0 0.0
      %451 = vmatprep.subr.mxu0 0.0
      %452 = vmatpush1.msra.mxu0 0.0
      %453 = vmatprep.subr.mxu0 0.0
      %454 = vmatpush1.msra.mxu0 0.0
      %455 = vmatprep.subr.mxu0 0.0
      %456 = vmatpush1.msra.mxu0 0.0
      %457 = vmatprep.subr.mxu0 0.0
      %458 = vmatpush1.msra.mxu0 0.0
      %459 = vmatprep.subr.mxu0 0.0
      %460 = vmatpush1.msra.mxu0 0.0
      %461 = vmatprep.subr.mxu0 0.0
      %462 = vmatpush1.msra.mxu0 0.0
      %463 = vmatprep.mubr.f32.mxu0 0.0
      %464 = vmatmul.mubr.f32.gmra.mrb[0].mxu0 %v386
      %v465 = vpop.f32.mrb[0].mxu0
      %v466 = vadd.f32 %v370, %v465
      %v467 = vpop.f32.mrb[0].mxu0
      %v468 = vadd.f32 %v370, %v467
      %469 = vmatprep.mubr.f32.mxu0 0.0
      %470 = vmatmul.mubr.f32.gmra.mrb[0].mxu0 %v389
      %v471 = vpop.f32.mrb[0].mxu0
      %v472 = vadd.f32 %v375, %v471
      %v473 = vpop.f32.mrb[0].mxu0
      %v474 = vadd.f32 %v375, %v473
      %475 = vmatprep.mubr.f32.mxu0 0.0
      %476 = vmatmul.mubr.f32.gmra.mrb[0].mxu0 %v392
      %v477 = vpop.f32.mrb[0].mxu0
      %v478 = vadd.f32 %v380, %v477
      %v479 = vpop.f32.mrb[0].mxu0
      %v480 = vadd.f32 %v380, %v479
      %481 = vdwg.mxu0
      %v482 = vmax.f32 %v466, 0.0
      %v483 = vmax.f32 %v468, 0.0
      %v484 = vmax.f32 %v472, 0.0
      %v485 = vmax.f32 %v474, 0.0
      %v486 = vmax.f32 %v478, 0.0
      %v487 = vmax.f32 %v480, 0.0
      %vm488 = vcmask 136192
      %489 = vst.msk [vmem:[#allocation2] sm:$0x3f] %vm488, 0.0
      %vm490 = vcmask 275592
      %491 = vst.msk [vmem:[#allocation2 + $0x10] sm:$0x3f] %vm490, 0.0
      %494 = vrot.lane.b32.xlu0 %v484, 17
      %v495 = vpop.permute.xlu0 %494
      %496 = vrot.lane.b32.xlu0 %v485, 17
      %v497 = vpop.permute.xlu0 %496
      %vm498 = vcmask 138240
      %v499 = vsel %vm498, %v495, %v497
      %vm503 = vcmask 1045640
      %504 = vst.msk [vmem:[#allocation2] sm:$0x3f] %vm503, %v495
      %505 = vst [vmem:[#allocation2 + $0x8] sm:$0x3f] %v499
      %506 = vst.msk [vmem:[#allocation2 + $0x10] sm:$0x3f] %vm488, %v497
      %v507 = vld [vmem:[#allocation2] sm:$0x3f]
      %v508 = vld [vmem:[#allocation2 + $0x8] sm:$0x3f]
      %vm509 = vcmp.ge.s32.totalorder %v359, 1
      %vm510 = vcmp.ge.s32.totalorder %v360, 1
      %v511 = vsel %vm509, 1, 0
      %v512 = vsel %vm510, 1, 0
      %vm513 = vcmp.eq.s32.totalorder %v511, 1
      %vm514 = vcmp.eq.s32.totalorder %v512, 1
      %v515 = vsel %vm513, %v507, 0.0
      %v516 = vsel %vm514, %v508, 0.0
      %v517 = vld [vmem:[%s3] sm:$0xff]
      %v518 = vld [vmem:[#allocation2 + $0x10] sm:$0x3f]
      %v519 = vld [vmem:[%s3 + $0x8] sm:$0xff]
      %523 = vrot.lane.b32.xlu0 %v507, 127
      %v524 = vpop.permute.xlu0 %523
      %525 = vrot.lane.b32.xlu0 %v508, 127
      %v526 = vpop.permute.xlu0 %525
      %527 = vrot.lane.b32.xlu0 %v518, 127
      %v528 = vpop.permute.xlu0 %527
      %vm529 = vcmask 1039360
      %v530 = vsel %vm529, %v524, %v526
      %v531 = vsel %vm529, %v526, %v528
      %vm532 = vcmask 48128
      %v534 = vsel %vm532, %v519, 0
      %vm536 = vcmask 1045504
      %v537 = vsel %vm536, %v530, 0
      %v539 = vsel %vm536, %v531, 0
      %541 = vmatprep.subr.mxu0 %v539
      %542 = vmatpush1.msra.mxu0 %v537
      %543 = vmatprep.subr.mxu0 0.0
      %544 = vmatpush1.msra.mxu0 0.0
      %545 = vmatprep.subr.mxu0 0.0
      %546 = vmatpush1.msra.mxu0 0.0
      %547 = vmatprep.subr.mxu0 0.0
      %548 = vmatpush1.msra.mxu0 0.0
      %549 = vmatprep.subr.mxu0 0.0
      %550 = vmatpush1.msra.mxu0 0.0
      %551 = vmatprep.subr.mxu0 0.0
      %552 = vmatpush1.msra.mxu0 0.0
      %553 = vmatprep.subr.mxu0 0.0
      %554 = vmatpush1.msra.mxu0 0.0
      %555 = vmatprep.subr.mxu0 0.0
      %556 = vmatpush1.msra.mxu0 0.0
      %557 = vmatprep.subr.mxu0 0.0
      %558 = vmatpush1.msra.mxu0 0.0
      %559 = vmatprep.subr.mxu0 0.0
      %560 = vmatpush1.msra.mxu0 0.0
      %561 = vmatprep.subr.mxu0 0.0
      %562 = vmatpush1.msra.mxu0 0.0
      %563 = vmatprep.subr.mxu0 0.0
      %564 = vmatpush1.msra.mxu0 0.0
      %565 = vmatprep.subr.mxu0 0.0
      %566 = vmatpush1.msra.mxu0 0.0
      %567 = vmatprep.subr.mxu0 0.0
      %568 = vmatpush1.msra.mxu0 0.0
      %569 = vmatprep.subr.mxu0 0.0
      %570 = vmatpush1.msra.mxu0 0.0
      %571 = vmatprep.subr.mxu0 0.0
      %572 = vmatpush1.msra.mxu0 0.0
      %573 = vmatprep.subr.mxu0 0.0
      %574 = vmatpush1.msra.mxu0 0.0
      %575 = vmatprep.subr.mxu0 0.0
      %576 = vmatpush1.msra.mxu0 0.0
      %577 = vmatprep.subr.mxu0 0.0
      %578 = vmatpush1.msra.mxu0 0.0
      %579 = vmatprep.subr.mxu0 0.0
      %580 = vmatpush1.msra.mxu0 0.0
      %581 = vmatprep.subr.mxu0 0.0
      %582 = vmatpush1.msra.mxu0 0.0
      %583 = vmatprep.subr.mxu0 0.0
      %584 = vmatpush1.msra.mxu0 0.0
      %585 = vmatprep.subr.mxu0 0.0
      %586 = vmatpush1.msra.mxu0 0.0
      %587 = vmatprep.subr.mxu0 0.0
      %588 = vmatpush1.msra.mxu0 0.0
      %589 = vmatprep.subr.mxu0 0.0
      %590 = vmatpush1.msra.mxu0 0.0
      %591 = vmatprep.subr.mxu0 0.0
      %592 = vmatpush1.msra.mxu0 0.0
      %593 = vmatprep.subr.mxu0 0.0
      %594 = vmatpush1.msra.mxu0 0.0
      %595 = vmatprep.subr.mxu0 0.0
      %596 = vmatpush1.msra.mxu0 0.0
      %597 = vmatprep.subr.mxu0 0.0
      %598 = vmatpush1.msra.mxu0 0.0
      %599 = vmatprep.subr.mxu0 0.0
      %600 = vmatpush1.msra.mxu0 0.0
      %601 = vmatprep.subr.mxu0 0.0
      %602 = vmatpush1.msra.mxu0 0.0
      %603 = vmatprep.subr.mxu0 0.0
      %604 = vmatpush1.msra.mxu0 0.0
      %605 = vmatprep.mubr.f32.mxu0 0.0
      %606 = vmatmul.mubr.f32.gmra.mrb[0].mxu0 %v534
      %v607 = vpop.f32.mrb[0].mxu0
      %v608 = vadd.f32 0.0, %v607
      %v609 = vpop.f32.mrb[0].mxu0
      %v610 = vadd.f32 0.0, %v609
      %611 = vdwg.mxu0
      %v613 = vsel %vm532, %v517, 0
      %v616 = vsel %vm536, %v515, 0
      %v619 = vsel %vm536, %v516, 0
      %621 = vmatprep.subr.mxu0 %v619
      %622 = vmatpush1.msra.mxu0 %v616
      %623 = vmatprep.subr.mxu0 0.0
      %624 = vmatpush1.msra.mxu0 0.0
      %625 = vmatprep.subr.mxu0 0.0
      %626 = vmatpush1.msra.mxu0 0.0
      %627 = vmatprep.subr.mxu0 0.0
      %628 = vmatpush1.msra.mxu0 0.0
      %629 = vmatprep.subr.mxu0 0.0
      %630 = vmatpush1.msra.mxu0 0.0
      %631 = vmatprep.subr.mxu0 0.0
      %632 = vmatpush1.msra.mxu0 0.0
      %633 = vmatprep.subr.mxu0 0.0
      %634 = vmatpush1.msra.mxu0 0.0
      %635 = vmatprep.subr.mxu0 0.0
      %636 = vmatpush1.msra.mxu0 0.0
      %637 = vmatprep.subr.mxu0 0.0
      %638 = vmatpush1.msra.mxu0 0.0
      %639 = vmatprep.subr.mxu0 0.0
      %640 = vmatpush1.msra.mxu0 0.0
      %641 = vmatprep.subr.mxu0 0.0
      %642 = vmatpush1.msra.mxu0 0.0
      %643 = vmatprep.subr.mxu0 0.0
      %644 = vmatpush1.msra.mxu0 0.0
      %645 = vmatprep.subr.mxu0 0.0
      %646 = vmatpush1.msra.mxu0 0.0
      %647 = vmatprep.subr.mxu0 0.0
      %648 = vmatpush1.msra.mxu0 0.0
      %649 = vmatprep.subr.mxu0 0.0
      %650 = vmatpush1.msra.mxu0 0.0
      %651 = vmatprep.subr.mxu0 0.0
      %652 = vmatpush1.msra.mxu0 0.0
      %653 = vmatprep.subr.mxu0 0.0
      %654 = vmatpush1.msra.mxu0 0.0
      %655 = vmatprep.subr.mxu0 0.0
      %656 = vmatpush1.msra.mxu0 0.0
      %657 = vmatprep.subr.mxu0 0.0
      %658 = vmatpush1.msra.mxu0 0.0
      %659 = vmatprep.subr.mxu0 0.0
      %660 = vmatpush1.msra.mxu0 0.0
      %661 = vmatprep.subr.mxu0 0.0
      %662 = vmatpush1.msra.mxu0 0.0
      %663 = vmatprep.subr.mxu0 0.0
      %664 = vmatpush1.msra.mxu0 0.0
      %665 = vmatprep.subr.mxu0 0.0
      %666 = vmatpush1.msra.mxu0 0.0
      %667 = vmatprep.subr.mxu0 0.0
      %668 = vmatpush1.msra.mxu0 0.0
      %669 = vmatprep.subr.mxu0 0.0
      %670 = vmatpush1.msra.mxu0 0.0
      %671 = vmatprep.subr.mxu0 0.0
      %672 = vmatpush1.msra.mxu0 0.0
      %673 = vmatprep.subr.mxu0 0.0
      %674 = vmatpush1.msra.mxu0 0.0
      %675 = vmatprep.subr.mxu0 0.0
      %676 = vmatpush1.msra.mxu0 0.0
      %677 = vmatprep.subr.mxu0 0.0
      %678 = vmatpush1.msra.mxu0 0.0
      %679 = vmatprep.subr.mxu0 0.0
      %680 = vmatpush1.msra.mxu0 0.0
      %681 = vmatprep.subr.mxu0 0.0
      %682 = vmatpush1.msra.mxu0 0.0
      %683 = vmatprep.subr.mxu0 0.0
      %684 = vmatpush1.msra.mxu0 0.0
      %685 = vmatprep.mubr.f32.mxu0 0.0
      %686 = vmatmul.mubr.f32.gmra.mrb[0].mxu0 %v613
      %v687 = vpop.f32.mrb[0].mxu0
      %v688 = vadd.f32 %v608, %v687
      %v689 = vpop.f32.mrb[0].mxu0
      %v690 = vadd.f32 %v610, %v689
      %691 = vdwg.mxu0
      %vm692 = vcmp.lt.s32.totalorder %v359, 15
      %vm693 = vcmp.lt.s32.totalorder %v360, 15
      %v694 = vsel %vm692, 1, 0
      %v695 = vsel %vm693, 1, 0
      %vm696 = vcmp.eq.s32.totalorder %v694, 1
      %vm697 = vcmp.eq.s32.totalorder %v695, 1
      %698 = vrot.lane.b32.xlu0 %v507, 126
      %v699 = vpop.permute.xlu0 %698
      %700 = vrot.lane.b32.xlu0 %v508, 126
      %v701 = vpop.permute.xlu0 %700
      %702 = vrot.lane.b32.xlu0 %v518, 126
      %v703 = vpop.permute.xlu0 %702
      %vm704 = vcmask 1031168
      %v705 = vsel %vm704, %v699, %v701
      %v706 = vsel %vm704, %v701, %v703
      %v709 = vsel %vm696, %v705, 0.0
      %v710 = vsel %vm697, %v706, 0.0
      %v711 = vld [vmem:[%s3 + $0x10] sm:$0xff]
      %v713 = vsel %vm532, %v711, 0
      %v716 = vsel %vm536, %v709, 0
      %v719 = vsel %vm536, %v710, 0
      %721 = vmatprep.subr.mxu0 %v719
      %722 = vmatpush1.msra.mxu0 %v716
      %723 = vmatprep.subr.mxu0 0.0
      %724 = vmatpush1.msra.mxu0 0.0
      %725 = vmatprep.subr.mxu0 0.0
      %726 = vmatpush1.msra.mxu0 0.0
      %727 = vmatprep.subr.mxu0 0.0
      %728 = vmatpush1.msra.mxu0 0.0
      %729 = vmatprep.subr.mxu0 0.0
      %730 = vmatpush1.msra.mxu0 0.0
      %731 = vmatprep.subr.mxu0 0.0
      %732 = vmatpush1.msra.mxu0 0.0
      %733 = vmatprep.subr.mxu0 0.0
      %734 = vmatpush1.msra.mxu0 0.0
      %735 = vmatprep.subr.mxu0 0.0
      %736 = vmatpush1.msra.mxu0 0.0
      %737 = vmatprep.subr.mxu0 0.0
      %738 = vmatpush1.msra.mxu0 0.0
      %739 = vmatprep.subr.mxu0 0.0
      %740 = vmatpush1.msra.mxu0 0.0
      %741 = vmatprep.subr.mxu0 0.0
      %742 = vmatpush1.msra.mxu0 0.0
      %743 = vmatprep.subr.mxu0 0.0
      %744 = vmatpush1.msra.mxu0 0.0
      %745 = vmatprep.subr.mxu0 0.0
      %746 = vmatpush1.msra.mxu0 0.0
      %747 = vmatprep.subr.mxu0 0.0
      %748 = vmatpush1.msra.mxu0 0.0
      %749 = vmatprep.subr.mxu0 0.0
      %750 = vmatpush1.msra.mxu0 0.0
      %751 = vmatprep.subr.mxu0 0.0
      %752 = vmatpush1.msra.mxu0 0.0
      %753 = vmatprep.subr.mxu0 0.0
      %754 = vmatpush1.msra.mxu0 0.0
      %755 = vmatprep.subr.mxu0 0.0
      %756 = vmatpush1.msra.mxu0 0.0
      %757 = vmatprep.subr.mxu0 0.0
      %758 = vmatpush1.msra.mxu0 0.0
      %759 = vmatprep.subr.mxu0 0.0
      %760 = vmatpush1.msra.mxu0 0.0
      %761 = vmatprep.subr.mxu0 0.0
      %762 = vmatpush1.msra.mxu0 0.0
      %763 = vmatprep.subr.mxu0 0.0
      %764 = vmatpush1.msra.mxu0 0.0
      %765 = vmatprep.subr.mxu0 0.0
      %766 = vmatpush1.msra.mxu0 0.0
      %767 = vmatprep.subr.mxu0 0.0
      %768 = vmatpush1.msra.mxu0 0.0
      %769 = vmatprep.subr.mxu0 0.0
      %770 = vmatpush1.msra.mxu0 0.0
      %771 = vmatprep.subr.mxu0 0.0
      %772 = vmatpush1.msra.mxu0 0.0
      %773 = vmatprep.subr.mxu0 0.0
      %774 = vmatpush1.msra.mxu0 0.0
      %775 = vmatprep.subr.mxu0 0.0
      %776 = vmatpush1.msra.mxu0 0.0
      %777 = vmatprep.subr.mxu0 0.0
      %778 = vmatpush1.msra.mxu0 0.0
      %779 = vmatprep.subr.mxu0 0.0
      %780 = vmatpush1.msra.mxu0 0.0
      %781 = vmatprep.subr.mxu0 0.0
      %782 = vmatpush1.msra.mxu0 0.0
      %783 = vmatprep.subr.mxu0 0.0
      %784 = vmatpush1.msra.mxu0 0.0
      %785 = vmatprep.mubr.f32.mxu0 0.0
      %786 = vmatmul.mubr.f32.gmra.mrb[0].mxu0 %v713
      %v787 = vpop.f32.mrb[0].mxu0
      %v788 = vadd.f32 0.0, %v787
      %v789 = vpop.f32.mrb[0].mxu0
      %v790 = vadd.f32 0.0, %v789
      %791 = vdwg.mxu0
      %v792 = vadd.f32 %v688, %v788
      %v793 = vadd.f32 %v690, %v790
      %794 = vrot.lane.b32.xlu0 %v507, 112
      %v795 = vpop.permute.xlu0 %794
      %796 = vrot.lane.b32.xlu0 %v508, 112
      %v797 = vpop.permute.xlu0 %796
      %798 = vrot.lane.b32.xlu0 %v518, 112
      %v799 = vpop.permute.xlu0 %798
      %vm800 = vcmask 916480
      %v801 = vsel %vm800, %v795, %v797
      %v802 = vsel %vm800, %v797, %v799
      %v805 = vsel %vm513, %v801, 0.0
      %v806 = vsel %vm514, %v802, 0.0
      %v807 = vld [vmem:[%s3 + $0x18] sm:$0xff]
      %v809 = vsel %vm532, %v807, 0
      %v812 = vsel %vm536, %v805, 0
      %v815 = vsel %vm536, %v806, 0
      %817 = vmatprep.subr.mxu0 %v815
      %818 = vmatpush1.msra.mxu0 %v812
      %819 = vmatprep.subr.mxu0 0.0
      %820 = vmatpush1.msra.mxu0 0.0
      %821 = vmatprep.subr.mxu0 0.0
      %822 = vmatpush1.msra.mxu0 0.0
      %823 = vmatprep.subr.mxu0 0.0
      %824 = vmatpush1.msra.mxu0 0.0
      %825 = vmatprep.subr.mxu0 0.0
      %826 = vmatpush1.msra.mxu0 0.0
      %827 = vmatprep.subr.mxu0 0.0
      %828 = vmatpush1.msra.mxu0 0.0
      %829 = vmatprep.subr.mxu0 0.0
      %830 = vmatpush1.msra.mxu0 0.0
      %831 = vmatprep.subr.mxu0 0.0
      %832 = vmatpush1.msra.mxu0 0.0
      %833 = vmatprep.subr.mxu0 0.0
      %834 = vmatpush1.msra.mxu0 0.0
      %835 = vmatprep.subr.mxu0 0.0
      %836 = vmatpush1.msra.mxu0 0.0
      %837 = vmatprep.subr.mxu0 0.0
      %838 = vmatpush1.msra.mxu0 0.0
      %839 = vmatprep.subr.mxu0 0.0
      %840 = vmatpush1.msra.mxu0 0.0
      %841 = vmatprep.subr.mxu0 0.0
      %842 = vmatpush1.msra.mxu0 0.0
      %843 = vmatprep.subr.mxu0 0.0
      %844 = vmatpush1.msra.mxu0 0.0
      %845 = vmatprep.subr.mxu0 0.0
      %846 = vmatpush1.msra.mxu0 0.0
      %847 = vmatprep.subr.mxu0 0.0
      %848 = vmatpush1.msra.mxu0 0.0
      %849 = vmatprep.subr.mxu0 0.0
      %850 = vmatpush1.msra.mxu0 0.0
      %851 = vmatprep.subr.mxu0 0.0
      %852 = vmatpush1.msra.mxu0 0.0
      %853 = vmatprep.subr.mxu0 0.0
      %854 = vmatpush1.msra.mxu0 0.0
      %855 = vmatprep.subr.mxu0 0.0
      %856 = vmatpush1.msra.mxu0 0.0
      %857 = vmatprep.subr.mxu0 0.0
      %858 = vmatpush1.msra.mxu0 0.0
      %859 = vmatprep.subr.mxu0 0.0
      %860 = vmatpush1.msra.mxu0 0.0
      %861 = vmatprep.subr.mxu0 0.0
      %862 = vmatpush1.msra.mxu0 0.0
      %863 = vmatprep.subr.mxu0 0.0
      %864 = vmatpush1.msra.mxu0 0.0
      %865 = vmatprep.subr.mxu0 0.0
      %866 = vmatpush1.msra.mxu0 0.0
      %867 = vmatprep.subr.mxu0 0.0
      %868 = vmatpush1.msra.mxu0 0.0
      %869 = vmatprep.subr.mxu0 0.0
      %870 = vmatpush1.msra.mxu0 0.0
      %871 = vmatprep.subr.mxu0 0.0
      %872 = vmatpush1.msra.mxu0 0.0
      %873 = vmatprep.subr.mxu0 0.0
      %874 = vmatpush1.msra.mxu0 0.0
      %875 = vmatprep.subr.mxu0 0.0
      %876 = vmatpush1.msra.mxu0 0.0
      %877 = vmatprep.subr.mxu0 0.0
      %878 = vmatpush1.msra.mxu0 0.0
      %879 = vmatprep.subr.mxu0 0.0
      %880 = vmatpush1.msra.mxu0 0.0
      %881 = vmatprep.mubr.f32.mxu0 0.0
      %882 = vmatmul.mubr.f32.gmra.mrb[0].mxu0 %v809
      %v883 = vpop.f32.mrb[0].mxu0
      %v884 = vadd.f32 0.0, %v883
      %v885 = vpop.f32.mrb[0].mxu0
      %v886 = vadd.f32 0.0, %v885
      %887 = vdwg.mxu0
      %v888 = vadd.f32 %v792, %v884
      %v889 = vadd.f32 %v793, %v886
      %v890 = vld [vmem:[%s3 + $0x20] sm:$0xff]
      %891 = vrot.lane.b32.xlu0 %v507, 111
      %v892 = vpop.permute.xlu0 %891
      %893 = vrot.lane.b32.xlu0 %v508, 111
      %v894 = vpop.permute.xlu0 %893
      %895 = vrot.lane.b32.xlu0 %v518, 111
      %v896 = vpop.permute.xlu0 %895
      %vm897 = vcmask 908288
      %v898 = vsel %vm897, %v892, %v894
      %v899 = vsel %vm897, %v894, %v896
      %v901 = vsel %vm532, %v890, 0
      %v903 = vsel %vm536, %v898, 0
      %v905 = vsel %vm536, %v899, 0
      %907 = vmatprep.subr.mxu0 %v905
      %908 = vmatpush1.msra.mxu0 %v903
      %909 = vmatprep.subr.mxu0 0.0
      %910 = vmatpush1.msra.mxu0 0.0
      %911 = vmatprep.subr.mxu0 0.0
      %912 = vmatpush1.msra.mxu0 0.0
      %913 = vmatprep.subr.mxu0 0.0
      %914 = vmatpush1.msra.mxu0 0.0
      %915 = vmatprep.subr.mxu0 0.0
      %916 = vmatpush1.msra.mxu0 0.0
      %917 = vmatprep.subr.mxu0 0.0
      %918 = vmatpush1.msra.mxu0 0.0
      %919 = vmatprep.subr.mxu0 0.0
      %920 = vmatpush1.msra.mxu0 0.0
      %921 = vmatprep.subr.mxu0 0.0
      %922 = vmatpush1.msra.mxu0 0.0
      %923 = vmatprep.subr.mxu0 0.0
      %924 = vmatpush1.msra.mxu0 0.0
      %925 = vmatprep.subr.mxu0 0.0
      %926 = vmatpush1.msra.mxu0 0.0
      %927 = vmatprep.subr.mxu0 0.0
      %928 = vmatpush1.msra.mxu0 0.0
      %929 = vmatprep.subr.mxu0 0.0
      %930 = vmatpush1.msra.mxu0 0.0
      %931 = vmatprep.subr.mxu0 0.0
      %932 = vmatpush1.msra.mxu0 0.0
      %933 = vmatprep.subr.mxu0 0.0
      %934 = vmatpush1.msra.mxu0 0.0
      %935 = vmatprep.subr.mxu0 0.0
      %936 = vmatpush1.msra.mxu0 0.0
      %937 = vmatprep.subr.mxu0 0.0
      %938 = vmatpush1.msra.mxu0 0.0
      %939 = vmatprep.subr.mxu0 0.0
      %940 = vmatpush1.msra.mxu0 0.0
      %941 = vmatprep.subr.mxu0 0.0
      %942 = vmatpush1.msra.mxu0 0.0
      %943 = vmatprep.subr.mxu0 0.0
      %944 = vmatpush1.msra.mxu0 0.0
      %945 = vmatprep.subr.mxu0 0.0
      %946 = vmatpush1.msra.mxu0 0.0
      %947 = vmatprep.subr.mxu0 0.0
      %948 = vmatpush1.msra.mxu0 0.0
      %949 = vmatprep.subr.mxu0 0.0
      %950 = vmatpush1.msra.mxu0 0.0
      %951 = vmatprep.subr.mxu0 0.0
      %952 = vmatpush1.msra.mxu0 0.0
      %953 = vmatprep.subr.mxu0 0.0
      %954 = vmatpush1.msra.mxu0 0.0
      %955 = vmatprep.subr.mxu0 0.0
      %956 = vmatpush1.msra.mxu0 0.0
      %957 = vmatprep.subr.mxu0 0.0
      %958 = vmatpush1.msra.mxu0 0.0
      %959 = vmatprep.subr.mxu0 0.0
      %960 = vmatpush1.msra.mxu0 0.0
      %961 = vmatprep.subr.mxu0 0.0
      %962 = vmatpush1.msra.mxu0 0.0
      %963 = vmatprep.subr.mxu0 0.0
      %964 = vmatpush1.msra.mxu0 0.0
      %965 = vmatprep.subr.mxu0 0.0
      %966 = vmatpush1.msra.mxu0 0.0
      %967 = vmatprep.subr.mxu0 0.0
      %968 = vmatpush1.msra.mxu0 0.0
      %969 = vmatprep.subr.mxu0 0.0
      %970 = vmatpush1.msra.mxu0 0.0
      %971 = vmatprep.mubr.f32.mxu0 0.0
      %972 = vmatmul.mubr.f32.gmra.mrb[0].mxu0 %v901
      %v973 = vpop.f32.mrb[0].mxu0
      %v974 = vadd.f32 0.0, %v973
      %v975 = vpop.f32.mrb[0].mxu0
      %v976 = vadd.f32 0.0, %v975
      %977 = vdwg.mxu0
      %v978 = vadd.f32 %v888, %v974
      %v979 = vadd.f32 %v889, %v976
      %980 = vrot.lane.b32.xlu0 %v507, 110
      %v981 = vpop.permute.xlu0 %980
      %982 = vrot.lane.b32.xlu0 %v508, 110
      %v983 = vpop.permute.xlu0 %982
      %984 = vrot.lane.b32.xlu0 %v518, 110
      %v985 = vpop.permute.xlu0 %984
      %vm986 = vcmask 900096
      %v987 = vsel %vm986, %v981, %v983
      %v988 = vsel %vm986, %v983, %v985
      %v991 = vsel %vm696, %v987, 0.0
      %v992 = vsel %vm697, %v988, 0.0
      %v993 = vld [vmem:[%s3 + $0x28] sm:$0xff]
      %v995 = vsel %vm532, %v993, 0
      %v998 = vsel %vm536, %v991, 0
      %v1001 = vsel %vm536, %v992, 0
      %1003 = vmatprep.subr.mxu0 %v1001
      %1004 = vmatpush1.msra.mxu0 %v998
      %1005 = vmatprep.subr.mxu0 0.0
      %1006 = vmatpush1.msra.mxu0 0.0
      %1007 = vmatprep.subr.mxu0 0.0
      %1008 = vmatpush1.msra.mxu0 0.0
      %1009 = vmatprep.subr.mxu0 0.0
      %1010 = vmatpush1.msra.mxu0 0.0
      %1011 = vmatprep.subr.mxu0 0.0
      %1012 = vmatpush1.msra.mxu0 0.0
      %1013 = vmatprep.subr.mxu0 0.0
      %1014 = vmatpush1.msra.mxu0 0.0
      %1015 = vmatprep.subr.mxu0 0.0
      %1016 = vmatpush1.msra.mxu0 0.0
      %1017 = vmatprep.subr.mxu0 0.0
      %1018 = vmatpush1.msra.mxu0 0.0
      %1019 = vmatprep.subr.mxu0 0.0
      %1020 = vmatpush1.msra.mxu0 0.0
      %1021 = vmatprep.subr.mxu0 0.0
      %1022 = vmatpush1.msra.mxu0 0.0
      %1023 = vmatprep.subr.mxu0 0.0
      %1024 = vmatpush1.msra.mxu0 0.0
      %1025 = vmatprep.subr.mxu0 0.0
      %1026 = vmatpush1.msra.mxu0 0.0
      %1027 = vmatprep.subr.mxu0 0.0
      %1028 = vmatpush1.msra.mxu0 0.0
      %1029 = vmatprep.subr.mxu0 0.0
      %1030 = vmatpush1.msra.mxu0 0.0
      %1031 = vmatprep.subr.mxu0 0.0
      %1032 = vmatpush1.msra.mxu0 0.0
      %1033 = vmatprep.subr.mxu0 0.0
      %1034 = vmatpush1.msra.mxu0 0.0
      %1035 = vmatprep.subr.mxu0 0.0
      %1036 = vmatpush1.msra.mxu0 0.0
      %1037 = vmatprep.subr.mxu0 0.0
      %1038 = vmatpush1.msra.mxu0 0.0
      %1039 = vmatprep.subr.mxu0 0.0
      %1040 = vmatpush1.msra.mxu0 0.0
      %1041 = vmatprep.subr.mxu0 0.0
      %1042 = vmatpush1.msra.mxu0 0.0
      %1043 = vmatprep.subr.mxu0 0.0
      %1044 = vmatpush1.msra.mxu0 0.0
      %1045 = vmatprep.subr.mxu0 0.0
      %1046 = vmatpush1.msra.mxu0 0.0
      %1047 = vmatprep.subr.mxu0 0.0
      %1048 = vmatpush1.msra.mxu0 0.0
      %1049 = vmatprep.subr.mxu0 0.0
      %1050 = vmatpush1.msra.mxu0 0.0
      %1051 = vmatprep.subr.mxu0 0.0
      %1052 = vmatpush1.msra.mxu0 0.0
      %1053 = vmatprep.subr.mxu0 0.0
      %1054 = vmatpush1.msra.mxu0 0.0
      %1055 = vmatprep.subr.mxu0 0.0
      %1056 = vmatpush1.msra.mxu0 0.0
      %1057 = vmatprep.subr.mxu0 0.0
      %1058 = vmatpush1.msra.mxu0 0.0
      %1059 = vmatprep.subr.mxu0 0.0
      %1060 = vmatpush1.msra.mxu0 0.0
      %1061 = vmatprep.subr.mxu0 0.0
      %1062 = vmatpush1.msra.mxu0 0.0
      %1063 = vmatprep.subr.mxu0 0.0
      %1064 = vmatpush1.msra.mxu0 0.0
      %1065 = vmatprep.subr.mxu0 0.0
      %1066 = vmatpush1.msra.mxu0 0.0
      %1067 = vmatprep.mubr.f32.mxu0 0.0
      %1068 = vmatmul.mubr.f32.gmra.mrb[0].mxu0 %v995
      %v1069 = vpop.f32.mrb[0].mxu0
      %v1070 = vadd.f32 0.0, %v1069
      %v1071 = vpop.f32.mrb[0].mxu0
      %v1072 = vadd.f32 0.0, %v1071
      %1073 = vdwg.mxu0
      %v1074 = vadd.f32 %v978, %v1070
      %v1075 = vadd.f32 %v979, %v1072
      %1076 = vrot.lane.b32.xlu0 %v507, 96
      %v1077 = vpop.permute.xlu0 %1076
      %1078 = vrot.lane.b32.xlu0 %v508, 96
      %v1079 = vpop.permute.xlu0 %1078
      %1080 = vrot.lane.b32.xlu0 %v518, 96
      %v1081 = vpop.permute.xlu0 %1080
      %vm1082 = vcmask 785408
      %v1083 = vsel %vm1082, %v1077, %v1079
      %v1084 = vsel %vm1082, %v1079, %v1081
      %v1087 = vsel %vm513, %v1083, 0.0
      %v1088 = vsel %vm514, %v1084, 0.0
      %v1089 = vld [vmem:[%s3 + $0x30] sm:$0xff]
      %v1091 = vsel %vm532, %v1089, 0
      %v1094 = vsel %vm536, %v1087, 0
      %v1097 = vsel %vm536, %v1088, 0
      %1099 = vmatprep.subr.mxu0 %v1097
      %1100 = vmatpush1.msra.mxu0 %v1094
      %1101 = vmatprep.subr.mxu0 0.0
      %1102 = vmatpush1.msra.mxu0 0.0
      %1103 = vmatprep.subr.mxu0 0.0
      %1104 = vmatpush1.msra.mxu0 0.0
      %1105 = vmatprep.subr.mxu0 0.0
      %1106 = vmatpush1.msra.mxu0 0.0
      %1107 = vmatprep.subr.mxu0 0.0
      %1108 = vmatpush1.msra.mxu0 0.0
      %1109 = vmatprep.subr.mxu0 0.0
      %1110 = vmatpush1.msra.mxu0 0.0
      %1111 = vmatprep.subr.mxu0 0.0
      %1112 = vmatpush1.msra.mxu0 0.0
      %1113 = vmatprep.subr.mxu0 0.0
      %1114 = vmatpush1.msra.mxu0 0.0
      %1115 = vmatprep.subr.mxu0 0.0
      %1116 = vmatpush1.msra.mxu0 0.0
      %1117 = vmatprep.subr.mxu0 0.0
      %1118 = vmatpush1.msra.mxu0 0.0
      %1119 = vmatprep.subr.mxu0 0.0
      %1120 = vmatpush1.msra.mxu0 0.0
      %1121 = vmatprep.subr.mxu0 0.0
      %1122 = vmatpush1.msra.mxu0 0.0
      %1123 = vmatprep.subr.mxu0 0.0
      %1124 = vmatpush1.msra.mxu0 0.0
      %1125 = vmatprep.subr.mxu0 0.0
      %1126 = vmatpush1.msra.mxu0 0.0
      %1127 = vmatprep.subr.mxu0 0.0
      %1128 = vmatpush1.msra.mxu0 0.0
      %1129 = vmatprep.subr.mxu0 0.0
      %1130 = vmatpush1.msra.mxu0 0.0
      %1131 = vmatprep.subr.mxu0 0.0
      %1132 = vmatpush1.msra.mxu0 0.0
      %1133 = vmatprep.subr.mxu0 0.0
      %1134 = vmatpush1.msra.mxu0 0.0
      %1135 = vmatprep.subr.mxu0 0.0
      %1136 = vmatpush1.msra.mxu0 0.0
      %1137 = vmatprep.subr.mxu0 0.0
      %1138 = vmatpush1.msra.mxu0 0.0
      %1139 = vmatprep.subr.mxu0 0.0
      %1140 = vmatpush1.msra.mxu0 0.0
      %1141 = vmatprep.subr.mxu0 0.0
      %1142 = vmatpush1.msra.mxu0 0.0
      %1143 = vmatprep.subr.mxu0 0.0
      %1144 = vmatpush1.msra.mxu0 0.0
      %1145 = vmatprep.subr.mxu0 0.0
      %1146 = vmatpush1.msra.mxu0 0.0
      %1147 = vmatprep.subr.mxu0 0.0
      %1148 = vmatpush1.msra.mxu0 0.0
      %1149 = vmatprep.subr.mxu0 0.0
      %1150 = vmatpush1.msra.mxu0 0.0
      %1151 = vmatprep.subr.mxu0 0.0
      %1152 = vmatpush1.msra.mxu0 0.0
      %1153 = vmatprep.subr.mxu0 0.0
      %1154 = vmatpush1.msra.mxu0 0.0
      %1155 = vmatprep.subr.mxu0 0.0
      %1156 = vmatpush1.msra.mxu0 0.0
      %1157 = vmatprep.subr.mxu0 0.0
      %1158 = vmatpush1.msra.mxu0 0.0
      %1159 = vmatprep.subr.mxu0 0.0
      %1160 = vmatpush1.msra.mxu0 0.0
      %1161 = vmatprep.subr.mxu0 0.0
      %1162 = vmatpush1.msra.mxu0 0.0
      %1163 = vmatprep.mubr.f32.mxu0 0.0
      %1164 = vmatmul.mubr.f32.gmra.mrb[0].mxu0 %v1091
      %v1165 = vpop.f32.mrb[0].mxu0
      %v1166 = vadd.f32 0.0, %v1165
      %v1167 = vpop.f32.mrb[0].mxu0
      %v1168 = vadd.f32 0.0, %v1167
      %1169 = vdwg.mxu0
      %v1170 = vadd.f32 %v1074, %v1166
      %v1171 = vadd.f32 %v1075, %v1168
      %v1172 = vld [vmem:[%s3 + $0x38] sm:$0xff]
      %1173 = vrot.lane.b32.xlu0 %v507, 95
      %v1174 = vpop.permute.xlu0 %1173
      %1175 = vrot.lane.b32.xlu0 %v508, 95
      %v1176 = vpop.permute.xlu0 %1175
      %1177 = vrot.lane.b32.xlu0 %v518, 95
      %v1178 = vpop.permute.xlu0 %1177
      %vm1179 = vcmask 777216
      %v1180 = vsel %vm1179, %v1174, %v1176
      %v1181 = vsel %vm1179, %v1176, %v1178
      %v1183 = vsel %vm532, %v1172, 0
      %v1185 = vsel %vm536, %v1180, 0
      %v1187 = vsel %vm536, %v1181, 0
      %1189 = vmatprep.subr.mxu0 %v1187
      %1190 = vmatpush1.msra.mxu0 %v1185
      %1191 = vmatprep.subr.mxu0 0.0
      %1192 = vmatpush1.msra.mxu0 0.0
      %1193 = vmatprep.subr.mxu0 0.0
      %1194 = vmatpush1.msra.mxu0 0.0
      %1195 = vmatprep.subr.mxu0 0.0
      %1196 = vmatpush1.msra.mxu0 0.0
      %1197 = vmatprep.subr.mxu0 0.0
      %1198 = vmatpush1.msra.mxu0 0.0
      %1199 = vmatprep.subr.mxu0 0.0
      %1200 = vmatpush1.msra.mxu0 0.0
      %1201 = vmatprep.subr.mxu0 0.0
      %1202 = vmatpush1.msra.mxu0 0.0
      %1203 = vmatprep.subr.mxu0 0.0
      %1204 = vmatpush1.msra.mxu0 0.0
      %1205 = vmatprep.subr.mxu0 0.0
      %1206 = vmatpush1.msra.mxu0 0.0
      %1207 = vmatprep.subr.mxu0 0.0
      %1208 = vmatpush1.msra.mxu0 0.0
      %1209 = vmatprep.subr.mxu0 0.0
      %1210 = vmatpush1.msra.mxu0 0.0
      %1211 = vmatprep.subr.mxu0 0.0
      %1212 = vmatpush1.msra.mxu0 0.0
      %1213 = vmatprep.subr.mxu0 0.0
      %1214 = vmatpush1.msra.mxu0 0.0
      %1215 = vmatprep.subr.mxu0 0.0
      %1216 = vmatpush1.msra.mxu0 0.0
      %1217 = vmatprep.subr.mxu0 0.0
      %1218 = vmatpush1.msra.mxu0 0.0
      %1219 = vmatprep.subr.mxu0 0.0
      %1220 = vmatpush1.msra.mxu0 0.0
      %1221 = vmatprep.subr.mxu0 0.0
      %1222 = vmatpush1.msra.mxu0 0.0
      %1223 = vmatprep.subr.mxu0 0.0
      %1224 = vmatpush1.msra.mxu0 0.0
      %1225 = vmatprep.subr.mxu0 0.0
      %1226 = vmatpush1.msra.mxu0 0.0
      %1227 = vmatprep.subr.mxu0 0.0
      %1228 = vmatpush1.msra.mxu0 0.0
      %1229 = vmatprep.subr.mxu0 0.0
      %1230 = vmatpush1.msra.mxu0 0.0
      %1231 = vmatprep.subr.mxu0 0.0
      %1232 = vmatpush1.msra.mxu0 0.0
      %1233 = vmatprep.subr.mxu0 0.0
      %1234 = vmatpush1.msra.mxu0 0.0
      %1235 = vmatprep.subr.mxu0 0.0
      %1236 = vmatpush1.msra.mxu0 0.0
      %1237 = vmatprep.subr.mxu0 0.0
      %1238 = vmatpush1.msra.mxu0 0.0
      %1239 = vmatprep.subr.mxu0 0.0
      %1240 = vmatpush1.msra.mxu0 0.0
      %1241 = vmatprep.subr.mxu0 0.0
      %1242 = vmatpush1.msra.mxu0 0.0
      %1243 = vmatprep.subr.mxu0 0.0
      %1244 = vmatpush1.msra.mxu0 0.0
      %1245 = vmatprep.subr.mxu0 0.0
      %1246 = vmatpush1.msra.mxu0 0.0
      %1247 = vmatprep.subr.mxu0 0.0
      %1248 = vmatpush1.msra.mxu0 0.0
      %1249 = vmatprep.subr.mxu0 0.0
      %1250 = vmatpush1.msra.mxu0 0.0
      %1251 = vmatprep.subr.mxu0 0.0
      %1252 = vmatpush1.msra.mxu0 0.0
      %1253 = vmatprep.mubr.f32.mxu0 0.0
      %1254 = vmatmul.mubr.f32.gmra.mrb[0].mxu0 %v1183
      %v1255 = vpop.f32.mrb[0].mxu0
      %v1256 = vadd.f32 0.0, %v1255
      %v1257 = vpop.f32.mrb[0].mxu0
      %v1258 = vadd.f32 0.0, %v1257
      %1259 = vdwg.mxu0
      %v1260 = vadd.f32 %v1170, %v1256
      %v1261 = vadd.f32 %v1171, %v1258
      %1262 = vrot.lane.b32.xlu0 %v507, 94
      %v1263 = vpop.permute.xlu0 %1262
      %1264 = vrot.lane.b32.xlu0 %v508, 94
      %v1265 = vpop.permute.xlu0 %1264
      %1266 = vrot.lane.b32.xlu0 %v518, 94
      %v1267 = vpop.permute.xlu0 %1266
      %vm1268 = vcmask 769024
      %v1269 = vsel %vm1268, %v1263, %v1265
      %v1270 = vsel %vm1268, %v1265, %v1267
      %v1273 = vsel %vm696, %v1269, 0.0
      %v1274 = vsel %vm697, %v1270, 0.0
      %v1275 = vld [vmem:[%s3 + $0x40] sm:$0xff]
      %v1277 = vsel %vm532, %v1275, 0
      %v1280 = vsel %vm536, %v1273, 0
      %v1283 = vsel %vm536, %v1274, 0
      %1285 = vmatprep.subr.mxu0 %v1283
      %1286 = vmatpush1.msra.mxu0 %v1280
      %1287 = vmatprep.subr.mxu0 0.0
      %1288 = vmatpush1.msra.mxu0 0.0
      %1289 = vmatprep.subr.mxu0 0.0
      %1290 = vmatpush1.msra.mxu0 0.0
      %1291 = vmatprep.subr.mxu0 0.0
      %1292 = vmatpush1.msra.mxu0 0.0
      %1293 = vmatprep.subr.mxu0 0.0
      %1294 = vmatpush1.msra.mxu0 0.0
      %1295 = vmatprep.subr.mxu0 0.0
      %1296 = vmatpush1.msra.mxu0 0.0
      %1297 = vmatprep.subr.mxu0 0.0
      %1298 = vmatpush1.msra.mxu0 0.0
      %1299 = vmatprep.subr.mxu0 0.0
      %1300 = vmatpush1.msra.mxu0 0.0
      %1301 = vmatprep.subr.mxu0 0.0
      %1302 = vmatpush1.msra.mxu0 0.0
      %1303 = vmatprep.subr.mxu0 0.0
      %1304 = vmatpush1.msra.mxu0 0.0
      %1305 = vmatprep.subr.mxu0 0.0
      %1306 = vmatpush1.msra.mxu0 0.0
      %1307 = vmatprep.subr.mxu0 0.0
      %1308 = vmatpush1.msra.mxu0 0.0
      %1309 = vmatprep.subr.mxu0 0.0
      %1310 = vmatpush1.msra.mxu0 0.0
      %1311 = vmatprep.subr.mxu0 0.0
      %1312 = vmatpush1.msra.mxu0 0.0
      %1313 = vmatprep.subr.mxu0 0.0
      %1314 = vmatpush1.msra.mxu0 0.0
      %1315 = vmatprep.subr.mxu0 0.0
      %1316 = vmatpush1.msra.mxu0 0.0
      %1317 = vmatprep.subr.mxu0 0.0
      %1318 = vmatpush1.msra.mxu0 0.0
      %1319 = vmatprep.subr.mxu0 0.0
      %1320 = vmatpush1.msra.mxu0 0.0
      %1321 = vmatprep.subr.mxu0 0.0
      %1322 = vmatpush1.msra.mxu0 0.0
      %1323 = vmatprep.subr.mxu0 0.0
      %1324 = vmatpush1.msra.mxu0 0.0
      %1325 = vmatprep.subr.mxu0 0.0
      %1326 = vmatpush1.msra.mxu0 0.0
      %1327 = vmatprep.subr.mxu0 0.0
      %1328 = vmatpush1.msra.mxu0 0.0
      %1329 = vmatprep.subr.mxu0 0.0
      %1330 = vmatpush1.msra.mxu0 0.0
      %1331 = vmatprep.subr.mxu0 0.0
      %1332 = vmatpush1.msra.mxu0 0.0
      %1333 = vmatprep.subr.mxu0 0.0
      %1334 = vmatpush1.msra.mxu0 0.0
      %1335 = vmatprep.subr.mxu0 0.0
      %1336 = vmatpush1.msra.mxu0 0.0
      %1337 = vmatprep.subr.mxu0 0.0
      %1338 = vmatpush1.msra.mxu0 0.0
      %1339 = vmatprep.subr.mxu0 0.0
      %1340 = vmatpush1.msra.mxu0 0.0
      %1341 = vmatprep.subr.mxu0 0.0
      %1342 = vmatpush1.msra.mxu0 0.0
      %1343 = vmatprep.subr.mxu0 0.0
      %1344 = vmatpush1.msra.mxu0 0.0
      %1345 = vmatprep.subr.mxu0 0.0
      %1346 = vmatpush1.msra.mxu0 0.0
      %1347 = vmatprep.subr.mxu0 0.0
      %1348 = vmatpush1.msra.mxu0 0.0
      %1349 = vmatprep.mubr.f32.mxu0 0.0
      %1350 = vmatmul.mubr.f32.gmra.mrb[0].mxu0 %v1277
      %v1351 = vpop.f32.mrb[0].mxu0
      %v1352 = vadd.f32 0.0, %v1351
      %v1353 = vpop.f32.mrb[0].mxu0
      %v1354 = vadd.f32 0.0, %v1353
      %1355 = vdwg.mxu0
      %v1356 = vadd.f32 %v1260, %v1352
      %v1357 = vadd.f32 %v1261, %v1354
      %v1358 = vld [vmem:[%s4] sm:$0xff]
      %1360 = vset.pattern.permute.xlu0 0
      %1361 = vperm.xlu0 %1360, %v1358
      %v1362 = vpop.permute.xlu0 %1361
      %v1364 = vadd.f32 %v1356, %v1362
      %v1365 = vadd.f32 %v1357, %v1362
      %v1366 = vmax.f32 %v1364, 0.0
      %v1367 = vmax.f32 %v1365, 0.0
      %vm1368 = vcmask 273408
      %1369 = vst.msk [vmem:[#allocation3] sm:$0xf] %vm1368, 0.0
      %vm1370 = vcmask 552208
      %1371 = vst.msk [vmem:[#allocation3 + $0x8] sm:$0xf] %vm1370, 0.0
      %v1374 = vcombine.high %v484, %v485
      %v1375 = vcombine.low %v486, %v487
      %vm1376 = vcmask 1041408
      %vm1377 = vcmask 1045508
      %vm1378 = vmor %vm1376, %vm1377
      %v1379 = vrot.slane %v1374, 6
      %v1380 = vrot.slane %v1379, 4
      %v1381 = vrot.slane %v1375, 6
      %v1382 = vsel %vm1378, %v1380, %v1381
      %1383 = vrot.lane.b32.xlu0 %v1382, 34
      %v1384 = vpop.permute.xlu0 %1383
      %v1385 = vrot.slane %v1384, 4
      %vm1386 = vcmask 277504
      %v1387 = vsel %vm1386, %v1385, %v1384
      %vm1390 = vcmask 1043728
      %vm1391 = vcmask 1047556
      %vm1392 = vmor %vm1391, %vm1390
      %1393 = vst.msk [vmem:[#allocation3] sm:$0xff] %vm1392, %v1387
      %1394 = vst.msk [vmem:[#allocation3 + $0x8] sm:$0xf] %vm1368, %v1385
      %v1395 = vld [vmem:[#allocation3] sm:$0xff]
      %vm1396 = vcmp.ge.s32.totalorder %v359, 2
      %vm1397 = vcmp.ge.s32.totalorder %v360, 2
      %v1398 = vsel %vm1396, 1, 0
      %v1399 = vsel %vm1397, 1, 0
      %vm1400 = vcmp.eq.s32.totalorder %v1398, 1
      %vm1401 = vcmp.eq.s32.totalorder %v1399, 1
      %v1403 = vcombine.high %v1395, %v1395
      %v1405 = vsel %vm1400, %v1395, 0.0
      %v1406 = vsel %vm1401, %v1403, 0.0
      %v1407 = vld [vmem:[%s5] sm:$0xff]
      %v1408 = vld [vmem:[#allocation3 + $0x8] sm:$0xf]
      %1410 = vrot.lane.b32.xlu0 %v1395, 127
      %v1411 = vpop.permute.xlu0 %1410
      %1412 = vrot.lane.b32.xlu0 %v1403, 127
      %v1413 = vpop.permute.xlu0 %1412
      %1414 = vrot.lane.b32.xlu0 %v1408, 127
      %v1415 = vpop.permute.xlu0 %1414
      %v1416 = vsel %vm529, %v1411, %v1413
      %v1417 = vsel %vm529, %v1413, %v1415
      %v1420 = vsel %vm513, %v1416, 0.0
      %v1421 = vsel %vm514, %v1417, 0.0
      %v1422 = vld [vmem:[%s5 + $0x8] sm:$0xff]
      %v1424 = vsel %vm384, %v1422, 0
      %v1427 = vsel %vm394, %v1420, 0
      %v1430 = vsel %vm394, %v1421, 0
      %1432 = vmatprep.subr.mxu0 %v1430
      %1433 = vmatpush1.msra.mxu0 %v1427
      %1434 = vmatprep.subr.mxu0 0.0
      %1435 = vmatpush1.msra.mxu0 0.0
      %1436 = vmatprep.subr.mxu0 0.0
      %1437 = vmatpush1.msra.mxu0 0.0
      %1438 = vmatprep.subr.mxu0 0.0
      %1439 = vmatpush1.msra.mxu0 0.0
      %1440 = vmatprep.subr.mxu0 0.0
      %1441 = vmatpush1.msra.mxu0 0.0
      %1442 = vmatprep.subr.mxu0 0.0
      %1443 = vmatpush1.msra.mxu0 0.0
      %1444 = vmatprep.subr.mxu0 0.0
      %1445 = vmatpush1.msra.mxu0 0.0
      %1446 = vmatprep.subr.mxu0 0.0
      %1447 = vmatpush1.msra.mxu0 0.0
      %1448 = vmatprep.subr.mxu0 0.0
      %1449 = vmatpush1.msra.mxu0 0.0
      %1450 = vmatprep.subr.mxu0 0.0
      %1451 = vmatpush1.msra.mxu0 0.0
      %1452 = vmatprep.subr.mxu0 0.0
      %1453 = vmatpush1.msra.mxu0 0.0
      %1454 = vmatprep.subr.mxu0 0.0
      %1455 = vmatpush1.msra.mxu0 0.0
      %1456 = vmatprep.subr.mxu0 0.0
      %1457 = vmatpush1.msra.mxu0 0.0
      %1458 = vmatprep.subr.mxu0 0.0
      %1459 = vmatpush1.msra.mxu0 0.0
      %1460 = vmatprep.subr.mxu0 0.0
      %1461 = vmatpush1.msra.mxu0 0.0
      %1462 = vmatprep.subr.mxu0 0.0
      %1463 = vmatpush1.msra.mxu0 0.0
      %1464 = vmatprep.subr.mxu0 0.0
      %1465 = vmatpush1.msra.mxu0 0.0
      %1466 = vmatprep.subr.mxu0 0.0
      %1467 = vmatpush1.msra.mxu0 0.0
      %1468 = vmatprep.subr.mxu0 0.0
      %1469 = vmatpush1.msra.mxu0 0.0
      %1470 = vmatprep.subr.mxu0 0.0
      %1471 = vmatpush1.msra.mxu0 0.0
      %1472 = vmatprep.subr.mxu0 0.0
      %1473 = vmatpush1.msra.mxu0 0.0
      %1474 = vmatprep.subr.mxu0 0.0
      %1475 = vmatpush1.msra.mxu0 0.0
      %1476 = vmatprep.subr.mxu0 0.0
      %1477 = vmatpush1.msra.mxu0 0.0
      %1478 = vmatprep.subr.mxu0 0.0
      %1479 = vmatpush1.msra.mxu0 0.0
      %1480 = vmatprep.subr.mxu0 0.0
      %1481 = vmatpush1.msra.mxu0 0.0
      %1482 = vmatprep.subr.mxu0 0.0
      %1483 = vmatpush1.msra.mxu0 0.0
      %1484 = vmatprep.subr.mxu0 0.0
      %1485 = vmatpush1.msra.mxu0 0.0
      %1486 = vmatprep.subr.mxu0 0.0
      %1487 = vmatpush1.msra.mxu0 0.0
      %1488 = vmatprep.subr.mxu0 0.0
      %1489 = vmatpush1.msra.mxu0 0.0
      %1490 = vmatprep.subr.mxu0 0.0
      %1491 = vmatpush1.msra.mxu0 0.0
      %1492 = vmatprep.subr.mxu0 0.0
      %1493 = vmatpush1.msra.mxu0 0.0
      %1494 = vmatprep.subr.mxu0 0.0
      %1495 = vmatpush1.msra.mxu0 0.0
      %1496 = vmatprep.mubr.f32.mxu0 0.0
      %1497 = vmatmul.mubr.f32.gmra.mrb[0].mxu0 %v1424
      %v1498 = vpop.f32.mrb[0].mxu0
      %v1499 = vadd.f32 0.0, %v1498
      %v1500 = vpop.f32.mrb[0].mxu0
      %v1501 = vadd.f32 0.0, %v1500
      %1502 = vdwg.mxu0
      %v1504 = vsel %vm384, %v1407, 0
      %v1507 = vsel %vm394, %v1405, 0
      %v1510 = vsel %vm394, %v1406, 0
      %1512 = vmatprep.subr.mxu0 %v1510
      %1513 = vmatpush1.msra.mxu0 %v1507
      %1514 = vmatprep.subr.mxu0 0.0
      %1515 = vmatpush1.msra.mxu0 0.0
      %1516 = vmatprep.subr.mxu0 0.0
      %1517 = vmatpush1.msra.mxu0 0.0
      %1518 = vmatprep.subr.mxu0 0.0
      %1519 = vmatpush1.msra.mxu0 0.0
      %1520 = vmatprep.subr.mxu0 0.0
      %1521 = vmatpush1.msra.mxu0 0.0
      %1522 = vmatprep.subr.mxu0 0.0
      %1523 = vmatpush1.msra.mxu0 0.0
      %1524 = vmatprep.subr.mxu0 0.0
      %1525 = vmatpush1.msra.mxu0 0.0
      %1526 = vmatprep.subr.mxu0 0.0
      %1527 = vmatpush1.msra.mxu0 0.0
      %1528 = vmatprep.subr.mxu0 0.0
      %1529 = vmatpush1.msra.mxu0 0.0
      %1530 = vmatprep.subr.mxu0 0.0
      %1531 = vmatpush1.msra.mxu0 0.0
      %1532 = vmatprep.subr.mxu0 0.0
      %1533 = vmatpush1.msra.mxu0 0.0
      %1534 = vmatprep.subr.mxu0 0.0
      %1535 = vmatpush1.msra.mxu0 0.0
      %1536 = vmatprep.subr.mxu0 0.0
      %1537 = vmatpush1.msra.mxu0 0.0
      %1538 = vmatprep.subr.mxu0 0.0
      %1539 = vmatpush1.msra.mxu0 0.0
      %1540 = vmatprep.subr.mxu0 0.0
      %1541 = vmatpush1.msra.mxu0 0.0
      %1542 = vmatprep.subr.mxu0 0.0
      %1543 = vmatpush1.msra.mxu0 0.0
      %1544 = vmatprep.subr.mxu0 0.0
      %1545 = vmatpush1.msra.mxu0 0.0
      %1546 = vmatprep.subr.mxu0 0.0
      %1547 = vmatpush1.msra.mxu0 0.0
      %1548 = vmatprep.subr.mxu0 0.0
      %1549 = vmatpush1.msra.mxu0 0.0
      %1550 = vmatprep.subr.mxu0 0.0
      %1551 = vmatpush1.msra.mxu0 0.0
      %1552 = vmatprep.subr.mxu0 0.0
      %1553 = vmatpush1.msra.mxu0 0.0
      %1554 = vmatprep.subr.mxu0 0.0
      %1555 = vmatpush1.msra.mxu0 0.0
      %1556 = vmatprep.subr.mxu0 0.0
      %1557 = vmatpush1.msra.mxu0 0.0
      %1558 = vmatprep.subr.mxu0 0.0
      %1559 = vmatpush1.msra.mxu0 0.0
      %1560 = vmatprep.subr.mxu0 0.0
      %1561 = vmatpush1.msra.mxu0 0.0
      %1562 = vmatprep.subr.mxu0 0.0
      %1563 = vmatpush1.msra.mxu0 0.0
      %1564 = vmatprep.subr.mxu0 0.0
      %1565 = vmatpush1.msra.mxu0 0.0
      %1566 = vmatprep.subr.mxu0 0.0
      %1567 = vmatpush1.msra.mxu0 0.0
      %1568 = vmatprep.subr.mxu0 0.0
      %1569 = vmatpush1.msra.mxu0 0.0
      %1570 = vmatprep.subr.mxu0 0.0
      %1571 = vmatpush1.msra.mxu0 0.0
      %1572 = vmatprep.subr.mxu0 0.0
      %1573 = vmatpush1.msra.mxu0 0.0
      %1574 = vmatprep.subr.mxu0 0.0
      %1575 = vmatpush1.msra.mxu0 0.0
      %1576 = vmatprep.mubr.f32.mxu0 0.0
      %1577 = vmatmul.mubr.f32.gmra.mrb[0].mxu0 %v1504
      %v1578 = vpop.f32.mrb[0].mxu0
      %v1579 = vadd.f32 %v1499, %v1578
      %v1580 = vpop.f32.mrb[0].mxu0
      %v1581 = vadd.f32 %v1501, %v1580
      %1582 = vdwg.mxu0
      %v1583 = vld [vmem:[#allocation3] sm:$0xff]
      %v1584 = vld [vmem:[#allocation3 + $0x8] sm:$0xf]
      %v1585 = vld [vmem:[%s5 + $0x10] sm:$0xff]
      %v1588 = vcombine.high %v1583, %v1583
      %1589 = vrot.lane.b32.xlu0 %v1583, 126
      %v1590 = vpop.permute.xlu0 %1589
      %1591 = vrot.lane.b32.xlu0 %v1588, 126
      %v1592 = vpop.permute.xlu0 %1591
      %1593 = vrot.lane.b32.xlu0 %v1584, 126
      %v1594 = vpop.permute.xlu0 %1593
      %v1595 = vsel %vm704, %v1590, %v1592
      %v1596 = vsel %vm704, %v1592, %v1594
      %v1598 = vsel %vm384, %v1585, 0
      %v1600 = vsel %vm394, %v1595, 0
      %v1602 = vsel %vm394, %v1596, 0
      %1604 = vmatprep.subr.mxu0 %v1602
      %1605 = vmatpush1.msra.mxu0 %v1600
      %1606 = vmatprep.subr.mxu0 0.0
      %1607 = vmatpush1.msra.mxu0 0.0
      %1608 = vmatprep.subr.mxu0 0.0
      %1609 = vmatpush1.msra.mxu0 0.0
      %1610 = vmatprep.subr.mxu0 0.0
      %1611 = vmatpush1.msra.mxu0 0.0
      %1612 = vmatprep.subr.mxu0 0.0
      %1613 = vmatpush1.msra.mxu0 0.0
      %1614 = vmatprep.subr.mxu0 0.0
      %1615 = vmatpush1.msra.mxu0 0.0
      %1616 = vmatprep.subr.mxu0 0.0
      %1617 = vmatpush1.msra.mxu0 0.0
      %1618 = vmatprep.subr.mxu0 0.0
      %1619 = vmatpush1.msra.mxu0 0.0
      %1620 = vmatprep.subr.mxu0 0.0
      %1621 = vmatpush1.msra.mxu0 0.0
      %1622 = vmatprep.subr.mxu0 0.0
      %1623 = vmatpush1.msra.mxu0 0.0
      %1624 = vmatprep.subr.mxu0 0.0
      %1625 = vmatpush1.msra.mxu0 0.0
      %1626 = vmatprep.subr.mxu0 0.0
      %1627 = vmatpush1.msra.mxu0 0.0
      %1628 = vmatprep.subr.mxu0 0.0
      %1629 = vmatpush1.msra.mxu0 0.0
      %1630 = vmatprep.subr.mxu0 0.0
      %1631 = vmatpush1.msra.mxu0 0.0
      %1632 = vmatprep.subr.mxu0 0.0
      %1633 = vmatpush1.msra.mxu0 0.0
      %1634 = vmatprep.subr.mxu0 0.0
      %1635 = vmatpush1.msra.mxu0 0.0
      %1636 = vmatprep.subr.mxu0 0.0
      %1637 = vmatpush1.msra.mxu0 0.0
      %1638 = vmatprep.subr.mxu0 0.0
      %1639 = vmatpush1.msra.mxu0 0.0
      %1640 = vmatprep.subr.mxu0 0.0
      %1641 = vmatpush1.msra.mxu0 0.0
      %1642 = vmatprep.subr.mxu0 0.0
      %1643 = vmatpush1.msra.mxu0 0.0
      %1644 = vmatprep.subr.mxu0 0.0
      %1645 = vmatpush1.msra.mxu0 0.0
      %1646 = vmatprep.subr.mxu0 0.0
      %1647 = vmatpush1.msra.mxu0 0.0
      %1648 = vmatprep.subr.mxu0 0.0
      %1649 = vmatpush1.msra.mxu0 0.0
      %1650 = vmatprep.subr.mxu0 0.0
      %1651 = vmatpush1.msra.mxu0 0.0
      %1652 = vmatprep.subr.mxu0 0.0
      %1653 = vmatpush1.msra.mxu0 0.0
      %1654 = vmatprep.subr.mxu0 0.0
      %1655 = vmatpush1.msra.mxu0 0.0
      %1656 = vmatprep.subr.mxu0 0.0
      %1657 = vmatpush1.msra.mxu0 0.0
      %1658 = vmatprep.subr.mxu0 0.0
      %1659 = vmatpush1.msra.mxu0 0.0
      %1660 = vmatprep.subr.mxu0 0.0
      %1661 = vmatpush1.msra.mxu0 0.0
      %1662 = vmatprep.subr.mxu0 0.0
      %1663 = vmatpush1.msra.mxu0 0.0
      %1664 = vmatprep.subr.mxu0 0.0
      %1665 = vmatpush1.msra.mxu0 0.0
      %1666 = vmatprep.subr.mxu0 0.0
      %1667 = vmatpush1.msra.mxu0 0.0
      %1668 = vmatprep.mubr.f32.mxu0 0.0
      %1669 = vmatmul.mubr.f32.gmra.mrb[0].mxu0 %v1598
      %v1670 = vpop.f32.mrb[0].mxu0
      %v1671 = vadd.f32 0.0, %v1670
      %v1672 = vpop.f32.mrb[0].mxu0
      %v1673 = vadd.f32 0.0, %v1672
      %1674 = vdwg.mxu0
      %v1675 = vadd.f32 %v1579, %v1671
      %v1676 = vadd.f32 %v1581, %v1673
      %v1677 = vld [vmem:[#allocation3] sm:$0xff]
      %v1678 = vld [vmem:[#allocation3 + $0x8] sm:$0xf]
      %v1681 = vcombine.high %v1677, %v1677
      %1682 = vrot.lane.b32.xlu0 %v1677, 125
      %v1683 = vpop.permute.xlu0 %1682
      %1684 = vrot.lane.b32.xlu0 %v1681, 125
      %v1685 = vpop.permute.xlu0 %1684
      %1686 = vrot.lane.b32.xlu0 %v1678, 125
      %v1687 = vpop.permute.xlu0 %1686
      %vm1688 = vcmask 1022976
      %v1689 = vsel %vm1688, %v1683, %v1685
      %v1690 = vsel %vm1688, %v1685, %v1687
      %v1693 = vsel %vm696, %v1689, 0.0
      %v1694 = vsel %vm697, %v1690, 0.0
      %v1695 = vld [vmem:[%s5 + $0x18] sm:$0xff]
      %v1697 = vsel %vm384, %v1695, 0
      %v1700 = vsel %vm394, %v1693, 0
      %v1703 = vsel %vm394, %v1694, 0
      %1705 = vmatprep.subr.mxu0 %v1703
      %1706 = vmatpush1.msra.mxu0 %v1700
      %1707 = vmatprep.subr.mxu0 0.0
      %1708 = vmatpush1.msra.mxu0 0.0
      %1709 = vmatprep.subr.mxu0 0.0
      %1710 = vmatpush1.msra.mxu0 0.0
      %1711 = vmatprep.subr.mxu0 0.0
      %1712 = vmatpush1.msra.mxu0 0.0
      %1713 = vmatprep.subr.mxu0 0.0
      %1714 = vmatpush1.msra.mxu0 0.0
      %1715 = vmatprep.subr.mxu0 0.0
      %1716 = vmatpush1.msra.mxu0 0.0
      %1717 = vmatprep.subr.mxu0 0.0
      %1718 = vmatpush1.msra.mxu0 0.0
      %1719 = vmatprep.subr.mxu0 0.0
      %1720 = vmatpush1.msra.mxu0 0.0
      %1721 = vmatprep.subr.mxu0 0.0
      %1722 = vmatpush1.msra.mxu0 0.0
      %1723 = vmatprep.subr.mxu0 0.0
      %1724 = vmatpush1.msra.mxu0 0.0
      %1725 = vmatprep.subr.mxu0 0.0
      %1726 = vmatpush1.msra.mxu0 0.0
      %1727 = vmatprep.subr.mxu0 0.0
      %1728 = vmatpush1.msra.mxu0 0.0
      %1729 = vmatprep.subr.mxu0 0.0
      %1730 = vmatpush1.msra.mxu0 0.0
      %1731 = vmatprep.subr.mxu0 0.0
      %1732 = vmatpush1.msra.mxu0 0.0
      %1733 = vmatprep.subr.mxu0 0.0
      %1734 = vmatpush1.msra.mxu0 0.0
      %1735 = vmatprep.subr.mxu0 0.0
      %1736 = vmatpush1.msra.mxu0 0.0
      %1737 = vmatprep.subr.mxu0 0.0
      %1738 = vmatpush1.msra.mxu0 0.0
      %1739 = vmatprep.subr.mxu0 0.0
      %1740 = vmatpush1.msra.mxu0 0.0
      %1741 = vmatprep.subr.mxu0 0.0
      %1742 = vmatpush1.msra.mxu0 0.0
      %1743 = vmatprep.subr.mxu0 0.0
      %1744 = vmatpush1.msra.mxu0 0.0
      %1745 = vmatprep.subr.mxu0 0.0
      %1746 = vmatpush1.msra.mxu0 0.0
      %1747 = vmatprep.subr.mxu0 0.0
      %1748 = vmatpush1.msra.mxu0 0.0
      %1749 = vmatprep.subr.mxu0 0.0
      %1750 = vmatpush1.msra.mxu0 0.0
      %1751 = vmatprep.subr.mxu0 0.0
      %1752 = vmatpush1.msra.mxu0 0.0
      %1753 = vmatprep.subr.mxu0 0.0
      %1754 = vmatpush1.msra.mxu0 0.0
      %1755 = vmatprep.subr.mxu0 0.0
      %1756 = vmatpush1.msra.mxu0 0.0
      %1757 = vmatprep.subr.mxu0 0.0
      %1758 = vmatpush1.msra.mxu0 0.0
      %1759 = vmatprep.subr.mxu0 0.0
      %1760 = vmatpush1.msra.mxu0 0.0
      %1761 = vmatprep.subr.mxu0 0.0
      %1762 = vmatpush1.msra.mxu0 0.0
      %1763 = vmatprep.subr.mxu0 0.0
      %1764 = vmatpush1.msra.mxu0 0.0
      %1765 = vmatprep.subr.mxu0 0.0
      %1766 = vmatpush1.msra.mxu0 0.0
      %1767 = vmatprep.subr.mxu0 0.0
      %1768 = vmatpush1.msra.mxu0 0.0
      %1769 = vmatprep.mubr.f32.mxu0 0.0
      %1770 = vmatmul.mubr.f32.gmra.mrb[0].mxu0 %v1697
      %v1771 = vpop.f32.mrb[0].mxu0
      %v1772 = vadd.f32 0.0, %v1771
      %v1773 = vpop.f32.mrb[0].mxu0
      %v1774 = vadd.f32 0.0, %v1773
      %1775 = vdwg.mxu0
      %v1776 = vadd.f32 %v1675, %v1772
      %v1777 = vadd.f32 %v1676, %v1774
      %v1778 = vld [vmem:[#allocation3] sm:$0xff]
      %v1779 = vld [vmem:[#allocation3 + $0x8] sm:$0xf]
      %vm1780 = vcmp.lt.s32.totalorder %v359, 14
      %vm1781 = vcmp.lt.s32.totalorder %v360, 14
      %v1782 = vsel %vm1780, 1, 0
      %v1783 = vsel %vm1781, 1, 0
      %vm1784 = vcmp.eq.s32.totalorder %v1782, 1
      %vm1785 = vcmp.eq.s32.totalorder %v1783, 1
      %v1788 = vcombine.high %v1778, %v1778
      %1789 = vrot.lane.b32.xlu0 %v1778, 124
      %v1790 = vpop.permute.xlu0 %1789
      %1791 = vrot.lane.b32.xlu0 %v1788, 124
      %v1792 = vpop.permute.xlu0 %1791
      %1793 = vrot.lane.b32.xlu0 %v1779, 124
      %v1794 = vpop.permute.xlu0 %1793
      %vm1795 = vcmask 1014784
      %v1796 = vsel %vm1795, %v1790, %v1792
      %v1797 = vsel %vm1795, %v1792, %v1794
      %v1800 = vsel %vm1784, %v1796, 0.0
      %v1801 = vsel %vm1785, %v1797, 0.0
      %v1802 = vld [vmem:[%s5 + $0x20] sm:$0xff]
      %v1804 = vsel %vm384, %v1802, 0
      %v1807 = vsel %vm394, %v1800, 0
      %v1810 = vsel %vm394, %v1801, 0
      %1812 = vmatprep.subr.mxu0 %v1810
      %1813 = vmatpush1.msra.mxu0 %v1807
      %1814 = vmatprep.subr.mxu0 0.0
      %1815 = vmatpush1.msra.mxu0 0.0
      %1816 = vmatprep.subr.mxu0 0.0
      %1817 = vmatpush1.msra.mxu0 0.0
      %1818 = vmatprep.subr.mxu0 0.0
      %1819 = vmatpush1.msra.mxu0 0.0
      %1820 = vmatprep.subr.mxu0 0.0
      %1821 = vmatpush1.msra.mxu0 0.0
      %1822 = vmatprep.subr.mxu0 0.0
      %1823 = vmatpush1.msra.mxu0 0.0
      %1824 = vmatprep.subr.mxu0 0.0
      %1825 = vmatpush1.msra.mxu0 0.0
      %1826 = vmatprep.subr.mxu0 0.0
      %1827 = vmatpush1.msra.mxu0 0.0
      %1828 = vmatprep.subr.mxu0 0.0
      %1829 = vmatpush1.msra.mxu0 0.0
      %1830 = vmatprep.subr.mxu0 0.0
      %1831 = vmatpush1.msra.mxu0 0.0
      %1832 = vmatprep.subr.mxu0 0.0
      %1833 = vmatpush1.msra.mxu0 0.0
      %1834 = vmatprep.subr.mxu0 0.0
      %1835 = vmatpush1.msra.mxu0 0.0
      %1836 = vmatprep.subr.mxu0 0.0
      %1837 = vmatpush1.msra.mxu0 0.0
      %1838 = vmatprep.subr.mxu0 0.0
      %1839 = vmatpush1.msra.mxu0 0.0
      %1840 = vmatprep.subr.mxu0 0.0
      %1841 = vmatpush1.msra.mxu0 0.0
      %1842 = vmatprep.subr.mxu0 0.0
      %1843 = vmatpush1.msra.mxu0 0.0
      %1844 = vmatprep.subr.mxu0 0.0
      %1845 = vmatpush1.msra.mxu0 0.0
      %1846 = vmatprep.subr.mxu0 0.0
      %1847 = vmatpush1.msra.mxu0 0.0
      %1848 = vmatprep.subr.mxu0 0.0
      %1849 = vmatpush1.msra.mxu0 0.0
      %1850 = vmatprep.subr.mxu0 0.0
      %1851 = vmatpush1.msra.mxu0 0.0
      %1852 = vmatprep.subr.mxu0 0.0
      %1853 = vmatpush1.msra.mxu0 0.0
      %1854 = vmatprep.subr.mxu0 0.0
      %1855 = vmatpush1.msra.mxu0 0.0
      %1856 = vmatprep.subr.mxu0 0.0
      %1857 = vmatpush1.msra.mxu0 0.0
      %1858 = vmatprep.subr.mxu0 0.0
      %1859 = vmatpush1.msra.mxu0 0.0
      %1860 = vmatprep.subr.mxu0 0.0
      %1861 = vmatpush1.msra.mxu0 0.0
      %1862 = vmatprep.subr.mxu0 0.0
      %1863 = vmatpush1.msra.mxu0 0.0
      %1864 = vmatprep.subr.mxu0 0.0
      %1865 = vmatpush1.msra.mxu0 0.0
      %1866 = vmatprep.subr.mxu0 0.0
      %1867 = vmatpush1.msra.mxu0 0.0
      %1868 = vmatprep.subr.mxu0 0.0
      %1869 = vmatpush1.msra.mxu0 0.0
      %1870 = vmatprep.subr.mxu0 0.0
      %1871 = vmatpush1.msra.mxu0 0.0
      %1872 = vmatprep.subr.mxu0 0.0
      %1873 = vmatpush1.msra.mxu0 0.0
      %1874 = vmatprep.subr.mxu0 0.0
      %1875 = vmatpush1.msra.mxu0 0.0
      %1876 = vmatprep.mubr.f32.mxu0 0.0
      %1877 = vmatmul.mubr.f32.gmra.mrb[0].mxu0 %v1804
      %v1878 = vpop.f32.mrb[0].mxu0
      %v1879 = vadd.f32 0.0, %v1878
      %v1880 = vpop.f32.mrb[0].mxu0
      %v1881 = vadd.f32 0.0, %v1880
      %1882 = vdwg.mxu0
      %v1883 = vadd.f32 %v1776, %v1879
      %v1884 = vadd.f32 %v1777, %v1881
      %v1885 = vld [vmem:[#allocation3] sm:$0xff]
      %v1886 = vld [vmem:[#allocation3 + $0x8] sm:$0xf]
      %v1889 = vcombine.high %v1885, %v1885
      %1890 = vrot.lane.b32.xlu0 %v1885, 112
      %v1891 = vpop.permute.xlu0 %1890
      %1892 = vrot.lane.b32.xlu0 %v1889, 112
      %v1893 = vpop.permute.xlu0 %1892
      %1894 = vrot.lane.b32.xlu0 %v1886, 112
      %v1895 = vpop.permute.xlu0 %1894
      %v1896 = vsel %vm800, %v1891, %v1893
      %v1897 = vsel %vm800, %v1893, %v1895
      %v1900 = vsel %vm1400, %v1896, 0.0
      %v1901 = vsel %vm1401, %v1897, 0.0
      %v1902 = vld [vmem:[%s5 + $0x28] sm:$0xff]
      %v1904 = vsel %vm384, %v1902, 0
      %v1907 = vsel %vm394, %v1900, 0
      %v1910 = vsel %vm394, %v1901, 0
      %1912 = vmatprep.subr.mxu0 %v1910
      %1913 = vmatpush1.msra.mxu0 %v1907
      %1914 = vmatprep.subr.mxu0 0.0
      %1915 = vmatpush1.msra.mxu0 0.0
      %1916 = vmatprep.subr.mxu0 0.0
      %1917 = vmatpush1.msra.mxu0 0.0
      %1918 = vmatprep.subr.mxu0 0.0
      %1919 = vmatpush1.msra.mxu0 0.0
      %1920 = vmatprep.subr.mxu0 0.0
      %1921 = vmatpush1.msra.mxu0 0.0
      %1922 = vmatprep.subr.mxu0 0.0
      %1923 = vmatpush1.msra.mxu0 0.0
      %1924 = vmatprep.subr.mxu0 0.0
      %1925 = vmatpush1.msra.mxu0 0.0
      %1926 = vmatprep.subr.mxu0 0.0
      %1927 = vmatpush1.msra.mxu0 0.0
      %1928 = vmatprep.subr.mxu0 0.0
      %1929 = vmatpush1.msra.mxu0 0.0
      %1930 = vmatprep.subr.mxu0 0.0
      %1931 = vmatpush1.msra.mxu0 0.0
      %1932 = vmatprep.subr.mxu0 0.0
      %1933 = vmatpush1.msra.mxu0 0.0
      %1934 = vmatprep.subr.mxu0 0.0
      %1935 = vmatpush1.msra.mxu0 0.0
      %1936 = vmatprep.subr.mxu0 0.0
      %1937 = vmatpush1.msra.mxu0 0.0
      %1938 = vmatprep.subr.mxu0 0.0
      %1939 = vmatpush1.msra.mxu0 0.0
      %1940 = vmatprep.subr.mxu0 0.0
      %1941 = vmatpush1.msra.mxu0 0.0
      %1942 = vmatprep.subr.mxu0 0.0
      %1943 = vmatpush1.msra.mxu0 0.0
      %1944 = vmatprep.subr.mxu0 0.0
      %1945 = vmatpush1.msra.mxu0 0.0
      %1946 = vmatprep.subr.mxu0 0.0
      %1947 = vmatpush1.msra.mxu0 0.0
      %1948 = vmatprep.subr.mxu0 0.0
      %1949 = vmatpush1.msra.mxu0 0.0
      %1950 = vmatprep.subr.mxu0 0.0
      %1951 = vmatpush1.msra.mxu0 0.0
      %1952 = vmatprep.subr.mxu0 0.0
      %1953 = vmatpush1.msra.mxu0 0.0
      %1954 = vmatprep.subr.mxu0 0.0
      %1955 = vmatpush1.msra.mxu0 0.0
      %1956 = vmatprep.subr.mxu0 0.0
      %1957 = vmatpush1.msra.mxu0 0.0
      %1958 = vmatprep.subr.mxu0 0.0
      %1959 = vmatpush1.msra.mxu0 0.0
      %1960 = vmatprep.subr.mxu0 0.0
      %1961 = vmatpush1.msra.mxu0 0.0
      %1962 = vmatprep.subr.mxu0 0.0
      %1963 = vmatpush1.msra.mxu0 0.0
      %1964 = vmatprep.subr.mxu0 0.0
      %1965 = vmatpush1.msra.mxu0 0.0
      %1966 = vmatprep.subr.mxu0 0.0
      %1967 = vmatpush1.msra.mxu0 0.0
      %1968 = vmatprep.subr.mxu0 0.0
      %1969 = vmatpush1.msra.mxu0 0.0
      %1970 = vmatprep.subr.mxu0 0.0
      %1971 = vmatpush1.msra.mxu0 0.0
      %1972 = vmatprep.subr.mxu0 0.0
      %1973 = vmatpush1.msra.mxu0 0.0
      %1974 = vmatprep.subr.mxu0 0.0
      %1975 = vmatpush1.msra.mxu0 0.0
      %1976 = vmatprep.mubr.f32.mxu0 0.0
      %1977 = vmatmul.mubr.f32.gmra.mrb[0].mxu0 %v1904
      %v1978 = vpop.f32.mrb[0].mxu0
      %v1979 = vadd.f32 0.0, %v1978
      %v1980 = vpop.f32.mrb[0].mxu0
      %v1981 = vadd.f32 0.0, %v1980
      %1982 = vdwg.mxu0
      %v1983 = vadd.f32 %v1883, %v1979
      %v1984 = vadd.f32 %v1884, %v1981
      %v1985 = vld [vmem:[#allocation3] sm:$0xff]
      %v1986 = vld [vmem:[#allocation3 + $0x8] sm:$0xf]
      %v1989 = vcombine.high %v1985, %v1985
      %1990 = vrot.lane.b32.xlu0 %v1985, 111
      %v1991 = vpop.permute.xlu0 %1990
      %1992 = vrot.lane.b32.xlu0 %v1989, 111
      %v1993 = vpop.permute.xlu0 %1992
      %1994 = vrot.lane.b32.xlu0 %v1986, 111
      %v1995 = vpop.permute.xlu0 %1994
      %v1996 = vsel %vm897, %v1991, %v1993
      %v1997 = vsel %vm897, %v1993, %v1995
      %v2000 = vsel %vm513, %v1996, 0.0
      %v2001 = vsel %vm514, %v1997, 0.0
      %v2002 = vld [vmem:[%s5 + $0x30] sm:$0xff]
      %v2004 = vsel %vm384, %v2002, 0
      %v2007 = vsel %vm394, %v2000, 0
      %v2010 = vsel %vm394, %v2001, 0
      %2012 = vmatprep.subr.mxu0 %v2010
      %2013 = vmatpush1.msra.mxu0 %v2007
      %2014 = vmatprep.subr.mxu0 0.0
      %2015 = vmatpush1.msra.mxu0 0.0
      %2016 = vmatprep.subr.mxu0 0.0
      %2017 = vmatpush1.msra.mxu0 0.0
      %2018 = vmatprep.subr.mxu0 0.0
      %2019 = vmatpush1.msra.mxu0 0.0
      %2020 = vmatprep.subr.mxu0 0.0
      %2021 = vmatpush1.msra.mxu0 0.0
      %2022 = vmatprep.subr.mxu0 0.0
      %2023 = vmatpush1.msra.mxu0 0.0
      %2024 = vmatprep.subr.mxu0 0.0
      %2025 = vmatpush1.msra.mxu0 0.0
      %2026 = vmatprep.subr.mxu0 0.0
      %2027 = vmatpush1.msra.mxu0 0.0
      %2028 = vmatprep.subr.mxu0 0.0
      %2029 = vmatpush1.msra.mxu0 0.0
      %2030 = vmatprep.subr.mxu0 0.0
      %2031 = vmatpush1.msra.mxu0 0.0
      %2032 = vmatprep.subr.mxu0 0.0
      %2033 = vmatpush1.msra.mxu0 0.0
      %2034 = vmatprep.subr.mxu0 0.0
      %2035 = vmatpush1.msra.mxu0 0.0
      %2036 = vmatprep.subr.mxu0 0.0
      %2037 = vmatpush1.msra.mxu0 0.0
      %2038 = vmatprep.subr.mxu0 0.0
      %2039 = vmatpush1.msra.mxu0 0.0
      %2040 = vmatprep.subr.mxu0 0.0
      %2041 = vmatpush1.msra.mxu0 0.0
      %2042 = vmatprep.subr.mxu0 0.0
      %2043 = vmatpush1.msra.mxu0 0.0
      %2044 = vmatprep.subr.mxu0 0.0
      %2045 = vmatpush1.msra.mxu0 0.0
      %2046 = vmatprep.subr.mxu0 0.0
      %2047 = vmatpush1.msra.mxu0 0.0
      %2048 = vmatprep.subr.mxu0 0.0
      %2049 = vmatpush1.msra.mxu0 0.0
      %2050 = vmatprep.subr.mxu0 0.0
      %2051 = vmatpush1.msra.mxu0 0.0
      %2052 = vmatprep.subr.mxu0 0.0
      %2053 = vmatpush1.msra.mxu0 0.0
      %2054 = vmatprep.subr.mxu0 0.0
      %2055 = vmatpush1.msra.mxu0 0.0
      %2056 = vmatprep.subr.mxu0 0.0
      %2057 = vmatpush1.msra.mxu0 0.0
      %2058 = vmatprep.subr.mxu0 0.0
      %2059 = vmatpush1.msra.mxu0 0.0
      %2060 = vmatprep.subr.mxu0 0.0
      %2061 = vmatpush1.msra.mxu0 0.0
      %2062 = vmatprep.subr.mxu0 0.0
      %2063 = vmatpush1.msra.mxu0 0.0
      %2064 = vmatprep.subr.mxu0 0.0
      %2065 = vmatpush1.msra.mxu0 0.0
      %2066 = vmatprep.subr.mxu0 0.0
      %2067 = vmatpush1.msra.mxu0 0.0
      %2068 = vmatprep.subr.mxu0 0.0
      %2069 = vmatpush1.msra.mxu0 0.0
      %2070 = vmatprep.subr.mxu0 0.0
      %2071 = vmatpush1.msra.mxu0 0.0
      %2072 = vmatprep.subr.mxu0 0.0
      %2073 = vmatpush1.msra.mxu0 0.0
      %2074 = vmatprep.subr.mxu0 0.0
      %2075 = vmatpush1.msra.mxu0 0.0
      %2076 = vmatprep.mubr.f32.mxu0 0.0
      %2077 = vmatmul.mubr.f32.gmra.mrb[0].mxu0 %v2004
      %v2078 = vpop.f32.mrb[0].mxu0
      %v2079 = vadd.f32 0.0, %v2078
      %v2080 = vpop.f32.mrb[0].mxu0
      %v2081 = vadd.f32 0.0, %v2080
      %2082 = vdwg.mxu0
      %v2083 = vadd.f32 %v1983, %v2079
      %v2084 = vadd.f32 %v1984, %v2081
      %v2085 = vld [vmem:[#allocation3] sm:$0xff]
      %v2086 = vld [vmem:[#allocation3 + $0x8] sm:$0xf]
      %v2087 = vld [vmem:[%s5 + $0x38] sm:$0xff]
      %v2090 = vcombine.high %v2085, %v2085
      %2091 = vrot.lane.b32.xlu0 %v2085, 110
      %v2092 = vpop.permute.xlu0 %2091
      %2093 = vrot.lane.b32.xlu0 %v2090, 110
      %v2094 = vpop.permute.xlu0 %2093
      %2095 = vrot.lane.b32.xlu0 %v2086, 110
      %v2096 = vpop.permute.xlu0 %2095
      %v2097 = vsel %vm986, %v2092, %v2094
      %v2098 = vsel %vm986, %v2094, %v2096
      %v2100 = vsel %vm384, %v2087, 0
      %v2102 = vsel %vm394, %v2097, 0
      %v2104 = vsel %vm394, %v2098, 0
      %2106 = vmatprep.subr.mxu0 %v2104
      %2107 = vmatpush1.msra.mxu0 %v2102
      %2108 = vmatprep.subr.mxu0 0.0
      %2109 = vmatpush1.msra.mxu0 0.0
      %2110 = vmatprep.subr.mxu0 0.0
      %2111 = vmatpush1.msra.mxu0 0.0
      %2112 = vmatprep.subr.mxu0 0.0
      %2113 = vmatpush1.msra.mxu0 0.0
      %2114 = vmatprep.subr.mxu0 0.0
      %2115 = vmatpush1.msra.mxu0 0.0
      %2116 = vmatprep.subr.mxu0 0.0
      %2117 = vmatpush1.msra.mxu0 0.0
      %2118 = vmatprep.subr.mxu0 0.0
      %2119 = vmatpush1.msra.mxu0 0.0
      %2120 = vmatprep.subr.mxu0 0.0
      %2121 = vmatpush1.msra.mxu0 0.0
      %2122 = vmatprep.subr.mxu0 0.0
      %2123 = vmatpush1.msra.mxu0 0.0
      %2124 = vmatprep.subr.mxu0 0.0
      %2125 = vmatpush1.msra.mxu0 0.0
      %2126 = vmatprep.subr.mxu0 0.0
      %2127 = vmatpush1.msra.mxu0 0.0
      %2128 = vmatprep.subr.mxu0 0.0
      %2129 = vmatpush1.msra.mxu0 0.0
      %2130 = vmatprep.subr.mxu0 0.0
      %2131 = vmatpush1.msra.mxu0 0.0
      %2132 = vmatprep.subr.mxu0 0.0
      %2133 = vmatpush1.msra.mxu0 0.0
      %2134 = vmatprep.subr.mxu0 0.0
      %2135 = vmatpush1.msra.mxu0 0.0
      %2136 = vmatprep.subr.mxu0 0.0
      %2137 = vmatpush1.msra.mxu0 0.0
      %2138 = vmatprep.subr.mxu0 0.0
      %2139 = vmatpush1.msra.mxu0 0.0
      %2140 = vmatprep.subr.mxu0 0.0
      %2141 = vmatpush1.msra.mxu0 0.0
      %2142 = vmatprep.subr.mxu0 0.0
      %2143 = vmatpush1.msra.mxu0 0.0
      %2144 = vmatprep.subr.mxu0 0.0
      %2145 = vmatpush1.msra.mxu0 0.0
      %2146 = vmatprep.subr.mxu0 0.0
      %2147 = vmatpush1.msra.mxu0 0.0
      %2148 = vmatprep.subr.mxu0 0.0
      %2149 = vmatpush1.msra.mxu0 0.0
      %2150 = vmatprep.subr.mxu0 0.0
      %2151 = vmatpush1.msra.mxu0 0.0
      %2152 = vmatprep.subr.mxu0 0.0
      %2153 = vmatpush1.msra.mxu0 0.0
      %2154 = vmatprep.subr.mxu0 0.0
      %2155 = vmatpush1.msra.mxu0 0.0
      %2156 = vmatprep.subr.mxu0 0.0
      %2157 = vmatpush1.msra.mxu0 0.0
      %2158 = vmatprep.subr.mxu0 0.0
      %2159 = vmatpush1.msra.mxu0 0.0
      %2160 = vmatprep.subr.mxu0 0.0
      %2161 = vmatpush1.msra.mxu0 0.0
      %2162 = vmatprep.subr.mxu0 0.0
      %2163 = vmatpush1.msra.mxu0 0.0
      %2164 = vmatprep.subr.mxu0 0.0
      %2165 = vmatpush1.msra.mxu0 0.0
      %2166 = vmatprep.subr.mxu0 0.0
      %2167 = vmatpush1.msra.mxu0 0.0
      %2168 = vmatprep.subr.mxu0 0.0
      %2169 = vmatpush1.msra.mxu0 0.0
      %2170 = vmatprep.mubr.f32.mxu0 0.0
      %2171 = vmatmul.mubr.f32.gmra.mrb[0].mxu0 %v2100
      %v2172 = vpop.f32.mrb[0].mxu0
      %v2173 = vadd.f32 0.0, %v2172
      %v2174 = vpop.f32.mrb[0].mxu0
      %v2175 = vadd.f32 0.0, %v2174
      %2176 = vdwg.mxu0
      %v2177 = vadd.f32 %v2083, %v2173
      %v2178 = vadd.f32 %v2084, %v2175
      %v2179 = vld [vmem:[#allocation3] sm:$0xff]
      %v2180 = vld [vmem:[#allocation3 + $0x8] sm:$0xf]
      %v2183 = vcombine.high %v2179, %v2179
      %2184 = vrot.lane.b32.xlu0 %v2179, 109
      %v2185 = vpop.permute.xlu0 %2184
      %2186 = vrot.lane.b32.xlu0 %v2183, 109
      %v2187 = vpop.permute.xlu0 %2186
      %2188 = vrot.lane.b32.xlu0 %v2180, 109
      %v2189 = vpop.permute.xlu0 %2188
      %vm2190 = vcmask 891904
      %v2191 = vsel %vm2190, %v2185, %v2187
      %v2192 = vsel %vm2190, %v2187, %v2189
      %v2195 = vsel %vm696, %v2191, 0.0
      %v2196 = vsel %vm697, %v2192, 0.0
      %v2197 = vld [vmem:[%s5 + $0x40] sm:$0xff]
      %v2199 = vsel %vm384, %v2197, 0
      %v2202 = vsel %vm394, %v2195, 0
      %v2205 = vsel %vm394, %v2196, 0
      %2207 = vmatprep.subr.mxu0 %v2205
      %2208 = vmatpush1.msra.mxu0 %v2202
      %2209 = vmatprep.subr.mxu0 0.0
      %2210 = vmatpush1.msra.mxu0 0.0
      %2211 = vmatprep.subr.mxu0 0.0
      %2212 = vmatpush1.msra.mxu0 0.0
      %2213 = vmatprep.subr.mxu0 0.0
      %2214 = vmatpush1.msra.mxu0 0.0
      %2215 = vmatprep.subr.mxu0 0.0
      %2216 = vmatpush1.msra.mxu0 0.0
      %2217 = vmatprep.subr.mxu0 0.0
      %2218 = vmatpush1.msra.mxu0 0.0
      %2219 = vmatprep.subr.mxu0 0.0
      %2220 = vmatpush1.msra.mxu0 0.0
      %2221 = vmatprep.subr.mxu0 0.0
      %2222 = vmatpush1.msra.mxu0 0.0
      %2223 = vmatprep.subr.mxu0 0.0
      %2224 = vmatpush1.msra.mxu0 0.0
      %2225 = vmatprep.subr.mxu0 0.0
      %2226 = vmatpush1.msra.mxu0 0.0
      %2227 = vmatprep.subr.mxu0 0.0
      %2228 = vmatpush1.msra.mxu0 0.0
      %2229 = vmatprep.subr.mxu0 0.0
      %2230 = vmatpush1.msra.mxu0 0.0
      %2231 = vmatprep.subr.mxu0 0.0
      %2232 = vmatpush1.msra.mxu0 0.0
      %2233 = vmatprep.subr.mxu0 0.0
      %2234 = vmatpush1.msra.mxu0 0.0
      %2235 = vmatprep.subr.mxu0 0.0
      %2236 = vmatpush1.msra.mxu0 0.0
      %2237 = vmatprep.subr.mxu0 0.0
      %2238 = vmatpush1.msra.mxu0 0.0
      %2239 = vmatprep.subr.mxu0 0.0
      %2240 = vmatpush1.msra.mxu0 0.0
      %2241 = vmatprep.subr.mxu0 0.0
      %2242 = vmatpush1.msra.mxu0 0.0
      %2243 = vmatprep.subr.mxu0 0.0
      %2244 = vmatpush1.msra.mxu0 0.0
      %2245 = vmatprep.subr.mxu0 0.0
      %2246 = vmatpush1.msra.mxu0 0.0
      %2247 = vmatprep.subr.mxu0 0.0
      %2248 = vmatpush1.msra.mxu0 0.0
      %2249 = vmatprep.subr.mxu0 0.0
      %2250 = vmatpush1.msra.mxu0 0.0
      %2251 = vmatprep.subr.mxu0 0.0
      %2252 = vmatpush1.msra.mxu0 0.0
      %2253 = vmatprep.subr.mxu0 0.0
      %2254 = vmatpush1.msra.mxu0 0.0
      %2255 = vmatprep.subr.mxu0 0.0
      %2256 = vmatpush1.msra.mxu0 0.0
      %2257 = vmatprep.subr.mxu0 0.0
      %2258 = vmatpush1.msra.mxu0 0.0
      %2259 = vmatprep.subr.mxu0 0.0
      %2260 = vmatpush1.msra.mxu0 0.0
      %2261 = vmatprep.subr.mxu0 0.0
      %2262 = vmatpush1.msra.mxu0 0.0
      %2263 = vmatprep.subr.mxu0 0.0
      %2264 = vmatpush1.msra.mxu0 0.0
      %2265 = vmatprep.subr.mxu0 0.0
      %2266 = vmatpush1.msra.mxu0 0.0
      %2267 = vmatprep.subr.mxu0 0.0
      %2268 = vmatpush1.msra.mxu0 0.0
      %2269 = vmatprep.subr.mxu0 0.0
      %2270 = vmatpush1.msra.mxu0 0.0
      %2271 = vmatprep.mubr.f32.mxu0 0.0
      %2272 = vmatmul.mubr.f32.gmra.mrb[0].mxu0 %v2199
      %v2273 = vpop.f32.mrb[0].mxu0
      %v2274 = vadd.f32 0.0, %v2273
      %v2275 = vpop.f32.mrb[0].mxu0
      %v2276 = vadd.f32 0.0, %v2275
      %2277 = vdwg.mxu0
      %v2278 = vadd.f32 %v2177, %v2274
      %v2279 = vadd.f32 %v2178, %v2276
      %v2280 = vld [vmem:[#allocation3] sm:$0xff]
      %v2281 = vld [vmem:[#allocation3 + $0x8] sm:$0xf]
      %v2284 = vcombine.high %v2280, %v2280
      %2285 = vrot.lane.b32.xlu0 %v2280, 108
      %v2286 = vpop.permute.xlu0 %2285
      %2287 = vrot.lane.b32.xlu0 %v2284, 108
      %v2288 = vpop.permute.xlu0 %2287
      %2289 = vrot.lane.b32.xlu0 %v2281, 108
      %v2290 = vpop.permute.xlu0 %2289
      %vm2291 = vcmask 883712
      %v2292 = vsel %vm2291, %v2286, %v2288
      %v2293 = vsel %vm2291, %v2288, %v2290
      %v2296 = vsel %vm1784, %v2292, 0.0
      %v2297 = vsel %vm1785, %v2293, 0.0
      %v2298 = vld [vmem:[%s5 + $0x48] sm:$0xff]
      %v2300 = vsel %vm384, %v2298, 0
      %v2303 = vsel %vm394, %v2296, 0
      %v2306 = vsel %vm394, %v2297, 0
      %2308 = vmatprep.subr.mxu0 %v2306
      %2309 = vmatpush1.msra.mxu0 %v2303
      %2310 = vmatprep.subr.mxu0 0.0
      %2311 = vmatpush1.msra.mxu0 0.0
      %2312 = vmatprep.subr.mxu0 0.0
      %2313 = vmatpush1.msra.mxu0 0.0
      %2314 = vmatprep.subr.mxu0 0.0
      %2315 = vmatpush1.msra.mxu0 0.0
      %2316 = vmatprep.subr.mxu0 0.0
      %2317 = vmatpush1.msra.mxu0 0.0
      %2318 = vmatprep.subr.mxu0 0.0
      %2319 = vmatpush1.msra.mxu0 0.0
      %2320 = vmatprep.subr.mxu0 0.0
      %2321 = vmatpush1.msra.mxu0 0.0
      %2322 = vmatprep.subr.mxu0 0.0
      %2323 = vmatpush1.msra.mxu0 0.0
      %2324 = vmatprep.subr.mxu0 0.0
      %2325 = vmatpush1.msra.mxu0 0.0
      %2326 = vmatprep.subr.mxu0 0.0
      %2327 = vmatpush1.msra.mxu0 0.0
      %2328 = vmatprep.subr.mxu0 0.0
      %2329 = vmatpush1.msra.mxu0 0.0
      %2330 = vmatprep.subr.mxu0 0.0
      %2331 = vmatpush1.msra.mxu0 0.0
      %2332 = vmatprep.subr.mxu0 0.0
      %2333 = vmatpush1.msra.mxu0 0.0
      %2334 = vmatprep.subr.mxu0 0.0
      %2335 = vmatpush1.msra.mxu0 0.0
      %2336 = vmatprep.subr.mxu0 0.0
      %2337 = vmatpush1.msra.mxu0 0.0
      %2338 = vmatprep.subr.mxu0 0.0
      %2339 = vmatpush1.msra.mxu0 0.0
      %2340 = vmatprep.subr.mxu0 0.0
      %2341 = vmatpush1.msra.mxu0 0.0
      %2342 = vmatprep.subr.mxu0 0.0
      %2343 = vmatpush1.msra.mxu0 0.0
      %2344 = vmatprep.subr.mxu0 0.0
      %2345 = vmatpush1.msra.mxu0 0.0
      %2346 = vmatprep.subr.mxu0 0.0
      %2347 = vmatpush1.msra.mxu0 0.0
      %2348 = vmatprep.subr.mxu0 0.0
      %2349 = vmatpush1.msra.mxu0 0.0
      %2350 = vmatprep.subr.mxu0 0.0
      %2351 = vmatpush1.msra.mxu0 0.0
      %2352 = vmatprep.subr.mxu0 0.0
      %2353 = vmatpush1.msra.mxu0 0.0
      %2354 = vmatprep.subr.mxu0 0.0
      %2355 = vmatpush1.msra.mxu0 0.0
      %2356 = vmatprep.subr.mxu0 0.0
      %2357 = vmatpush1.msra.mxu0 0.0
      %2358 = vmatprep.subr.mxu0 0.0
      %2359 = vmatpush1.msra.mxu0 0.0
      %2360 = vmatprep.subr.mxu0 0.0
      %2361 = vmatpush1.msra.mxu0 0.0
      %2362 = vmatprep.subr.mxu0 0.0
      %2363 = vmatpush1.msra.mxu0 0.0
      %2364 = vmatprep.subr.mxu0 0.0
      %2365 = vmatpush1.msra.mxu0 0.0
      %2366 = vmatprep.subr.mxu0 0.0
      %2367 = vmatpush1.msra.mxu0 0.0
      %2368 = vmatprep.subr.mxu0 0.0
      %2369 = vmatpush1.msra.mxu0 0.0
      %2370 = vmatprep.subr.mxu0 0.0
      %2371 = vmatpush1.msra.mxu0 0.0
      %2372 = vmatprep.mubr.f32.mxu0 0.0
      %2373 = vmatmul.mubr.f32.gmra.mrb[0].mxu0 %v2300
      %v2374 = vpop.f32.mrb[0].mxu0
      %v2375 = vadd.f32 0.0, %v2374
      %v2376 = vpop.f32.mrb[0].mxu0
      %v2377 = vadd.f32 0.0, %v2376
      %2378 = vdwg.mxu0
      %v2379 = vadd.f32 %v2278, %v2375
      %v2380 = vadd.f32 %v2279, %v2377
      %v2381 = vld [vmem:[#allocation3] sm:$0xff]
      %v2382 = vld [vmem:[#allocation3 + $0x8] sm:$0xf]
      %v2385 = vcombine.high %v2381, %v2381
      %2386 = vrot.lane.b32.xlu0 %v2381, 96
      %v2387 = vpop.permute.xlu0 %2386
      %2388 = vrot.lane.b32.xlu0 %v2385, 96
      %v2389 = vpop.permute.xlu0 %2388
      %2390 = vrot.lane.b32.xlu0 %v2382, 96
      %v2391 = vpop.permute.xlu0 %2390
      %v2392 = vsel %vm1082, %v2387, %v2389
      %v2393 = vsel %vm1082, %v2389, %v2391
      %v2396 = vsel %vm1400, %v2392, 0.0
      %v2397 = vsel %vm1401, %v2393, 0.0
      %v2398 = vld [vmem:[%s5 + $0x50] sm:$0xff]
      %v2400 = vsel %vm384, %v2398, 0
      %v2403 = vsel %vm394, %v2396, 0
      %v2406 = vsel %vm394, %v2397, 0
      %2408 = vmatprep.subr.mxu0 %v2406
      %2409 = vmatpush1.msra.mxu0 %v2403
      %2410 = vmatprep.subr.mxu0 0.0
      %2411 = vmatpush1.msra.mxu0 0.0
      %2412 = vmatprep.subr.mxu0 0.0
      %2413 = vmatpush1.msra.mxu0 0.0
      %2414 = vmatprep.subr.mxu0 0.0
      %2415 = vmatpush1.msra.mxu0 0.0
      %2416 = vmatprep.subr.mxu0 0.0
      %2417 = vmatpush1.msra.mxu0 0.0
      %2418 = vmatprep.subr.mxu0 0.0
      %2419 = vmatpush1.msra.mxu0 0.0
      %2420 = vmatprep.subr.mxu0 0.0
      %2421 = vmatpush1.msra.mxu0 0.0
      %2422 = vmatprep.subr.mxu0 0.0
      %2423 = vmatpush1.msra.mxu0 0.0
      %2424 = vmatprep.subr.mxu0 0.0
      %2425 = vmatpush1.msra.mxu0 0.0
      %2426 = vmatprep.subr.mxu0 0.0
      %2427 = vmatpush1.msra.mxu0 0.0
      %2428 = vmatprep.subr.mxu0 0.0
      %2429 = vmatpush1.msra.mxu0 0.0
      %2430 = vmatprep.subr.mxu0 0.0
      %2431 = vmatpush1.msra.mxu0 0.0
      %2432 = vmatprep.subr.mxu0 0.0
      %2433 = vmatpush1.msra.mxu0 0.0
      %2434 = vmatprep.subr.mxu0 0.0
      %2435 = vmatpush1.msra.mxu0 0.0
      %2436 = vmatprep.subr.mxu0 0.0
      %2437 = vmatpush1.msra.mxu0 0.0
      %2438 = vmatprep.subr.mxu0 0.0
      %2439 = vmatpush1.msra.mxu0 0.0
      %2440 = vmatprep.subr.mxu0 0.0
      %2441 = vmatpush1.msra.mxu0 0.0
      %2442 = vmatprep.subr.mxu0 0.0
      %2443 = vmatpush1.msra.mxu0 0.0
      %2444 = vmatprep.subr.mxu0 0.0
      %2445 = vmatpush1.msra.mxu0 0.0
      %2446 = vmatprep.subr.mxu0 0.0
      %2447 = vmatpush1.msra.mxu0 0.0
      %2448 = vmatprep.subr.mxu0 0.0
      %2449 = vmatpush1.msra.mxu0 0.0
      %2450 = vmatprep.subr.mxu0 0.0
      %2451 = vmatpush1.msra.mxu0 0.0
      %2452 = vmatprep.subr.mxu0 0.0
      %2453 = vmatpush1.msra.mxu0 0.0
      %2454 = vmatprep.subr.mxu0 0.0
      %2455 = vmatpush1.msra.mxu0 0.0
      %2456 = vmatprep.subr.mxu0 0.0
      %2457 = vmatpush1.msra.mxu0 0.0
      %2458 = vmatprep.subr.mxu0 0.0
      %2459 = vmatpush1.msra.mxu0 0.0
      %2460 = vmatprep.subr.mxu0 0.0
      %2461 = vmatpush1.msra.mxu0 0.0
      %2462 = vmatprep.subr.mxu0 0.0
      %2463 = vmatpush1.msra.mxu0 0.0
      %2464 = vmatprep.subr.mxu0 0.0
      %2465 = vmatpush1.msra.mxu0 0.0
      %2466 = vmatprep.subr.mxu0 0.0
      %2467 = vmatpush1.msra.mxu0 0.0
      %2468 = vmatprep.subr.mxu0 0.0
      %2469 = vmatpush1.msra.mxu0 0.0
      %2470 = vmatprep.subr.mxu0 0.0
      %2471 = vmatpush1.msra.mxu0 0.0
      %2472 = vmatprep.mubr.f32.mxu0 0.0
      %2473 = vmatmul.mubr.f32.gmra.mrb[0].mxu0 %v2400
      %v2474 = vpop.f32.mrb[0].mxu0
      %v2475 = vadd.f32 0.0, %v2474
      %v2476 = vpop.f32.mrb[0].mxu0
      %v2477 = vadd.f32 0.0, %v2476
      %2478 = vdwg.mxu0
      %v2479 = vadd.f32 %v2379, %v2475
      %v2480 = vadd.f32 %v2380, %v2477
      %v2481 = vld [vmem:[#allocation3] sm:$0xff]
      %v2482 = vld [vmem:[#allocation3 + $0x8] sm:$0xf]
      %v2485 = vcombine.high %v2481, %v2481
      %2486 = vrot.lane.b32.xlu0 %v2481, 95
      %v2487 = vpop.permute.xlu0 %2486
      %2488 = vrot.lane.b32.xlu0 %v2485, 95
      %v2489 = vpop.permute.xlu0 %2488
      %2490 = vrot.lane.b32.xlu0 %v2482, 95
      %v2491 = vpop.permute.xlu0 %2490
      %v2492 = vsel %vm1179, %v2487, %v2489
      %v2493 = vsel %vm1179, %v2489, %v2491
      %v2496 = vsel %vm513, %v2492, 0.0
      %v2497 = vsel %vm514, %v2493, 0.0
      %v2498 = vld [vmem:[%s5 + $0x58] sm:$0xff]
      %v2500 = vsel %vm384, %v2498, 0
      %v2503 = vsel %vm394, %v2496, 0
      %v2506 = vsel %vm394, %v2497, 0
      %2508 = vmatprep.subr.mxu0 %v2506
      %2509 = vmatpush1.msra.mxu0 %v2503
      %2510 = vmatprep.subr.mxu0 0.0
      %2511 = vmatpush1.msra.mxu0 0.0
      %2512 = vmatprep.subr.mxu0 0.0
      %2513 = vmatpush1.msra.mxu0 0.0
      %2514 = vmatprep.subr.mxu0 0.0
      %2515 = vmatpush1.msra.mxu0 0.0
      %2516 = vmatprep.subr.mxu0 0.0
      %2517 = vmatpush1.msra.mxu0 0.0
      %2518 = vmatprep.subr.mxu0 0.0
      %2519 = vmatpush1.msra.mxu0 0.0
      %2520 = vmatprep.subr.mxu0 0.0
      %2521 = vmatpush1.msra.mxu0 0.0
      %2522 = vmatprep.subr.mxu0 0.0
      %2523 = vmatpush1.msra.mxu0 0.0
      %2524 = vmatprep.subr.mxu0 0.0
      %2525 = vmatpush1.msra.mxu0 0.0
      %2526 = vmatprep.subr.mxu0 0.0
      %2527 = vmatpush1.msra.mxu0 0.0
      %2528 = vmatprep.subr.mxu0 0.0
      %2529 = vmatpush1.msra.mxu0 0.0
      %2530 = vmatprep.subr.mxu0 0.0
      %2531 = vmatpush1.msra.mxu0 0.0
      %2532 = vmatprep.subr.mxu0 0.0
      %2533 = vmatpush1.msra.mxu0 0.0
      %2534 = vmatprep.subr.mxu0 0.0
      %2535 = vmatpush1.msra.mxu0 0.0
      %2536 = vmatprep.subr.mxu0 0.0
      %2537 = vmatpush1.msra.mxu0 0.0
      %2538 = vmatprep.subr.mxu0 0.0
      %2539 = vmatpush1.msra.mxu0 0.0
      %2540 = vmatprep.subr.mxu0 0.0
      %2541 = vmatpush1.msra.mxu0 0.0
      %2542 = vmatprep.subr.mxu0 0.0
      %2543 = vmatpush1.msra.mxu0 0.0
      %2544 = vmatprep.subr.mxu0 0.0
      %2545 = vmatpush1.msra.mxu0 0.0
      %2546 = vmatprep.subr.mxu0 0.0
      %2547 = vmatpush1.msra.mxu0 0.0
      %2548 = vmatprep.subr.mxu0 0.0
      %2549 = vmatpush1.msra.mxu0 0.0
      %2550 = vmatprep.subr.mxu0 0.0
      %2551 = vmatpush1.msra.mxu0 0.0
      %2552 = vmatprep.subr.mxu0 0.0
      %2553 = vmatpush1.msra.mxu0 0.0
      %2554 = vmatprep.subr.mxu0 0.0
      %2555 = vmatpush1.msra.mxu0 0.0
      %2556 = vmatprep.subr.mxu0 0.0
      %2557 = vmatpush1.msra.mxu0 0.0
      %2558 = vmatprep.subr.mxu0 0.0
      %2559 = vmatpush1.msra.mxu0 0.0
      %2560 = vmatprep.subr.mxu0 0.0
      %2561 = vmatpush1.msra.mxu0 0.0
      %2562 = vmatprep.subr.mxu0 0.0
      %2563 = vmatpush1.msra.mxu0 0.0
      %2564 = vmatprep.subr.mxu0 0.0
      %2565 = vmatpush1.msra.mxu0 0.0
      %2566 = vmatprep.subr.mxu0 0.0
      %2567 = vmatpush1.msra.mxu0 0.0
      %2568 = vmatprep.subr.mxu0 0.0
      %2569 = vmatpush1.msra.mxu0 0.0
      %2570 = vmatprep.subr.mxu0 0.0
      %2571 = vmatpush1.msra.mxu0 0.0
      %2572 = vmatprep.mubr.f32.mxu0 0.0
      %2573 = vmatmul.mubr.f32.gmra.mrb[0].mxu0 %v2500
      %v2574 = vpop.f32.mrb[0].mxu0
      %v2575 = vadd.f32 0.0, %v2574
      %v2576 = vpop.f32.mrb[0].mxu0
      %v2577 = vadd.f32 0.0, %v2576
      %2578 = vdwg.mxu0
      %v2579 = vadd.f32 %v2479, %v2575
      %v2580 = vadd.f32 %v2480, %v2577
      %v2581 = vld [vmem:[#allocation3] sm:$0xff]
      %v2582 = vld [vmem:[#allocation3 + $0x8] sm:$0xf]
      %v2583 = vld [vmem:[%s5 + $0x60] sm:$0xff]
      %v2586 = vcombine.high %v2581, %v2581
      %2587 = vrot.lane.b32.xlu0 %v2581, 94
      %v2588 = vpop.permute.xlu0 %2587
      %2589 = vrot.lane.b32.xlu0 %v2586, 94
      %v2590 = vpop.permute.xlu0 %2589
      %2591 = vrot.lane.b32.xlu0 %v2582, 94
      %v2592 = vpop.permute.xlu0 %2591
      %v2593 = vsel %vm1268, %v2588, %v2590
      %v2594 = vsel %vm1268, %v2590, %v2592
      %v2596 = vsel %vm384, %v2583, 0
      %v2598 = vsel %vm394, %v2593, 0
      %v2600 = vsel %vm394, %v2594, 0
      %2602 = vmatprep.subr.mxu0 %v2600
      %2603 = vmatpush1.msra.mxu0 %v2598
      %2604 = vmatprep.subr.mxu0 0.0
      %2605 = vmatpush1.msra.mxu0 0.0
      %2606 = vmatprep.subr.mxu0 0.0
      %2607 = vmatpush1.msra.mxu0 0.0
      %2608 = vmatprep.subr.mxu0 0.0
      %2609 = vmatpush1.msra.mxu0 0.0
      %2610 = vmatprep.subr.mxu0 0.0
      %2611 = vmatpush1.msra.mxu0 0.0
      %2612 = vmatprep.subr.mxu0 0.0
      %2613 = vmatpush1.msra.mxu0 0.0
      %2614 = vmatprep.subr.mxu0 0.0
      %2615 = vmatpush1.msra.mxu0 0.0
      %2616 = vmatprep.subr.mxu0 0.0
      %2617 = vmatpush1.msra.mxu0 0.0
      %2618 = vmatprep.subr.mxu0 0.0
      %2619 = vmatpush1.msra.mxu0 0.0
      %2620 = vmatprep.subr.mxu0 0.0
      %2621 = vmatpush1.msra.mxu0 0.0
      %2622 = vmatprep.subr.mxu0 0.0
      %2623 = vmatpush1.msra.mxu0 0.0
      %2624 = vmatprep.subr.mxu0 0.0
      %2625 = vmatpush1.msra.mxu0 0.0
      %2626 = vmatprep.subr.mxu0 0.0
      %2627 = vmatpush1.msra.mxu0 0.0
      %2628 = vmatprep.subr.mxu0 0.0
      %2629 = vmatpush1.msra.mxu0 0.0
      %2630 = vmatprep.subr.mxu0 0.0
      %2631 = vmatpush1.msra.mxu0 0.0
      %2632 = vmatprep.subr.mxu0 0.0
      %2633 = vmatpush1.msra.mxu0 0.0
      %2634 = vmatprep.subr.mxu0 0.0
      %2635 = vmatpush1.msra.mxu0 0.0
      %2636 = vmatprep.subr.mxu0 0.0
      %2637 = vmatpush1.msra.mxu0 0.0
      %2638 = vmatprep.subr.mxu0 0.0
      %2639 = vmatpush1.msra.mxu0 0.0
      %2640 = vmatprep.subr.mxu0 0.0
      %2641 = vmatpush1.msra.mxu0 0.0
      %2642 = vmatprep.subr.mxu0 0.0
      %2643 = vmatpush1.msra.mxu0 0.0
      %2644 = vmatprep.subr.mxu0 0.0
      %2645 = vmatpush1.msra.mxu0 0.0
      %2646 = vmatprep.subr.mxu0 0.0
      %2647 = vmatpush1.msra.mxu0 0.0
      %2648 = vmatprep.subr.mxu0 0.0
      %2649 = vmatpush1.msra.mxu0 0.0
      %2650 = vmatprep.subr.mxu0 0.0
      %2651 = vmatpush1.msra.mxu0 0.0
      %2652 = vmatprep.subr.mxu0 0.0
      %2653 = vmatpush1.msra.mxu0 0.0
      %2654 = vmatprep.subr.mxu0 0.0
      %2655 = vmatpush1.msra.mxu0 0.0
      %2656 = vmatprep.subr.mxu0 0.0
      %2657 = vmatpush1.msra.mxu0 0.0
      %2658 = vmatprep.subr.mxu0 0.0
      %2659 = vmatpush1.msra.mxu0 0.0
      %2660 = vmatprep.subr.mxu0 0.0
      %2661 = vmatpush1.msra.mxu0 0.0
      %2662 = vmatprep.subr.mxu0 0.0
      %2663 = vmatpush1.msra.mxu0 0.0
      %2664 = vmatprep.subr.mxu0 0.0
      %2665 = vmatpush1.msra.mxu0 0.0
      %2666 = vmatprep.mubr.f32.mxu0 0.0
      %2667 = vmatmul.mubr.f32.gmra.mrb[0].mxu0 %v2596
      %v2668 = vpop.f32.mrb[0].mxu0
      %v2669 = vadd.f32 0.0, %v2668
      %v2670 = vpop.f32.mrb[0].mxu0
      %v2671 = vadd.f32 0.0, %v2670
      %2672 = vdwg.mxu0
      %v2673 = vadd.f32 %v2579, %v2669
      %v2674 = vadd.f32 %v2580, %v2671
      %v2675 = vld [vmem:[#allocation3] sm:$0xff]
      %v2676 = vld [vmem:[#allocation3 + $0x8] sm:$0xf]
      %v2679 = vcombine.high %v2675, %v2675
      %2680 = vrot.lane.b32.xlu0 %v2675, 93
      %v2681 = vpop.permute.xlu0 %2680
      %2682 = vrot.lane.b32.xlu0 %v2679, 93
      %v2683 = vpop.permute.xlu0 %2682
      %2684 = vrot.lane.b32.xlu0 %v2676, 93
      %v2685 = vpop.permute.xlu0 %2684
      %vm2686 = vcmask 760832
      %v2687 = vsel %vm2686, %v2681, %v2683
      %v2688 = vsel %vm2686, %v2683, %v2685
      %v2691 = vsel %vm696, %v2687, 0.0
      %v2692 = vsel %vm697, %v2688, 0.0
      %v2693 = vld [vmem:[%s5 + $0x68] sm:$0xff]
      %v2695 = vsel %vm384, %v2693, 0
      %v2698 = vsel %vm394, %v2691, 0
      %v2701 = vsel %vm394, %v2692, 0
      %2703 = vmatprep.subr.mxu0 %v2701
      %2704 = vmatpush1.msra.mxu0 %v2698
      %2705 = vmatprep.subr.mxu0 0.0
      %2706 = vmatpush1.msra.mxu0 0.0
      %2707 = vmatprep.subr.mxu0 0.0
      %2708 = vmatpush1.msra.mxu0 0.0
      %2709 = vmatprep.subr.mxu0 0.0
      %2710 = vmatpush1.msra.mxu0 0.0
      %2711 = vmatprep.subr.mxu0 0.0
      %2712 = vmatpush1.msra.mxu0 0.0
      %2713 = vmatprep.subr.mxu0 0.0
      %2714 = vmatpush1.msra.mxu0 0.0
      %2715 = vmatprep.subr.mxu0 0.0
      %2716 = vmatpush1.msra.mxu0 0.0
      %2717 = vmatprep.subr.mxu0 0.0
      %2718 = vmatpush1.msra.mxu0 0.0
      %2719 = vmatprep.subr.mxu0 0.0
      %2720 = vmatpush1.msra.mxu0 0.0
      %2721 = vmatprep.subr.mxu0 0.0
      %2722 = vmatpush1.msra.mxu0 0.0
      %2723 = vmatprep.subr.mxu0 0.0
      %2724 = vmatpush1.msra.mxu0 0.0
      %2725 = vmatprep.subr.mxu0 0.0
      %2726 = vmatpush1.msra.mxu0 0.0
      %2727 = vmatprep.subr.mxu0 0.0
      %2728 = vmatpush1.msra.mxu0 0.0
      %2729 = vmatprep.subr.mxu0 0.0
      %2730 = vmatpush1.msra.mxu0 0.0
      %2731 = vmatprep.subr.mxu0 0.0
      %2732 = vmatpush1.msra.mxu0 0.0
      %2733 = vmatprep.subr.mxu0 0.0
      %2734 = vmatpush1.msra.mxu0 0.0
      %2735 = vmatprep.subr.mxu0 0.0
      %2736 = vmatpush1.msra.mxu0 0.0
      %2737 = vmatprep.subr.mxu0 0.0
      %2738 = vmatpush1.msra.mxu0 0.0
      %2739 = vmatprep.subr.mxu0 0.0
      %2740 = vmatpush1.msra.mxu0 0.0
      %2741 = vmatprep.subr.mxu0 0.0
      %2742 = vmatpush1.msra.mxu0 0.0
      %2743 = vmatprep.subr.mxu0 0.0
      %2744 = vmatpush1.msra.mxu0 0.0
      %2745 = vmatprep.subr.mxu0 0.0
      %2746 = vmatpush1.msra.mxu0 0.0
      %2747 = vmatprep.subr.mxu0 0.0
      %2748 = vmatpush1.msra.mxu0 0.0
      %2749 = vmatprep.subr.mxu0 0.0
      %2750 = vmatpush1.msra.mxu0 0.0
      %2751 = vmatprep.subr.mxu0 0.0
      %2752 = vmatpush1.msra.mxu0 0.0
      %2753 = vmatprep.subr.mxu0 0.0
      %2754 = vmatpush1.msra.mxu0 0.0
      %2755 = vmatprep.subr.mxu0 0.0
      %2756 = vmatpush1.msra.mxu0 0.0
      %2757 = vmatprep.subr.mxu0 0.0
      %2758 = vmatpush1.msra.mxu0 0.0
      %2759 = vmatprep.subr.mxu0 0.0
      %2760 = vmatpush1.msra.mxu0 0.0
      %2761 = vmatprep.subr.mxu0 0.0
      %2762 = vmatpush1.msra.mxu0 0.0
      %2763 = vmatprep.subr.mxu0 0.0
      %2764 = vmatpush1.msra.mxu0 0.0
      %2765 = vmatprep.subr.mxu0 0.0
      %2766 = vmatpush1.msra.mxu0 0.0
      %2767 = vmatprep.mubr.f32.mxu0 0.0
      %2768 = vmatmul.mubr.f32.gmra.mrb[0].mxu0 %v2695
      %v2769 = vpop.f32.mrb[0].mxu0
      %v2770 = vadd.f32 0.0, %v2769
      %v2771 = vpop.f32.mrb[0].mxu0
      %v2772 = vadd.f32 0.0, %v2771
      %2773 = vdwg.mxu0
      %v2774 = vadd.f32 %v2673, %v2770
      %v2775 = vadd.f32 %v2674, %v2772
      %v2776 = vld [vmem:[#allocation3] sm:$0xff]
      %v2777 = vld [vmem:[#allocation3 + $0x8] sm:$0xf]
      %v2780 = vcombine.high %v2776, %v2776
      %2781 = vrot.lane.b32.xlu0 %v2776, 92
      %v2782 = vpop.permute.xlu0 %2781
      %2783 = vrot.lane.b32.xlu0 %v2780, 92
      %v2784 = vpop.permute.xlu0 %2783
      %2785 = vrot.lane.b32.xlu0 %v2777, 92
      %v2786 = vpop.permute.xlu0 %2785
      %vm2787 = vcmask 752640
      %v2788 = vsel %vm2787, %v2782, %v2784
      %v2789 = vsel %vm2787, %v2784, %v2786
      %v2792 = vsel %vm1784, %v2788, 0.0
      %v2793 = vsel %vm1785, %v2789, 0.0
      %v2794 = vld [vmem:[%s5 + $0x70] sm:$0xff]
      %v2796 = vsel %vm384, %v2794, 0
      %v2799 = vsel %vm394, %v2792, 0
      %v2802 = vsel %vm394, %v2793, 0
      %2804 = vmatprep.subr.mxu0 %v2802
      %2805 = vmatpush1.msra.mxu0 %v2799
      %2806 = vmatprep.subr.mxu0 0.0
      %2807 = vmatpush1.msra.mxu0 0.0
      %2808 = vmatprep.subr.mxu0 0.0
      %2809 = vmatpush1.msra.mxu0 0.0
      %2810 = vmatprep.subr.mxu0 0.0
      %2811 = vmatpush1.msra.mxu0 0.0
      %2812 = vmatprep.subr.mxu0 0.0
      %2813 = vmatpush1.msra.mxu0 0.0
      %2814 = vmatprep.subr.mxu0 0.0
      %2815 = vmatpush1.msra.mxu0 0.0
      %2816 = vmatprep.subr.mxu0 0.0
      %2817 = vmatpush1.msra.mxu0 0.0
      %2818 = vmatprep.subr.mxu0 0.0
      %2819 = vmatpush1.msra.mxu0 0.0
      %2820 = vmatprep.subr.mxu0 0.0
      %2821 = vmatpush1.msra.mxu0 0.0
      %2822 = vmatprep.subr.mxu0 0.0
      %2823 = vmatpush1.msra.mxu0 0.0
      %2824 = vmatprep.subr.mxu0 0.0
      %2825 = vmatpush1.msra.mxu0 0.0
      %2826 = vmatprep.subr.mxu0 0.0
      %2827 = vmatpush1.msra.mxu0 0.0
      %2828 = vmatprep.subr.mxu0 0.0
      %2829 = vmatpush1.msra.mxu0 0.0
      %2830 = vmatprep.subr.mxu0 0.0
      %2831 = vmatpush1.msra.mxu0 0.0
      %2832 = vmatprep.subr.mxu0 0.0
      %2833 = vmatpush1.msra.mxu0 0.0
      %2834 = vmatprep.subr.mxu0 0.0
      %2835 = vmatpush1.msra.mxu0 0.0
      %2836 = vmatprep.subr.mxu0 0.0
      %2837 = vmatpush1.msra.mxu0 0.0
      %2838 = vmatprep.subr.mxu0 0.0
      %2839 = vmatpush1.msra.mxu0 0.0
      %2840 = vmatprep.subr.mxu0 0.0
      %2841 = vmatpush1.msra.mxu0 0.0
      %2842 = vmatprep.subr.mxu0 0.0
      %2843 = vmatpush1.msra.mxu0 0.0
      %2844 = vmatprep.subr.mxu0 0.0
      %2845 = vmatpush1.msra.mxu0 0.0
      %2846 = vmatprep.subr.mxu0 0.0
      %2847 = vmatpush1.msra.mxu0 0.0
      %2848 = vmatprep.subr.mxu0 0.0
      %2849 = vmatpush1.msra.mxu0 0.0
      %2850 = vmatprep.subr.mxu0 0.0
      %2851 = vmatpush1.msra.mxu0 0.0
      %2852 = vmatprep.subr.mxu0 0.0
      %2853 = vmatpush1.msra.mxu0 0.0
      %2854 = vmatprep.subr.mxu0 0.0
      %2855 = vmatpush1.msra.mxu0 0.0
      %2856 = vmatprep.subr.mxu0 0.0
      %2857 = vmatpush1.msra.mxu0 0.0
      %2858 = vmatprep.subr.mxu0 0.0
      %2859 = vmatpush1.msra.mxu0 0.0
      %2860 = vmatprep.subr.mxu0 0.0
      %2861 = vmatpush1.msra.mxu0 0.0
      %2862 = vmatprep.subr.mxu0 0.0
      %2863 = vmatpush1.msra.mxu0 0.0
      %2864 = vmatprep.subr.mxu0 0.0
      %2865 = vmatpush1.msra.mxu0 0.0
      %2866 = vmatprep.subr.mxu0 0.0
      %2867 = vmatpush1.msra.mxu0 0.0
      %2868 = vmatprep.mubr.f32.mxu0 0.0
      %2869 = vmatmul.mubr.f32.gmra.mrb[0].mxu0 %v2796
      %v2870 = vpop.f32.mrb[0].mxu0
      %v2871 = vadd.f32 0.0, %v2870
      %v2872 = vpop.f32.mrb[0].mxu0
      %v2873 = vadd.f32 0.0, %v2872
      %2874 = vdwg.mxu0
      %v2875 = vadd.f32 %v2774, %v2871
      %v2876 = vadd.f32 %v2775, %v2873
      %v2877 = vld [vmem:[#allocation3] sm:$0xff]
      %v2878 = vld [vmem:[#allocation3 + $0x8] sm:$0xf]
      %v2881 = vcombine.high %v2877, %v2877
      %2882 = vrot.lane.b32.xlu0 %v2877, 80
      %v2883 = vpop.permute.xlu0 %2882
      %2884 = vrot.lane.b32.xlu0 %v2881, 80
      %v2885 = vpop.permute.xlu0 %2884
      %2886 = vrot.lane.b32.xlu0 %v2878, 80
      %v2887 = vpop.permute.xlu0 %2886
      %vm2888 = vcmask 654336
      %v2889 = vsel %vm2888, %v2883, %v2885
      %v2890 = vsel %vm2888, %v2885, %v2887
      %v2893 = vsel %vm1400, %v2889, 0.0
      %v2894 = vsel %vm1401, %v2890, 0.0
      %v2895 = vld [vmem:[%s5 + $0x78] sm:$0xff]
      %v2897 = vsel %vm384, %v2895, 0
      %v2900 = vsel %vm394, %v2893, 0
      %v2903 = vsel %vm394, %v2894, 0
      %2905 = vmatprep.subr.mxu0 %v2903
      %2906 = vmatpush1.msra.mxu0 %v2900
      %2907 = vmatprep.subr.mxu0 0.0
      %2908 = vmatpush1.msra.mxu0 0.0
      %2909 = vmatprep.subr.mxu0 0.0
      %2910 = vmatpush1.msra.mxu0 0.0
      %2911 = vmatprep.subr.mxu0 0.0
      %2912 = vmatpush1.msra.mxu0 0.0
      %2913 = vmatprep.subr.mxu0 0.0
      %2914 = vmatpush1.msra.mxu0 0.0
      %2915 = vmatprep.subr.mxu0 0.0
      %2916 = vmatpush1.msra.mxu0 0.0
      %2917 = vmatprep.subr.mxu0 0.0
      %2918 = vmatpush1.msra.mxu0 0.0
      %2919 = vmatprep.subr.mxu0 0.0
      %2920 = vmatpush1.msra.mxu0 0.0
      %2921 = vmatprep.subr.mxu0 0.0
      %2922 = vmatpush1.msra.mxu0 0.0
      %2923 = vmatprep.subr.mxu0 0.0
      %2924 = vmatpush1.msra.mxu0 0.0
      %2925 = vmatprep.subr.mxu0 0.0
      %2926 = vmatpush1.msra.mxu0 0.0
      %2927 = vmatprep.subr.mxu0 0.0
      %2928 = vmatpush1.msra.mxu0 0.0
      %2929 = vmatprep.subr.mxu0 0.0
      %2930 = vmatpush1.msra.mxu0 0.0
      %2931 = vmatprep.subr.mxu0 0.0
      %2932 = vmatpush1.msra.mxu0 0.0
      %2933 = vmatprep.subr.mxu0 0.0
      %2934 = vmatpush1.msra.mxu0 0.0
      %2935 = vmatprep.subr.mxu0 0.0
      %2936 = vmatpush1.msra.mxu0 0.0
      %2937 = vmatprep.subr.mxu0 0.0
      %2938 = vmatpush1.msra.mxu0 0.0
      %2939 = vmatprep.subr.mxu0 0.0
      %2940 = vmatpush1.msra.mxu0 0.0
      %2941 = vmatprep.subr.mxu0 0.0
      %2942 = vmatpush1.msra.mxu0 0.0
      %2943 = vmatprep.subr.mxu0 0.0
      %2944 = vmatpush1.msra.mxu0 0.0
      %2945 = vmatprep.subr.mxu0 0.0
      %2946 = vmatpush1.msra.mxu0 0.0
      %2947 = vmatprep.subr.mxu0 0.0
      %2948 = vmatpush1.msra.mxu0 0.0
      %2949 = vmatprep.subr.mxu0 0.0
      %2950 = vmatpush1.msra.mxu0 0.0
      %2951 = vmatprep.subr.mxu0 0.0
      %2952 = vmatpush1.msra.mxu0 0.0
      %2953 = vmatprep.subr.mxu0 0.0
      %2954 = vmatpush1.msra.mxu0 0.0
      %2955 = vmatprep.subr.mxu0 0.0
      %2956 = vmatpush1.msra.mxu0 0.0
      %2957 = vmatprep.subr.mxu0 0.0
      %2958 = vmatpush1.msra.mxu0 0.0
      %2959 = vmatprep.subr.mxu0 0.0
      %2960 = vmatpush1.msra.mxu0 0.0
      %2961 = vmatprep.subr.mxu0 0.0
      %2962 = vmatpush1.msra.mxu0 0.0
      %2963 = vmatprep.subr.mxu0 0.0
      %2964 = vmatpush1.msra.mxu0 0.0
      %2965 = vmatprep.subr.mxu0 0.0
      %2966 = vmatpush1.msra.mxu0 0.0
      %2967 = vmatprep.subr.mxu0 0.0
      %2968 = vmatpush1.msra.mxu0 0.0
      %2969 = vmatprep.mubr.f32.mxu0 0.0
      %2970 = vmatmul.mubr.f32.gmra.mrb[0].mxu0 %v2897
      %v2971 = vpop.f32.mrb[0].mxu0
      %v2972 = vadd.f32 0.0, %v2971
      %v2973 = vpop.f32.mrb[0].mxu0
      %v2974 = vadd.f32 0.0, %v2973
      %2975 = vdwg.mxu0
      %v2976 = vadd.f32 %v2875, %v2972
      %v2977 = vadd.f32 %v2876, %v2974
      %v2978 = vld [vmem:[#allocation3] sm:$0xff]
      %v2979 = vld [vmem:[#allocation3 + $0x8] sm:$0xf]
      %v2982 = vcombine.high %v2978, %v2978
      %2983 = vrot.lane.b32.xlu0 %v2978, 79
      %v2984 = vpop.permute.xlu0 %2983
      %2985 = vrot.lane.b32.xlu0 %v2982, 79
      %v2986 = vpop.permute.xlu0 %2985
      %2987 = vrot.lane.b32.xlu0 %v2979, 79
      %v2988 = vpop.permute.xlu0 %2987
      %vm2989 = vcmask 646144
      %v2990 = vsel %vm2989, %v2984, %v2986
      %v2991 = vsel %vm2989, %v2986, %v2988
      %v2994 = vsel %vm513, %v2990, 0.0
      %v2995 = vsel %vm514, %v2991, 0.0
      %v2996 = vld [vmem:[%s5 + $0x80] sm:$0xff]
      %v2998 = vsel %vm384, %v2996, 0
      %v3001 = vsel %vm394, %v2994, 0
      %v3004 = vsel %vm394, %v2995, 0
      %3006 = vmatprep.subr.mxu0 %v3004
      %3007 = vmatpush1.msra.mxu0 %v3001
      %3008 = vmatprep.subr.mxu0 0.0
      %3009 = vmatpush1.msra.mxu0 0.0
      %3010 = vmatprep.subr.mxu0 0.0
      %3011 = vmatpush1.msra.mxu0 0.0
      %3012 = vmatprep.subr.mxu0 0.0
      %3013 = vmatpush1.msra.mxu0 0.0
      %3014 = vmatprep.subr.mxu0 0.0
      %3015 = vmatpush1.msra.mxu0 0.0
      %3016 = vmatprep.subr.mxu0 0.0
      %3017 = vmatpush1.msra.mxu0 0.0
      %3018 = vmatprep.subr.mxu0 0.0
      %3019 = vmatpush1.msra.mxu0 0.0
      %3020 = vmatprep.subr.mxu0 0.0
      %3021 = vmatpush1.msra.mxu0 0.0
      %3022 = vmatprep.subr.mxu0 0.0
      %3023 = vmatpush1.msra.mxu0 0.0
      %3024 = vmatprep.subr.mxu0 0.0
      %3025 = vmatpush1.msra.mxu0 0.0
      %3026 = vmatprep.subr.mxu0 0.0
      %3027 = vmatpush1.msra.mxu0 0.0
      %3028 = vmatprep.subr.mxu0 0.0
      %3029 = vmatpush1.msra.mxu0 0.0
      %3030 = vmatprep.subr.mxu0 0.0
      %3031 = vmatpush1.msra.mxu0 0.0
      %3032 = vmatprep.subr.mxu0 0.0
      %3033 = vmatpush1.msra.mxu0 0.0
      %3034 = vmatprep.subr.mxu0 0.0
      %3035 = vmatpush1.msra.mxu0 0.0
      %3036 = vmatprep.subr.mxu0 0.0
      %3037 = vmatpush1.msra.mxu0 0.0
      %3038 = vmatprep.subr.mxu0 0.0
      %3039 = vmatpush1.msra.mxu0 0.0
      %3040 = vmatprep.subr.mxu0 0.0
      %3041 = vmatpush1.msra.mxu0 0.0
      %3042 = vmatprep.subr.mxu0 0.0
      %3043 = vmatpush1.msra.mxu0 0.0
      %3044 = vmatprep.subr.mxu0 0.0
      %3045 = vmatpush1.msra.mxu0 0.0
      %3046 = vmatprep.subr.mxu0 0.0
      %3047 = vmatpush1.msra.mxu0 0.0
      %3048 = vmatprep.subr.mxu0 0.0
      %3049 = vmatpush1.msra.mxu0 0.0
      %3050 = vmatprep.subr.mxu0 0.0
      %3051 = vmatpush1.msra.mxu0 0.0
      %3052 = vmatprep.subr.mxu0 0.0
      %3053 = vmatpush1.msra.mxu0 0.0
      %3054 = vmatprep.subr.mxu0 0.0
      %3055 = vmatpush1.msra.mxu0 0.0
      %3056 = vmatprep.subr.mxu0 0.0
      %3057 = vmatpush1.msra.mxu0 0.0
      %3058 = vmatprep.subr.mxu0 0.0
      %3059 = vmatpush1.msra.mxu0 0.0
      %3060 = vmatprep.subr.mxu0 0.0
      %3061 = vmatpush1.msra.mxu0 0.0
      %3062 = vmatprep.subr.mxu0 0.0
      %3063 = vmatpush1.msra.mxu0 0.0
      %3064 = vmatprep.subr.mxu0 0.0
      %3065 = vmatpush1.msra.mxu0 0.0
      %3066 = vmatprep.subr.mxu0 0.0
      %3067 = vmatpush1.msra.mxu0 0.0
      %3068 = vmatprep.subr.mxu0 0.0
      %3069 = vmatpush1.msra.mxu0 0.0
      %3070 = vmatprep.mubr.f32.mxu0 0.0
      %3071 = vmatmul.mubr.f32.gmra.mrb[0].mxu0 %v2998
      %v3072 = vpop.f32.mrb[0].mxu0
      %v3073 = vadd.f32 0.0, %v3072
      %v3074 = vpop.f32.mrb[0].mxu0
      %v3075 = vadd.f32 0.0, %v3074
      %3076 = vdwg.mxu0
      %v3077 = vadd.f32 %v2976, %v3073
      %v3078 = vadd.f32 %v2977, %v3075
      %v3079 = vld [vmem:[#allocation3] sm:$0xff]
      %v3080 = vld [vmem:[#allocation3 + $0x8] sm:$0xf]
      %v3081 = vld [vmem:[%s5 + $0x88] sm:$0xff]
      %v3084 = vcombine.high %v3079, %v3079
      %3085 = vrot.lane.b32.xlu0 %v3079, 78
      %v3086 = vpop.permute.xlu0 %3085
      %3087 = vrot.lane.b32.xlu0 %v3084, 78
      %v3088 = vpop.permute.xlu0 %3087
      %3089 = vrot.lane.b32.xlu0 %v3080, 78
      %v3090 = vpop.permute.xlu0 %3089
      %vm3091 = vcmask 637952
      %v3092 = vsel %vm3091, %v3086, %v3088
      %v3093 = vsel %vm3091, %v3088, %v3090
      %v3095 = vsel %vm384, %v3081, 0
      %v3097 = vsel %vm394, %v3092, 0
      %v3099 = vsel %vm394, %v3093, 0
      %3101 = vmatprep.subr.mxu0 %v3099
      %3102 = vmatpush1.msra.mxu0 %v3097
      %3103 = vmatprep.subr.mxu0 0.0
      %3104 = vmatpush1.msra.mxu0 0.0
      %3105 = vmatprep.subr.mxu0 0.0
      %3106 = vmatpush1.msra.mxu0 0.0
      %3107 = vmatprep.subr.mxu0 0.0
      %3108 = vmatpush1.msra.mxu0 0.0
      %3109 = vmatprep.subr.mxu0 0.0
      %3110 = vmatpush1.msra.mxu0 0.0
      %3111 = vmatprep.subr.mxu0 0.0
      %3112 = vmatpush1.msra.mxu0 0.0
      %3113 = vmatprep.subr.mxu0 0.0
      %3114 = vmatpush1.msra.mxu0 0.0
      %3115 = vmatprep.subr.mxu0 0.0
      %3116 = vmatpush1.msra.mxu0 0.0
      %3117 = vmatprep.subr.mxu0 0.0
      %3118 = vmatpush1.msra.mxu0 0.0
      %3119 = vmatprep.subr.mxu0 0.0
      %3120 = vmatpush1.msra.mxu0 0.0
      %3121 = vmatprep.subr.mxu0 0.0
      %3122 = vmatpush1.msra.mxu0 0.0
      %3123 = vmatprep.subr.mxu0 0.0
      %3124 = vmatpush1.msra.mxu0 0.0
      %3125 = vmatprep.subr.mxu0 0.0
      %3126 = vmatpush1.msra.mxu0 0.0
      %3127 = vmatprep.subr.mxu0 0.0
      %3128 = vmatpush1.msra.mxu0 0.0
      %3129 = vmatprep.subr.mxu0 0.0
      %3130 = vmatpush1.msra.mxu0 0.0
      %3131 = vmatprep.subr.mxu0 0.0
      %3132 = vmatpush1.msra.mxu0 0.0
      %3133 = vmatprep.subr.mxu0 0.0
      %3134 = vmatpush1.msra.mxu0 0.0
      %3135 = vmatprep.subr.mxu0 0.0
      %3136 = vmatpush1.msra.mxu0 0.0
      %3137 = vmatprep.subr.mxu0 0.0
      %3138 = vmatpush1.msra.mxu0 0.0
      %3139 = vmatprep.subr.mxu0 0.0
      %3140 = vmatpush1.msra.mxu0 0.0
      %3141 = vmatprep.subr.mxu0 0.0
      %3142 = vmatpush1.msra.mxu0 0.0
      %3143 = vmatprep.subr.mxu0 0.0
      %3144 = vmatpush1.msra.mxu0 0.0
      %3145 = vmatprep.subr.mxu0 0.0
      %3146 = vmatpush1.msra.mxu0 0.0
      %3147 = vmatprep.subr.mxu0 0.0
      %3148 = vmatpush1.msra.mxu0 0.0
      %3149 = vmatprep.subr.mxu0 0.0
      %3150 = vmatpush1.msra.mxu0 0.0
      %3151 = vmatprep.subr.mxu0 0.0
      %3152 = vmatpush1.msra.mxu0 0.0
      %3153 = vmatprep.subr.mxu0 0.0
      %3154 = vmatpush1.msra.mxu0 0.0
      %3155 = vmatprep.subr.mxu0 0.0
      %3156 = vmatpush1.msra.mxu0 0.0
      %3157 = vmatprep.subr.mxu0 0.0
      %3158 = vmatpush1.msra.mxu0 0.0
      %3159 = vmatprep.subr.mxu0 0.0
      %3160 = vmatpush1.msra.mxu0 0.0
      %3161 = vmatprep.subr.mxu0 0.0
      %3162 = vmatpush1.msra.mxu0 0.0
      %3163 = vmatprep.subr.mxu0 0.0
      %3164 = vmatpush1.msra.mxu0 0.0
      %3165 = vmatprep.mubr.f32.mxu0 0.0
      %3166 = vmatmul.mubr.f32.gmra.mrb[0].mxu0 %v3095
      %v3167 = vpop.f32.mrb[0].mxu0
      %v3168 = vadd.f32 0.0, %v3167
      %v3169 = vpop.f32.mrb[0].mxu0
      %v3170 = vadd.f32 0.0, %v3169
      %3171 = vdwg.mxu0
      %v3172 = vadd.f32 %v3077, %v3168
      %v3173 = vadd.f32 %v3078, %v3170
      %v3174 = vld [vmem:[#allocation3] sm:$0xff]
      %v3175 = vld [vmem:[#allocation3 + $0x8] sm:$0xf]
      %v3178 = vcombine.high %v3174, %v3174
      %3179 = vrot.lane.b32.xlu0 %v3174, 77
      %v3180 = vpop.permute.xlu0 %3179
      %3181 = vrot.lane.b32.xlu0 %v3178, 77
      %v3182 = vpop.permute.xlu0 %3181
      %3183 = vrot.lane.b32.xlu0 %v3175, 77
      %v3184 = vpop.permute.xlu0 %3183
      %vm3185 = vcmask 629760
      %v3186 = vsel %vm3185, %v3180, %v3182
      %v3187 = vsel %vm3185, %v3182, %v3184
      %v3190 = vsel %vm696, %v3186, 0.0
      %v3191 = vsel %vm697, %v3187, 0.0
      %v3192 = vld [vmem:[%s5 + $0x90] sm:$0xff]
      %v3194 = vsel %vm384, %v3192, 0
      %v3197 = vsel %vm394, %v3190, 0
      %v3200 = vsel %vm394, %v3191, 0
      %3202 = vmatprep.subr.mxu0 %v3200
      %3203 = vmatpush1.msra.mxu0 %v3197
      %3204 = vmatprep.subr.mxu0 0.0
      %3205 = vmatpush1.msra.mxu0 0.0
      %3206 = vmatprep.subr.mxu0 0.0
      %3207 = vmatpush1.msra.mxu0 0.0
      %3208 = vmatprep.subr.mxu0 0.0
      %3209 = vmatpush1.msra.mxu0 0.0
      %3210 = vmatprep.subr.mxu0 0.0
      %3211 = vmatpush1.msra.mxu0 0.0
      %3212 = vmatprep.subr.mxu0 0.0
      %3213 = vmatpush1.msra.mxu0 0.0
      %3214 = vmatprep.subr.mxu0 0.0
      %3215 = vmatpush1.msra.mxu0 0.0
      %3216 = vmatprep.subr.mxu0 0.0
      %3217 = vmatpush1.msra.mxu0 0.0
      %3218 = vmatprep.subr.mxu0 0.0
      %3219 = vmatpush1.msra.mxu0 0.0
      %3220 = vmatprep.subr.mxu0 0.0
      %3221 = vmatpush1.msra.mxu0 0.0
      %3222 = vmatprep.subr.mxu0 0.0
      %3223 = vmatpush1.msra.mxu0 0.0
      %3224 = vmatprep.subr.mxu0 0.0
      %3225 = vmatpush1.msra.mxu0 0.0
      %3226 = vmatprep.subr.mxu0 0.0
      %3227 = vmatpush1.msra.mxu0 0.0
      %3228 = vmatprep.subr.mxu0 0.0
      %3229 = vmatpush1.msra.mxu0 0.0
      %3230 = vmatprep.subr.mxu0 0.0
      %3231 = vmatpush1.msra.mxu0 0.0
      %3232 = vmatprep.subr.mxu0 0.0
      %3233 = vmatpush1.msra.mxu0 0.0
      %3234 = vmatprep.subr.mxu0 0.0
      %3235 = vmatpush1.msra.mxu0 0.0
      %3236 = vmatprep.subr.mxu0 0.0
      %3237 = vmatpush1.msra.mxu0 0.0
      %3238 = vmatprep.subr.mxu0 0.0
      %3239 = vmatpush1.msra.mxu0 0.0
      %3240 = vmatprep.subr.mxu0 0.0
      %3241 = vmatpush1.msra.mxu0 0.0
      %3242 = vmatprep.subr.mxu0 0.0
      %3243 = vmatpush1.msra.mxu0 0.0
      %3244 = vmatprep.subr.mxu0 0.0
      %3245 = vmatpush1.msra.mxu0 0.0
      %3246 = vmatprep.subr.mxu0 0.0
      %3247 = vmatpush1.msra.mxu0 0.0
      %3248 = vmatprep.subr.mxu0 0.0
      %3249 = vmatpush1.msra.mxu0 0.0
      %3250 = vmatprep.subr.mxu0 0.0
      %3251 = vmatpush1.msra.mxu0 0.0
      %3252 = vmatprep.subr.mxu0 0.0
      %3253 = vmatpush1.msra.mxu0 0.0
      %3254 = vmatprep.subr.mxu0 0.0
      %3255 = vmatpush1.msra.mxu0 0.0
      %3256 = vmatprep.subr.mxu0 0.0
      %3257 = vmatpush1.msra.mxu0 0.0
      %3258 = vmatprep.subr.mxu0 0.0
      %3259 = vmatpush1.msra.mxu0 0.0
      %3260 = vmatprep.subr.mxu0 0.0
      %3261 = vmatpush1.msra.mxu0 0.0
      %3262 = vmatprep.subr.mxu0 0.0
      %3263 = vmatpush1.msra.mxu0 0.0
      %3264 = vmatprep.subr.mxu0 0.0
      %3265 = vmatpush1.msra.mxu0 0.0
      %3266 = vmatprep.mubr.f32.mxu0 0.0
      %3267 = vmatmul.mubr.f32.gmra.mrb[0].mxu0 %v3194
      %v3268 = vpop.f32.mrb[0].mxu0
      %v3269 = vadd.f32 0.0, %v3268
      %v3270 = vpop.f32.mrb[0].mxu0
      %v3271 = vadd.f32 0.0, %v3270
      %3272 = vdwg.mxu0
      %v3273 = vadd.f32 %v3172, %v3269
      %v3274 = vadd.f32 %v3173, %v3271
      %v3275 = vld [vmem:[#allocation3] sm:$0xff]
      %v3276 = vld [vmem:[#allocation3 + $0x8] sm:$0xf]
      %v3279 = vcombine.high %v3275, %v3275
      %3280 = vrot.lane.b32.xlu0 %v3275, 76
      %v3281 = vpop.permute.xlu0 %3280
      %3282 = vrot.lane.b32.xlu0 %v3279, 76
      %v3283 = vpop.permute.xlu0 %3282
      %3284 = vrot.lane.b32.xlu0 %v3276, 76
      %v3285 = vpop.permute.xlu0 %3284
      %vm3286 = vcmask 621568
      %v3287 = vsel %vm3286, %v3281, %v3283
      %v3288 = vsel %vm3286, %v3283, %v3285
      %v3291 = vsel %vm1784, %v3287, 0.0
      %v3292 = vsel %vm1785, %v3288, 0.0
      %v3293 = vld [vmem:[%s5 + $0x98] sm:$0xff]
      %v3295 = vsel %vm384, %v3293, 0
      %v3298 = vsel %vm394, %v3291, 0
      %v3301 = vsel %vm394, %v3292, 0
      %3303 = vmatprep.subr.mxu0 %v3301
      %3304 = vmatpush1.msra.mxu0 %v3298
      %3305 = vmatprep.subr.mxu0 0.0
      %3306 = vmatpush1.msra.mxu0 0.0
      %3307 = vmatprep.subr.mxu0 0.0
      %3308 = vmatpush1.msra.mxu0 0.0
      %3309 = vmatprep.subr.mxu0 0.0
      %3310 = vmatpush1.msra.mxu0 0.0
      %3311 = vmatprep.subr.mxu0 0.0
      %3312 = vmatpush1.msra.mxu0 0.0
      %3313 = vmatprep.subr.mxu0 0.0
      %3314 = vmatpush1.msra.mxu0 0.0
      %3315 = vmatprep.subr.mxu0 0.0
      %3316 = vmatpush1.msra.mxu0 0.0
      %3317 = vmatprep.subr.mxu0 0.0
      %3318 = vmatpush1.msra.mxu0 0.0
      %3319 = vmatprep.subr.mxu0 0.0
      %3320 = vmatpush1.msra.mxu0 0.0
      %3321 = vmatprep.subr.mxu0 0.0
      %3322 = vmatpush1.msra.mxu0 0.0
      %3323 = vmatprep.subr.mxu0 0.0
      %3324 = vmatpush1.msra.mxu0 0.0
      %3325 = vmatprep.subr.mxu0 0.0
      %3326 = vmatpush1.msra.mxu0 0.0
      %3327 = vmatprep.subr.mxu0 0.0
      %3328 = vmatpush1.msra.mxu0 0.0
      %3329 = vmatprep.subr.mxu0 0.0
      %3330 = vmatpush1.msra.mxu0 0.0
      %3331 = vmatprep.subr.mxu0 0.0
      %3332 = vmatpush1.msra.mxu0 0.0
      %3333 = vmatprep.subr.mxu0 0.0
      %3334 = vmatpush1.msra.mxu0 0.0
      %3335 = vmatprep.subr.mxu0 0.0
      %3336 = vmatpush1.msra.mxu0 0.0
      %3337 = vmatprep.subr.mxu0 0.0
      %3338 = vmatpush1.msra.mxu0 0.0
      %3339 = vmatprep.subr.mxu0 0.0
      %3340 = vmatpush1.msra.mxu0 0.0
      %3341 = vmatprep.subr.mxu0 0.0
      %3342 = vmatpush1.msra.mxu0 0.0
      %3343 = vmatprep.subr.mxu0 0.0
      %3344 = vmatpush1.msra.mxu0 0.0
      %3345 = vmatprep.subr.mxu0 0.0
      %3346 = vmatpush1.msra.mxu0 0.0
      %3347 = vmatprep.subr.mxu0 0.0
      %3348 = vmatpush1.msra.mxu0 0.0
      %3349 = vmatprep.subr.mxu0 0.0
      %3350 = vmatpush1.msra.mxu0 0.0
      %3351 = vmatprep.subr.mxu0 0.0
      %3352 = vmatpush1.msra.mxu0 0.0
      %3353 = vmatprep.subr.mxu0 0.0
      %3354 = vmatpush1.msra.mxu0 0.0
      %3355 = vmatprep.subr.mxu0 0.0
      %3356 = vmatpush1.msra.mxu0 0.0
      %3357 = vmatprep.subr.mxu0 0.0
      %3358 = vmatpush1.msra.mxu0 0.0
      %3359 = vmatprep.subr.mxu0 0.0
      %3360 = vmatpush1.msra.mxu0 0.0
      %3361 = vmatprep.subr.mxu0 0.0
      %3362 = vmatpush1.msra.mxu0 0.0
      %3363 = vmatprep.subr.mxu0 0.0
      %3364 = vmatpush1.msra.mxu0 0.0
      %3365 = vmatprep.subr.mxu0 0.0
      %3366 = vmatpush1.msra.mxu0 0.0
      %3367 = vmatprep.mubr.f32.mxu0 0.0
      %3368 = vmatmul.mubr.f32.gmra.mrb[0].mxu0 %v3295
      %v3369 = vpop.f32.mrb[0].mxu0
      %v3370 = vadd.f32 0.0, %v3369
      %v3371 = vpop.f32.mrb[0].mxu0
      %v3372 = vadd.f32 0.0, %v3371
      %3373 = vdwg.mxu0
      %v3374 = vadd.f32 %v3273, %v3370
      %v3375 = vadd.f32 %v3274, %v3372
      %v3376 = vld [vmem:[#allocation3] sm:$0xff]
      %v3377 = vld [vmem:[#allocation3 + $0x8] sm:$0xf]
      %v3380 = vcombine.high %v3376, %v3376
      %3381 = vrot.lane.b32.xlu0 %v3376, 64
      %v3382 = vpop.permute.xlu0 %3381
      %3383 = vrot.lane.b32.xlu0 %v3380, 64
      %v3384 = vpop.permute.xlu0 %3383
      %3385 = vrot.lane.b32.xlu0 %v3377, 64
      %v3386 = vpop.permute.xlu0 %3385
      %vm3387 = vcmask 523264
      %v3388 = vsel %vm3387, %v3382, %v3384
      %v3389 = vsel %vm3387, %v3384, %v3386
      %v3392 = vsel %vm1400, %v3388, 0.0
      %v3393 = vsel %vm1401, %v3389, 0.0
      %v3394 = vld [vmem:[%s5 + $0xa0] sm:$0xff]
      %v3396 = vsel %vm384, %v3394, 0
      %v3399 = vsel %vm394, %v3392, 0
      %v3402 = vsel %vm394, %v3393, 0
      %3404 = vmatprep.subr.mxu0 %v3402
      %3405 = vmatpush1.msra.mxu0 %v3399
      %3406 = vmatprep.subr.mxu0 0.0
      %3407 = vmatpush1.msra.mxu0 0.0
      %3408 = vmatprep.subr.mxu0 0.0
      %3409 = vmatpush1.msra.mxu0 0.0
      %3410 = vmatprep.subr.mxu0 0.0
      %3411 = vmatpush1.msra.mxu0 0.0
      %3412 = vmatprep.subr.mxu0 0.0
      %3413 = vmatpush1.msra.mxu0 0.0
      %3414 = vmatprep.subr.mxu0 0.0
      %3415 = vmatpush1.msra.mxu0 0.0
      %3416 = vmatprep.subr.mxu0 0.0
      %3417 = vmatpush1.msra.mxu0 0.0
      %3418 = vmatprep.subr.mxu0 0.0
      %3419 = vmatpush1.msra.mxu0 0.0
      %3420 = vmatprep.subr.mxu0 0.0
      %3421 = vmatpush1.msra.mxu0 0.0
      %3422 = vmatprep.subr.mxu0 0.0
      %3423 = vmatpush1.msra.mxu0 0.0
      %3424 = vmatprep.subr.mxu0 0.0
      %3425 = vmatpush1.msra.mxu0 0.0
      %3426 = vmatprep.subr.mxu0 0.0
      %3427 = vmatpush1.msra.mxu0 0.0
      %3428 = vmatprep.subr.mxu0 0.0
      %3429 = vmatpush1.msra.mxu0 0.0
      %3430 = vmatprep.subr.mxu0 0.0
      %3431 = vmatpush1.msra.mxu0 0.0
      %3432 = vmatprep.subr.mxu0 0.0
      %3433 = vmatpush1.msra.mxu0 0.0
      %3434 = vmatprep.subr.mxu0 0.0
      %3435 = vmatpush1.msra.mxu0 0.0
      %3436 = vmatprep.subr.mxu0 0.0
      %3437 = vmatpush1.msra.mxu0 0.0
      %3438 = vmatprep.subr.mxu0 0.0
      %3439 = vmatpush1.msra.mxu0 0.0
      %3440 = vmatprep.subr.mxu0 0.0
      %3441 = vmatpush1.msra.mxu0 0.0
      %3442 = vmatprep.subr.mxu0 0.0
      %3443 = vmatpush1.msra.mxu0 0.0
      %3444 = vmatprep.subr.mxu0 0.0
      %3445 = vmatpush1.msra.mxu0 0.0
      %3446 = vmatprep.subr.mxu0 0.0
      %3447 = vmatpush1.msra.mxu0 0.0
      %3448 = vmatprep.subr.mxu0 0.0
      %3449 = vmatpush1.msra.mxu0 0.0
      %3450 = vmatprep.subr.mxu0 0.0
      %3451 = vmatpush1.msra.mxu0 0.0
      %3452 = vmatprep.subr.mxu0 0.0
      %3453 = vmatpush1.msra.mxu0 0.0
      %3454 = vmatprep.subr.mxu0 0.0
      %3455 = vmatpush1.msra.mxu0 0.0
      %3456 = vmatprep.subr.mxu0 0.0
      %3457 = vmatpush1.msra.mxu0 0.0
      %3458 = vmatprep.subr.mxu0 0.0
      %3459 = vmatpush1.msra.mxu0 0.0
      %3460 = vmatprep.subr.mxu0 0.0
      %3461 = vmatpush1.msra.mxu0 0.0
      %3462 = vmatprep.subr.mxu0 0.0
      %3463 = vmatpush1.msra.mxu0 0.0
      %3464 = vmatprep.subr.mxu0 0.0
      %3465 = vmatpush1.msra.mxu0 0.0
      %3466 = vmatprep.subr.mxu0 0.0
      %3467 = vmatpush1.msra.mxu0 0.0
      %3468 = vmatprep.mubr.f32.mxu0 0.0
      %3469 = vmatmul.mubr.f32.gmra.mrb[0].mxu0 %v3396
      %v3470 = vpop.f32.mrb[0].mxu0
      %v3471 = vadd.f32 0.0, %v3470
      %v3472 = vpop.f32.mrb[0].mxu0
      %v3473 = vadd.f32 0.0, %v3472
      %3474 = vdwg.mxu0
      %v3475 = vadd.f32 %v3374, %v3471
      %v3476 = vadd.f32 %v3375, %v3473
      %v3477 = vld [vmem:[#allocation3] sm:$0xff]
      %v3478 = vld [vmem:[#allocation3 + $0x8] sm:$0xf]
      %v3481 = vcombine.high %v3477, %v3477
      %3482 = vrot.lane.b32.xlu0 %v3477, 63
      %v3483 = vpop.permute.xlu0 %3482
      %3484 = vrot.lane.b32.xlu0 %v3481, 63
      %v3485 = vpop.permute.xlu0 %3484
      %3486 = vrot.lane.b32.xlu0 %v3478, 63
      %v3487 = vpop.permute.xlu0 %3486
      %vm3488 = vcmask 515072
      %v3489 = vsel %vm3488, %v3483, %v3485
      %v3490 = vsel %vm3488, %v3485, %v3487
      %v3493 = vsel %vm513, %v3489, 0.0
      %v3494 = vsel %vm514, %v3490, 0.0
      %v3495 = vld [vmem:[%s5 + $0xa8] sm:$0xff]
      %v3497 = vsel %vm384, %v3495, 0
      %v3500 = vsel %vm394, %v3493, 0
      %v3503 = vsel %vm394, %v3494, 0
      %3505 = vmatprep.subr.mxu0 %v3503
      %3506 = vmatpush1.msra.mxu0 %v3500
      %3507 = vmatprep.subr.mxu0 0.0
      %3508 = vmatpush1.msra.mxu0 0.0
      %3509 = vmatprep.subr.mxu0 0.0
      %3510 = vmatpush1.msra.mxu0 0.0
      %3511 = vmatprep.subr.mxu0 0.0
      %3512 = vmatpush1.msra.mxu0 0.0
      %3513 = vmatprep.subr.mxu0 0.0
      %3514 = vmatpush1.msra.mxu0 0.0
      %3515 = vmatprep.subr.mxu0 0.0
      %3516 = vmatpush1.msra.mxu0 0.0
      %3517 = vmatprep.subr.mxu0 0.0
      %3518 = vmatpush1.msra.mxu0 0.0
      %3519 = vmatprep.subr.mxu0 0.0
      %3520 = vmatpush1.msra.mxu0 0.0
      %3521 = vmatprep.subr.mxu0 0.0
      %3522 = vmatpush1.msra.mxu0 0.0
      %3523 = vmatprep.subr.mxu0 0.0
      %3524 = vmatpush1.msra.mxu0 0.0
      %3525 = vmatprep.subr.mxu0 0.0
      %3526 = vmatpush1.msra.mxu0 0.0
      %3527 = vmatprep.subr.mxu0 0.0
      %3528 = vmatpush1.msra.mxu0 0.0
      %3529 = vmatprep.subr.mxu0 0.0
      %3530 = vmatpush1.msra.mxu0 0.0
      %3531 = vmatprep.subr.mxu0 0.0
      %3532 = vmatpush1.msra.mxu0 0.0
      %3533 = vmatprep.subr.mxu0 0.0
      %3534 = vmatpush1.msra.mxu0 0.0
      %3535 = vmatprep.subr.mxu0 0.0
      %3536 = vmatpush1.msra.mxu0 0.0
      %3537 = vmatprep.subr.mxu0 0.0
      %3538 = vmatpush1.msra.mxu0 0.0
      %3539 = vmatprep.subr.mxu0 0.0
      %3540 = vmatpush1.msra.mxu0 0.0
      %3541 = vmatprep.subr.mxu0 0.0
      %3542 = vmatpush1.msra.mxu0 0.0
      %3543 = vmatprep.subr.mxu0 0.0
      %3544 = vmatpush1.msra.mxu0 0.0
      %3545 = vmatprep.subr.mxu0 0.0
      %3546 = vmatpush1.msra.mxu0 0.0
      %3547 = vmatprep.subr.mxu0 0.0
      %3548 = vmatpush1.msra.mxu0 0.0
      %3549 = vmatprep.subr.mxu0 0.0
      %3550 = vmatpush1.msra.mxu0 0.0
      %3551 = vmatprep.subr.mxu0 0.0
      %3552 = vmatpush1.msra.mxu0 0.0
      %3553 = vmatprep.subr.mxu0 0.0
      %3554 = vmatpush1.msra.mxu0 0.0
      %3555 = vmatprep.subr.mxu0 0.0
      %3556 = vmatpush1.msra.mxu0 0.0
      %3557 = vmatprep.subr.mxu0 0.0
      %3558 = vmatpush1.msra.mxu0 0.0
      %3559 = vmatprep.subr.mxu0 0.0
      %3560 = vmatpush1.msra.mxu0 0.0
      %3561 = vmatprep.subr.mxu0 0.0
      %3562 = vmatpush1.msra.mxu0 0.0
      %3563 = vmatprep.subr.mxu0 0.0
      %3564 = vmatpush1.msra.mxu0 0.0
      %3565 = vmatprep.subr.mxu0 0.0
      %3566 = vmatpush1.msra.mxu0 0.0
      %3567 = vmatprep.subr.mxu0 0.0
      %3568 = vmatpush1.msra.mxu0 0.0
      %3569 = vmatprep.mubr.f32.mxu0 0.0
      %3570 = vmatmul.mubr.f32.gmra.mrb[0].mxu0 %v3497
      %v3571 = vpop.f32.mrb[0].mxu0
      %v3572 = vadd.f32 0.0, %v3571
      %v3573 = vpop.f32.mrb[0].mxu0
      %v3574 = vadd.f32 0.0, %v3573
      %3575 = vdwg.mxu0
      %v3576 = vadd.f32 %v3475, %v3572
      %v3577 = vadd.f32 %v3476, %v3574
      %v3578 = vld [vmem:[#allocation3] sm:$0xff]
      %v3579 = vld [vmem:[#allocation3 + $0x8] sm:$0xf]
      %v3580 = vld [vmem:[%s5 + $0xb0] sm:$0xff]
      %v3583 = vcombine.high %v3578, %v3578
      %3584 = vrot.lane.b32.xlu0 %v3578, 62
      %v3585 = vpop.permute.xlu0 %3584
      %3586 = vrot.lane.b32.xlu0 %v3583, 62
      %v3587 = vpop.permute.xlu0 %3586
      %3588 = vrot.lane.b32.xlu0 %v3579, 62
      %v3589 = vpop.permute.xlu0 %3588
      %vm3590 = vcmask 506880
      %v3591 = vsel %vm3590, %v3585, %v3587
      %v3592 = vsel %vm3590, %v3587, %v3589
      %v3594 = vsel %vm384, %v3580, 0
      %v3596 = vsel %vm394, %v3591, 0
      %v3598 = vsel %vm394, %v3592, 0
      %3600 = vmatprep.subr.mxu0 %v3598
      %3601 = vmatpush1.msra.mxu0 %v3596
      %3602 = vmatprep.subr.mxu0 0.0
      %3603 = vmatpush1.msra.mxu0 0.0
      %3604 = vmatprep.subr.mxu0 0.0
      %3605 = vmatpush1.msra.mxu0 0.0
      %3606 = vmatprep.subr.mxu0 0.0
      %3607 = vmatpush1.msra.mxu0 0.0
      %3608 = vmatprep.subr.mxu0 0.0
      %3609 = vmatpush1.msra.mxu0 0.0
      %3610 = vmatprep.subr.mxu0 0.0
      %3611 = vmatpush1.msra.mxu0 0.0
      %3612 = vmatprep.subr.mxu0 0.0
      %3613 = vmatpush1.msra.mxu0 0.0
      %3614 = vmatprep.subr.mxu0 0.0
      %3615 = vmatpush1.msra.mxu0 0.0
      %3616 = vmatprep.subr.mxu0 0.0
      %3617 = vmatpush1.msra.mxu0 0.0
      %3618 = vmatprep.subr.mxu0 0.0
      %3619 = vmatpush1.msra.mxu0 0.0
      %3620 = vmatprep.subr.mxu0 0.0
      %3621 = vmatpush1.msra.mxu0 0.0
      %3622 = vmatprep.subr.mxu0 0.0
      %3623 = vmatpush1.msra.mxu0 0.0
      %3624 = vmatprep.subr.mxu0 0.0
      %3625 = vmatpush1.msra.mxu0 0.0
      %3626 = vmatprep.subr.mxu0 0.0
      %3627 = vmatpush1.msra.mxu0 0.0
      %3628 = vmatprep.subr.mxu0 0.0
      %3629 = vmatpush1.msra.mxu0 0.0
      %3630 = vmatprep.subr.mxu0 0.0
      %3631 = vmatpush1.msra.mxu0 0.0
      %3632 = vmatprep.subr.mxu0 0.0
      %3633 = vmatpush1.msra.mxu0 0.0
      %3634 = vmatprep.subr.mxu0 0.0
      %3635 = vmatpush1.msra.mxu0 0.0
      %3636 = vmatprep.subr.mxu0 0.0
      %3637 = vmatpush1.msra.mxu0 0.0
      %3638 = vmatprep.subr.mxu0 0.0
      %3639 = vmatpush1.msra.mxu0 0.0
      %3640 = vmatprep.subr.mxu0 0.0
      %3641 = vmatpush1.msra.mxu0 0.0
      %3642 = vmatprep.subr.mxu0 0.0
      %3643 = vmatpush1.msra.mxu0 0.0
      %3644 = vmatprep.subr.mxu0 0.0
      %3645 = vmatpush1.msra.mxu0 0.0
      %3646 = vmatprep.subr.mxu0 0.0
      %3647 = vmatpush1.msra.mxu0 0.0
      %3648 = vmatprep.subr.mxu0 0.0
      %3649 = vmatpush1.msra.mxu0 0.0
      %3650 = vmatprep.subr.mxu0 0.0
      %3651 = vmatpush1.msra.mxu0 0.0
      %3652 = vmatprep.subr.mxu0 0.0
      %3653 = vmatpush1.msra.mxu0 0.0
      %3654 = vmatprep.subr.mxu0 0.0
      %3655 = vmatpush1.msra.mxu0 0.0
      %3656 = vmatprep.subr.mxu0 0.0
      %3657 = vmatpush1.msra.mxu0 0.0
      %3658 = vmatprep.subr.mxu0 0.0
      %3659 = vmatpush1.msra.mxu0 0.0
      %3660 = vmatprep.subr.mxu0 0.0
      %3661 = vmatpush1.msra.mxu0 0.0
      %3662 = vmatprep.subr.mxu0 0.0
      %3663 = vmatpush1.msra.mxu0 0.0
      %3664 = vmatprep.mubr.f32.mxu0 0.0
      %3665 = vmatmul.mubr.f32.gmra.mrb[0].mxu0 %v3594
      %v3666 = vpop.f32.mrb[0].mxu0
      %v3667 = vadd.f32 0.0, %v3666
      %v3668 = vpop.f32.mrb[0].mxu0
      %v3669 = vadd.f32 0.0, %v3668
      %3670 = vdwg.mxu0
      %v3671 = vadd.f32 %v3576, %v3667
      %v3672 = vadd.f32 %v3577, %v3669
      %v3673 = vld [vmem:[#allocation3] sm:$0xff]
      %v3674 = vld [vmem:[#allocation3 + $0x8] sm:$0xf]
      %v3677 = vcombine.high %v3673, %v3673
      %3678 = vrot.lane.b32.xlu0 %v3673, 61
      %v3679 = vpop.permute.xlu0 %3678
      %3680 = vrot.lane.b32.xlu0 %v3677, 61
      %v3681 = vpop.permute.xlu0 %3680
      %3682 = vrot.lane.b32.xlu0 %v3674, 61
      %v3683 = vpop.permute.xlu0 %3682
      %vm3684 = vcmask 498688
      %v3685 = vsel %vm3684, %v3679, %v3681
      %v3686 = vsel %vm3684, %v3681, %v3683
      %v3689 = vsel %vm696, %v3685, 0.0
      %v3690 = vsel %vm697, %v3686, 0.0
      %v3691 = vld [vmem:[%s5 + $0xb8] sm:$0xff]
      %v3693 = vsel %vm384, %v3691, 0
      %v3696 = vsel %vm394, %v3689, 0
      %v3699 = vsel %vm394, %v3690, 0
      %3701 = vmatprep.subr.mxu0 %v3699
      %3702 = vmatpush1.msra.mxu0 %v3696
      %3703 = vmatprep.subr.mxu0 0.0
      %3704 = vmatpush1.msra.mxu0 0.0
      %3705 = vmatprep.subr.mxu0 0.0
      %3706 = vmatpush1.msra.mxu0 0.0
      %3707 = vmatprep.subr.mxu0 0.0
      %3708 = vmatpush1.msra.mxu0 0.0
      %3709 = vmatprep.subr.mxu0 0.0
      %3710 = vmatpush1.msra.mxu0 0.0
      %3711 = vmatprep.subr.mxu0 0.0
      %3712 = vmatpush1.msra.mxu0 0.0
      %3713 = vmatprep.subr.mxu0 0.0
      %3714 = vmatpush1.msra.mxu0 0.0
      %3715 = vmatprep.subr.mxu0 0.0
      %3716 = vmatpush1.msra.mxu0 0.0
      %3717 = vmatprep.subr.mxu0 0.0
      %3718 = vmatpush1.msra.mxu0 0.0
      %3719 = vmatprep.subr.mxu0 0.0
      %3720 = vmatpush1.msra.mxu0 0.0
      %3721 = vmatprep.subr.mxu0 0.0
      %3722 = vmatpush1.msra.mxu0 0.0
      %3723 = vmatprep.subr.mxu0 0.0
      %3724 = vmatpush1.msra.mxu0 0.0
      %3725 = vmatprep.subr.mxu0 0.0
      %3726 = vmatpush1.msra.mxu0 0.0
      %3727 = vmatprep.subr.mxu0 0.0
      %3728 = vmatpush1.msra.mxu0 0.0
      %3729 = vmatprep.subr.mxu0 0.0
      %3730 = vmatpush1.msra.mxu0 0.0
      %3731 = vmatprep.subr.mxu0 0.0
      %3732 = vmatpush1.msra.mxu0 0.0
      %3733 = vmatprep.subr.mxu0 0.0
      %3734 = vmatpush1.msra.mxu0 0.0
      %3735 = vmatprep.subr.mxu0 0.0
      %3736 = vmatpush1.msra.mxu0 0.0
      %3737 = vmatprep.subr.mxu0 0.0
      %3738 = vmatpush1.msra.mxu0 0.0
      %3739 = vmatprep.subr.mxu0 0.0
      %3740 = vmatpush1.msra.mxu0 0.0
      %3741 = vmatprep.subr.mxu0 0.0
      %3742 = vmatpush1.msra.mxu0 0.0
      %3743 = vmatprep.subr.mxu0 0.0
      %3744 = vmatpush1.msra.mxu0 0.0
      %3745 = vmatprep.subr.mxu0 0.0
      %3746 = vmatpush1.msra.mxu0 0.0
      %3747 = vmatprep.subr.mxu0 0.0
      %3748 = vmatpush1.msra.mxu0 0.0
      %3749 = vmatprep.subr.mxu0 0.0
      %3750 = vmatpush1.msra.mxu0 0.0
      %3751 = vmatprep.subr.mxu0 0.0
      %3752 = vmatpush1.msra.mxu0 0.0
      %3753 = vmatprep.subr.mxu0 0.0
      %3754 = vmatpush1.msra.mxu0 0.0
      %3755 = vmatprep.subr.mxu0 0.0
      %3756 = vmatpush1.msra.mxu0 0.0
      %3757 = vmatprep.subr.mxu0 0.0
      %3758 = vmatpush1.msra.mxu0 0.0
      %3759 = vmatprep.subr.mxu0 0.0
      %3760 = vmatpush1.msra.mxu0 0.0
      %3761 = vmatprep.subr.mxu0 0.0
      %3762 = vmatpush1.msra.mxu0 0.0
      %3763 = vmatprep.subr.mxu0 0.0
      %3764 = vmatpush1.msra.mxu0 0.0
      %3765 = vmatprep.mubr.f32.mxu0 0.0
      %3766 = vmatmul.mubr.f32.gmra.mrb[0].mxu0 %v3693
      %v3767 = vpop.f32.mrb[0].mxu0
      %v3768 = vadd.f32 0.0, %v3767
      %v3769 = vpop.f32.mrb[0].mxu0
      %v3770 = vadd.f32 0.0, %v3769
      %3771 = vdwg.mxu0
      %v3772 = vadd.f32 %v3671, %v3768
      %v3773 = vadd.f32 %v3672, %v3770
      %v3774 = vld [vmem:[#allocation3] sm:$0xff]
      %v3775 = vld [vmem:[#allocation3 + $0x8] sm:$0xf]
      %v3778 = vcombine.high %v3774, %v3774
      %3779 = vrot.lane.b32.xlu0 %v3774, 60
      %v3780 = vpop.permute.xlu0 %3779
      %3781 = vrot.lane.b32.xlu0 %v3778, 60
      %v3782 = vpop.permute.xlu0 %3781
      %3783 = vrot.lane.b32.xlu0 %v3775, 60
      %v3784 = vpop.permute.xlu0 %3783
      %vm3785 = vcmask 490496
      %v3786 = vsel %vm3785, %v3780, %v3782
      %v3787 = vsel %vm3785, %v3782, %v3784
      %v3790 = vsel %vm1784, %v3786, 0.0
      %v3791 = vsel %vm1785, %v3787, 0.0
      %v3792 = vld [vmem:[%s5 + $0xc0] sm:$0xff]
      %v3794 = vsel %vm384, %v3792, 0
      %v3797 = vsel %vm394, %v3790, 0
      %v3800 = vsel %vm394, %v3791, 0
      %3802 = vmatprep.subr.mxu0 %v3800
      %3803 = vmatpush1.msra.mxu0 %v3797
      %3804 = vmatprep.subr.mxu0 0.0
      %3805 = vmatpush1.msra.mxu0 0.0
      %3806 = vmatprep.subr.mxu0 0.0
      %3807 = vmatpush1.msra.mxu0 0.0
      %3808 = vmatprep.subr.mxu0 0.0
      %3809 = vmatpush1.msra.mxu0 0.0
      %3810 = vmatprep.subr.mxu0 0.0
      %3811 = vmatpush1.msra.mxu0 0.0
      %3812 = vmatprep.subr.mxu0 0.0
      %3813 = vmatpush1.msra.mxu0 0.0
      %3814 = vmatprep.subr.mxu0 0.0
      %3815 = vmatpush1.msra.mxu0 0.0
      %3816 = vmatprep.subr.mxu0 0.0
      %3817 = vmatpush1.msra.mxu0 0.0
      %3818 = vmatprep.subr.mxu0 0.0
      %3819 = vmatpush1.msra.mxu0 0.0
      %3820 = vmatprep.subr.mxu0 0.0
      %3821 = vmatpush1.msra.mxu0 0.0
      %3822 = vmatprep.subr.mxu0 0.0
      %3823 = vmatpush1.msra.mxu0 0.0
      %3824 = vmatprep.subr.mxu0 0.0
      %3825 = vmatpush1.msra.mxu0 0.0
      %3826 = vmatprep.subr.mxu0 0.0
      %3827 = vmatpush1.msra.mxu0 0.0
      %3828 = vmatprep.subr.mxu0 0.0
      %3829 = vmatpush1.msra.mxu0 0.0
      %3830 = vmatprep.subr.mxu0 0.0
      %3831 = vmatpush1.msra.mxu0 0.0
      %3832 = vmatprep.subr.mxu0 0.0
      %3833 = vmatpush1.msra.mxu0 0.0
      %3834 = vmatprep.subr.mxu0 0.0
      %3835 = vmatpush1.msra.mxu0 0.0
      %3836 = vmatprep.subr.mxu0 0.0
      %3837 = vmatpush1.msra.mxu0 0.0
      %3838 = vmatprep.subr.mxu0 0.0
      %3839 = vmatpush1.msra.mxu0 0.0
      %3840 = vmatprep.subr.mxu0 0.0
      %3841 = vmatpush1.msra.mxu0 0.0
      %3842 = vmatprep.subr.mxu0 0.0
      %3843 = vmatpush1.msra.mxu0 0.0
      %3844 = vmatprep.subr.mxu0 0.0
      %3845 = vmatpush1.msra.mxu0 0.0
      %3846 = vmatprep.subr.mxu0 0.0
      %3847 = vmatpush1.msra.mxu0 0.0
      %3848 = vmatprep.subr.mxu0 0.0
      %3849 = vmatpush1.msra.mxu0 0.0
      %3850 = vmatprep.subr.mxu0 0.0
      %3851 = vmatpush1.msra.mxu0 0.0
      %3852 = vmatprep.subr.mxu0 0.0
      %3853 = vmatpush1.msra.mxu0 0.0
      %3854 = vmatprep.subr.mxu0 0.0
      %3855 = vmatpush1.msra.mxu0 0.0
      %3856 = vmatprep.subr.mxu0 0.0
      %3857 = vmatpush1.msra.mxu0 0.0
      %3858 = vmatprep.subr.mxu0 0.0
      %3859 = vmatpush1.msra.mxu0 0.0
      %3860 = vmatprep.subr.mxu0 0.0
      %3861 = vmatpush1.msra.mxu0 0.0
      %3862 = vmatprep.subr.mxu0 0.0
      %3863 = vmatpush1.msra.mxu0 0.0
      %3864 = vmatprep.subr.mxu0 0.0
      %3865 = vmatpush1.msra.mxu0 0.0
      %3866 = vmatprep.mubr.f32.mxu0 0.0
      %3867 = vmatmul.mubr.f32.gmra.mrb[0].mxu0 %v3794
      %v3868 = vpop.f32.mrb[0].mxu0
      %v3869 = vadd.f32 0.0, %v3868
      %v3870 = vpop.f32.mrb[0].mxu0
      %v3871 = vadd.f32 0.0, %v3870
      %3872 = vdwg.mxu0
      %v3873 = vadd.f32 %v3772, %v3869
      %v3874 = vadd.f32 %v3773, %v3871
      %v3875 = vld [vmem:[%s6] sm:$0xff]
      %3877 = vset.pattern.permute.xlu0 0
      %3878 = vperm.xlu0 %3877, %v3875
      %v3879 = vpop.permute.xlu0 %3878
      %v3881 = vadd.f32 %v3873, %v3879
      %v3882 = vadd.f32 %v3874, %v3879
      %v3883 = vmax.f32 %v3881, 0.0
      %v3884 = vmax.f32 %v3882, 0.0
      %vm3885 = vcmask 134144
      %3886 = vst.msk [vmem:[#allocation4] sm:$0xf] %vm3885, 0.0
      %vm3887 = vcmask 273544
      %3888 = vst.msk [vmem:[#allocation4 + $0x8] sm:$0xf] %vm3887, 0.0
      %3889 = vrot.lane.b32.xlu0 %v333, 17
      %v3890 = vpop.permute.xlu0 %3889
      %v3891 = vrot.slane %v3890, 4
      %v3892 = vsel %vm498, %v3891, %v3890
      %vm3895 = vcmask 1043592
      %vm3896 = vmor %vm1391, %vm3895
      %3897 = vst.msk [vmem:[#allocation4] sm:$0xff] %vm3896, %v3892
      %3898 = vst.msk [vmem:[#allocation4 + $0x8] sm:$0xf] %vm3885, %v3891
      %v3899 = vld [vmem:[#allocation4] sm:$0xff]
      %v3901 = vcombine.high %v3899, %v3899
      %v3903 = vsel %vm513, %v3899, 0.0
      %v3904 = vsel %vm514, %v3901, 0.0
      %v3905 = vld [vmem:[#allocation4 + $0x8] sm:$0xf]
      %3907 = vrot.lane.b32.xlu0 %v3899, 127
      %v3908 = vpop.permute.xlu0 %3907
      %3909 = vrot.lane.b32.xlu0 %v3901, 127
      %v3910 = vpop.permute.xlu0 %3909
      %3911 = vrot.lane.b32.xlu0 %v3905, 127
      %v3912 = vpop.permute.xlu0 %3911
      %v3913 = vsel %vm529, %v3908, %v3910
      %v3914 = vsel %vm529, %v3910, %v3912
      %v3917 = vmax.f32 %v3903, %v3913
      %v3918 = vmax.f32 %v3904, %v3914
      %3919 = vrot.lane.b32.xlu0 %v3899, 126
      %v3920 = vpop.permute.xlu0 %3919
      %3921 = vrot.lane.b32.xlu0 %v3901, 126
      %v3922 = vpop.permute.xlu0 %3921
      %3923 = vrot.lane.b32.xlu0 %v3905, 126
      %v3924 = vpop.permute.xlu0 %3923
      %v3925 = vsel %vm704, %v3920, %v3922
      %v3926 = vsel %vm704, %v3922, %v3924
      %v3929 = vsel %vm696, %v3925, 0.0
      %v3930 = vsel %vm697, %v3926, 0.0
      %v3931 = vmax.f32 %v3917, %v3929
      %v3932 = vmax.f32 %v3918, %v3930
      %3933 = vrot.lane.b32.xlu0 %v3899, 112
      %v3934 = vpop.permute.xlu0 %3933
      %3935 = vrot.lane.b32.xlu0 %v3901, 112
      %v3936 = vpop.permute.xlu0 %3935
      %3937 = vrot.lane.b32.xlu0 %v3905, 112
      %v3938 = vpop.permute.xlu0 %3937
      %v3939 = vsel %vm800, %v3934, %v3936
      %v3940 = vsel %vm800, %v3936, %v3938
      %v3943 = vsel %vm513, %v3939, 0.0
      %v3944 = vsel %vm514, %v3940, 0.0
      %v3945 = vmax.f32 %v3931, %v3943
      %v3946 = vmax.f32 %v3932, %v3944
      %3947 = vrot.lane.b32.xlu0 %v3899, 111
      %v3948 = vpop.permute.xlu0 %3947
      %3949 = vrot.lane.b32.xlu0 %v3901, 111
      %v3950 = vpop.permute.xlu0 %3949
      %3951 = vrot.lane.b32.xlu0 %v3905, 111
      %v3952 = vpop.permute.xlu0 %3951
      %v3953 = vsel %vm897, %v3948, %v3950
      %v3954 = vsel %vm897, %v3950, %v3952
      %v3957 = vmax.f32 %v3945, %v3953
      %v3958 = vmax.f32 %v3946, %v3954
      %3959 = vrot.lane.b32.xlu0 %v3899, 110
      %v3960 = vpop.permute.xlu0 %3959
      %3961 = vrot.lane.b32.xlu0 %v3901, 110
      %v3962 = vpop.permute.xlu0 %3961
      %3963 = vrot.lane.b32.xlu0 %v3905, 110
      %v3964 = vpop.permute.xlu0 %3963
      %v3965 = vsel %vm986, %v3960, %v3962
      %v3966 = vsel %vm986, %v3962, %v3964
      %v3969 = vsel %vm696, %v3965, 0.0
      %v3970 = vsel %vm697, %v3966, 0.0
      %v3971 = vmax.f32 %v3957, %v3969
      %v3972 = vmax.f32 %v3958, %v3970
      %3973 = vrot.lane.b32.xlu0 %v3899, 96
      %v3974 = vpop.permute.xlu0 %3973
      %3975 = vrot.lane.b32.xlu0 %v3901, 96
      %v3976 = vpop.permute.xlu0 %3975
      %3977 = vrot.lane.b32.xlu0 %v3905, 96
      %v3978 = vpop.permute.xlu0 %3977
      %v3979 = vsel %vm1082, %v3974, %v3976
      %v3980 = vsel %vm1082, %v3976, %v3978
      %v3983 = vsel %vm513, %v3979, 0.0
      %v3984 = vsel %vm514, %v3980, 0.0
      %v3985 = vmax.f32 %v3971, %v3983
      %v3986 = vmax.f32 %v3972, %v3984
      %3987 = vrot.lane.b32.xlu0 %v3899, 95
      %v3988 = vpop.permute.xlu0 %3987
      %3989 = vrot.lane.b32.xlu0 %v3901, 95
      %v3990 = vpop.permute.xlu0 %3989
      %3991 = vrot.lane.b32.xlu0 %v3905, 95
      %v3992 = vpop.permute.xlu0 %3991
      %v3993 = vsel %vm1179, %v3988, %v3990
      %v3994 = vsel %vm1179, %v3990, %v3992
      %v3997 = vmax.f32 %v3985, %v3993
      %v3998 = vmax.f32 %v3986, %v3994
      %3999 = vrot.lane.b32.xlu0 %v3899, 94
      %v4000 = vpop.permute.xlu0 %3999
      %4001 = vrot.lane.b32.xlu0 %v3901, 94
      %v4002 = vpop.permute.xlu0 %4001
      %4003 = vrot.lane.b32.xlu0 %v3905, 94
      %v4004 = vpop.permute.xlu0 %4003
      %v4005 = vsel %vm1268, %v4000, %v4002
      %v4006 = vsel %vm1268, %v4002, %v4004
      %v4009 = vsel %vm696, %v4005, 0.0
      %v4010 = vsel %vm697, %v4006, 0.0
      %v4011 = vmax.f32 %v3997, %v4009
      %v4012 = vmax.f32 %v3998, %v4010
      %v4013 = vmax.f32 %v4011, 0.0
      %v4014 = vmax.f32 %v4012, 0.0
      %v4015 = vld [vmem:[%s7] sm:$0xff]
      %v4016 = vld [vmem:[%s8] sm:$0xff]
      %4018 = vset.pattern.permute.xlu0 0
      %4019 = vperm.xlu0 %4018, %v4016
      %v4020 = vpop.permute.xlu0 %4019
      %v4023 = vsel %vm384, %v4015, 0
      %v4026 = vsel %vm394, %v4013, 0
      %v4029 = vsel %vm394, %v4014, 0
      %4031 = vmatprep.subr.mxu0 %v4029
      %4032 = vmatpush1.msra.mxu0 %v4026
      %4033 = vmatprep.subr.mxu0 0.0
      %4034 = vmatpush1.msra.mxu0 0.0
      %4035 = vmatprep.subr.mxu0 0.0
      %4036 = vmatpush1.msra.mxu0 0.0
      %4037 = vmatprep.subr.mxu0 0.0
      %4038 = vmatpush1.msra.mxu0 0.0
      %4039 = vmatprep.subr.mxu0 0.0
      %4040 = vmatpush1.msra.mxu0 0.0
      %4041 = vmatprep.subr.mxu0 0.0
      %4042 = vmatpush1.msra.mxu0 0.0
      %4043 = vmatprep.subr.mxu0 0.0
      %4044 = vmatpush1.msra.mxu0 0.0
      %4045 = vmatprep.subr.mxu0 0.0
      %4046 = vmatpush1.msra.mxu0 0.0
      %4047 = vmatprep.subr.mxu0 0.0
      %4048 = vmatpush1.msra.mxu0 0.0
      %4049 = vmatprep.subr.mxu0 0.0
      %4050 = vmatpush1.msra.mxu0 0.0
      %4051 = vmatprep.subr.mxu0 0.0
      %4052 = vmatpush1.msra.mxu0 0.0
      %4053 = vmatprep.subr.mxu0 0.0
      %4054 = vmatpush1.msra.mxu0 0.0
      %4055 = vmatprep.subr.mxu0 0.0
      %4056 = vmatpush1.msra.mxu0 0.0
      %4057 = vmatprep.subr.mxu0 0.0
      %4058 = vmatpush1.msra.mxu0 0.0
      %4059 = vmatprep.subr.mxu0 0.0
      %4060 = vmatpush1.msra.mxu0 0.0
      %4061 = vmatprep.subr.mxu0 0.0
      %4062 = vmatpush1.msra.mxu0 0.0
      %4063 = vmatprep.subr.mxu0 0.0
      %4064 = vmatpush1.msra.mxu0 0.0
      %4065 = vmatprep.subr.mxu0 0.0
      %4066 = vmatpush1.msra.mxu0 0.0
      %4067 = vmatprep.subr.mxu0 0.0
      %4068 = vmatpush1.msra.mxu0 0.0
      %4069 = vmatprep.subr.mxu0 0.0
      %4070 = vmatpush1.msra.mxu0 0.0
      %4071 = vmatprep.subr.mxu0 0.0
      %4072 = vmatpush1.msra.mxu0 0.0
      %4073 = vmatprep.subr.mxu0 0.0
      %4074 = vmatpush1.msra.mxu0 0.0
      %4075 = vmatprep.subr.mxu0 0.0
      %4076 = vmatpush1.msra.mxu0 0.0
      %4077 = vmatprep.subr.mxu0 0.0
      %4078 = vmatpush1.msra.mxu0 0.0
      %4079 = vmatprep.subr.mxu0 0.0
      %4080 = vmatpush1.msra.mxu0 0.0
      %4081 = vmatprep.subr.mxu0 0.0
      %4082 = vmatpush1.msra.mxu0 0.0
      %4083 = vmatprep.subr.mxu0 0.0
      %4084 = vmatpush1.msra.mxu0 0.0
      %4085 = vmatprep.subr.mxu0 0.0
      %4086 = vmatpush1.msra.mxu0 0.0
      %4087 = vmatprep.subr.mxu0 0.0
      %4088 = vmatpush1.msra.mxu0 0.0
      %4089 = vmatprep.subr.mxu0 0.0
      %4090 = vmatpush1.msra.mxu0 0.0
      %4091 = vmatprep.subr.mxu0 0.0
      %4092 = vmatpush1.msra.mxu0 0.0
      %4093 = vmatprep.subr.mxu0 0.0
      %4094 = vmatpush1.msra.mxu0 0.0
      %4095 = vmatprep.mubr.f32.mxu0 0.0
      %4096 = vmatmul.mubr.f32.gmra.mrb[0].mxu0 %v4023
      %v4097 = vpop.f32.mrb[0].mxu0
      %v4098 = vadd.f32 %v4020, %v4097
      %v4099 = vpop.f32.mrb[0].mxu0
      %v4100 = vadd.f32 %v4020, %v4099
      %4101 = vdwg.mxu0
      %v4102 = vmax.f32 %v4098, 0.0
      %v4103 = vmax.f32 %v4100, 0.0
      %4104 = vst [vmem:[%s332] sm:$0xff] %v482
      %4105 = vst [vmem:[%s332 + $0x8] sm:$0xff] %v483
      %4106 = vst [vmem:[%s332 + $0x10] sm:$0xff] %v1366
      %4107 = vst [vmem:[%s332 + $0x18] sm:$0xff] %v1367
      %4108 = vst [vmem:[%s332 + $0x20] sm:$0xff] %v3883
      %4109 = vst [vmem:[%s332 + $0x28] sm:$0xff] %v3884
      %4110 = vst [vmem:[%s332 + $0x30] sm:$0xff] %v4102
      %4111 = vst [vmem:[%s332 + $0x38] sm:$0xff] %v4103
      %p4112 = scmp.lt.s32.totalorder %s20, 1
      %s4113 = scalar_select %p4112, %s20, 1
      %s4114 = smul.addr %s4113, 8
      %s4115 = smul.addr %s4114, 8
      %s4116 = scalar_lea.vmem %s9, %s4115
      // Predicated region
      $region57: #{inception_forward.1} parent=55 // pred_check
        %p4117 = pneg %p232
      $region58: #{inception_forward.1} parent=55 // pred_check_branch
        %4119 = sbr.rel (%p4117) target = $region60
      $region59: #{inception_forward.1} parent=55 // pred_region
        _
      $region60: #{inception_forward.1} parent=55 // pred_fallthru
        _
    $region56: #{inception_forward.1} parent=5 // pred_fallthru
      _
    %p4120 = scmp.le.s32.totalorder 2, %s15
    // Predicated region
    $region61: #{inception_forward.1} parent=5 // pred_check
      %p4121 = pneg %p4120
    $region62: #{inception_forward.1} parent=5 // pred_check_branch
      %4123 = sbr.rel (%p4121) target = $region64
    $region63: #{inception_forward.1} parent=5 // pred_region
      %s4124 = ssub.s32 %s15, 2
      // Predicated region
      $region65: #{inception_forward.1} parent=63 // pred_check
        %p4125 = pneg %p238
      $region66: #{inception_forward.1} parent=63 // pred_check_branch
        %4127 = sbr.rel (%p4125) target = $region68
      $region67: #{inception_forward.1} parent=63 // pred_region
        %p4128 = scmp.lt.s32.totalorder %s21, 1
        %s4129 = scalar_select %p4128, %s21, 1
        %s4130 = smul.addr %s4129, 8
        %s4131 = smul.addr %s4130, 8
        %s4132 = scalar_lea.vmem %s9, %s4131
      $region68: #{inception_forward.1} parent=63 // pred_fallthru
        _
    $region64: #{inception_forward.1} parent=5 // pred_fallthru
      _
  $region6: #{inception_forward.1} parent=0 // loop_footer
    %s19 = sadd.s32 1, %s15
  $region7: #{inception_forward.1} parent=0 // loop_footer_branch
    %14 = sbr.rel target = $region3
  $region8: #{inception_forward.1} parent=0 // loop_exit
    _

</llo_original>
